<compile_context>
chip_gen: v7x
topology: tpu7x:2x2x1
jax: 0.10.0
libtpu: 0.0.40
codegen_flags: <defaults>
</compile_context>

<pallas_src>
import numpy as np
import jax
import jax.numpy as jnp
from jax.experimental import pallas as pl
from jax.experimental.pallas import tpu as pltpu

BN_EPS = 1e-5


# --------------------------------------------------------------------------
# host-side prep: BN folding + stacked 3x3 tap-selection matrices
# --------------------------------------------------------------------------

def _build_tap_select(H, W, stride):
    """Stacked 0/1 selection matrices for a 3x3 'same' conv with given stride.

    Row block t (= kh*3 + kw) maps output position (i, j) to input position
    (stride*i + kh - 1, stride*j + kw - 1); out-of-bounds taps are all-zero rows,
    which realizes the zero padding exactly.  Shape: (9 * Ho * Wo, H * W).
    """
    Ho, Wo = H // stride, W // stride
    s = np.zeros((9 * Ho * Wo, H * W), np.float32)
    for kh in range(3):
        for kw in range(3):
            t = kh * 3 + kw
            for i in range(Ho):
                r = stride * i + kh - 1
                if not (0 <= r < H):
                    continue
                for j in range(Wo):
                    c = stride * j + kw - 1
                    if 0 <= c < W:
                        s[t * Ho * Wo + i * Wo + j, r * W + c] = 1.0
    return s


def prepare_esblock_params(params, H, W):
    """Fold BN into weights, merge per-branch stages, build tap selectors (bf16, exact)."""
    assert H % 2 == 0 and W % 2 == 0, "stride-2 selector builder assumes even H, W"
    # Hard gate for the selection-matrix dw path (O((HW)^2) VMEM); see TODO above.
    sel_bytes = 2 * (9 * (H // 2) * (W // 2)) * (H * W)
    assert sel_bytes <= 8 * 1024 * 1024, "feature map too large for selector path"

    def pw(p):   # 1x1 conv: fold BN scale into the (cin, cout) weight columns
        w = (p["w"] * p["scale"][None, :]).astype(jnp.bfloat16)
        return w, p["bias"][None, :].astype(jnp.float32)

    def dw(p):   # 3x3 depthwise: fold scale into each tap, flatten taps -> (9, 1, C)
        c = p["w"].shape[-1]
        w = (p["w"] * p["scale"][None, None, :]).reshape(9, 1, c).astype(jnp.float32)
        return w, p["bias"][None, :].astype(jnp.float32)

    w_pw1, b_pw1 = pw(params["p1_pw1"])      # (cin, mid/2)
    w_dw1, b_dw1 = dw(params["p1_dw"])       # (9, 1, mid/2)
    w_pw2, b_pw2 = pw(params["p1_pw2"])      # (mid/2, out/2)
    w_dw2, b_dw2 = dw(params["p2_dw"])       # (9, 1, cin)
    w_pw3, b_pw3 = pw(params["p2_pw"])       # (cin, out/2)
    w_dw3, b_dw3 = dw(params["dp_dw"])       # (9, 1, out)
    w_pw4, b_pw4 = pw(params["dp_pw"])       # (out, out)

    cin, midh = w_pw1.shape
    outh = w_pw2.shape[1]

    # Merged stride-2 dw weights over stacked lanes [a | x] = [mid/2 | cin].
    w_dw_s2 = jnp.concatenate([w_dw1, w_dw2], axis=-1)           # (9, 1, mid/2+cin)
    b_dw_s2 = jnp.concatenate([b_dw1, b_dw2], axis=-1)           # (1, mid/2+cin)

    # Block-diagonal merged pw2/pw3: its output IS concat([p1, p2]) along channels.
    w_pw23 = jnp.zeros((midh + cin, 2 * outh), jnp.bfloat16)
    w_pw23 = w_pw23.at[:midh, :outh].set(w_pw2)
    w_pw23 = w_pw23.at[midh:, outh:].set(w_pw3)
    b_pw23 = jnp.concatenate([b_pw2, b_pw3], axis=-1)            # (1, out)

    return {
        "s2": jnp.asarray(_build_tap_select(H, W, 2), jnp.bfloat16),
        "s1": jnp.asarray(_build_tap_select(H // 2, W // 2, 1), jnp.bfloat16),
        "w_pw1": w_pw1, "b_pw1": b_pw1,
        "w_dw_s2": w_dw_s2, "b_dw_s2": b_dw_s2,
        "w_pw23": w_pw23, "b_pw23": b_pw23,
        "w_dw3": w_dw3, "b_dw3": b_dw3,
        "w_pw4": w_pw4, "b_pw4": b_pw4,
    }


# --------------------------------------------------------------------------
# fused Pallas kernel: one grid step == one batch element, end to end
# --------------------------------------------------------------------------

def _esblock_kernel(x_ref, s2_ref, s1_ref,
                    w_pw1, b_pw1, w_dw_s2, b_dw_s2, w_pw23, b_pw23,
                    w_dw3, b_dw3, w_pw4, b_pw4,
                    o_ref):
    f32, bf16 = jnp.float32, jnp.bfloat16

    def tap_sum(g, p, w_ref, b_ref, relu):
        # Per-tap BN-folded channel weights + 9-way sum on the VPU in f32.
        acc = g[0:p, :] * w_ref[0]
        for t in range(1, 9):
            acc = acc + g[t * p:(t + 1) * p, :] * w_ref[t]   # 8-aligned static slices
        acc = acc + b_ref[...]
        return jnp.maximum(acc, 0.0) if relu else acc

    # Input arrives channel-major (Cin, H*W); transpose once (XLU) to spatial-major and
    # cast to bf16 once, reused by pw1 and the merged stride-2 dw.
    xb = jnp.transpose(x_ref[0]).astype(bf16)                    # (HW, cin)

    # part1.pw1
    a = jnp.dot(xb, w_pw1[...], preferred_element_type=f32) + b_pw1[...]
    a = jnp.maximum(a, 0.0).astype(bf16)                         # (HW, mid/2)

    # Merged stride-2 depthwise for BOTH branches: one selection matmul on [a | x].
    # The 0/1 rows of s2 make it an exact tap gather; padding + stride-2 are baked in.
    ax = jnp.concatenate([a, xb], axis=-1)                       # (HW, mid/2+cin)
    P = s2_ref.shape[0] // 9                                     # = Ho*Wo
    g2 = jnp.dot(s2_ref[...], ax, preferred_element_type=f32)    # (9P, mid/2+cin)
    dws2 = tap_sum(g2, P, w_dw_s2, b_dw_s2, relu=False)          # (P, mid/2+cin)

    # Merged (block-diagonal) pw2/pw3 -> output IS concat([p1, p2]) along channels.
    pc = jnp.dot(dws2.astype(bf16), w_pw23[...],
                 preferred_element_type=f32) + b_pw23[...]
    pc = jnp.maximum(pc, 0.0).astype(bf16)                       # (P, out_c)

    # dp: stride-1 depthwise on the concat, then the final pointwise.
    g1 = jnp.dot(s1_ref[...], pc, preferred_element_type=f32)    # (9P, out_c)
    d = tap_sum(g1, P, w_dw3, b_dw3, relu=True)                  # (P, out_c)
    y = jnp.dot(d.astype(bf16), w_pw4[...],
                preferred_element_type=f32) + b_pw4[...]
    y = jnp.maximum(y, 0.0)

    # Store channel-major (out_c, Ho*Wo): lane-dense (64 lanes) and makes the wrapper's
    # trailing NCHW reshape a zero-copy view.
    o_ref[0] = jnp.transpose(y).astype(o_ref.dtype)


def _const_spec(shape):
    nd = len(shape)
    return pl.BlockSpec(shape, lambda n, _nd=nd: (0,) * _nd)


@jax.jit
def es_block_s2(x_nchw, kp):
    N, cin, H, W = x_nchw.shape
    Ho, Wo = H // 2, W // 2
    out_c = kp["b_pw4"].shape[1]

    x = x_nchw.reshape(N, cin, H * W)          # zero-copy NCHW -> (N, Cin, HW)

    operands = (x, kp["s2"], kp["s1"],
                kp["w_pw1"], kp["b_pw1"], kp["w_dw_s2"], kp["b_dw_s2"],
                kp["w_pw23"], kp["b_pw23"], kp["w_dw3"], kp["b_dw3"],
                kp["w_pw4"], kp["b_pw4"])

    in_specs = [pl.BlockSpec((1, cin, H * W), lambda n: (n, 0, 0))]
    in_specs += [_const_spec(op.shape) for op in operands[1:]]

    y = pl.pallas_call(
        _esblock_kernel,
        out_shape=jax.ShapeDtypeStruct((N, out_c, Ho * Wo), jnp.float32),
        grid=(N,),
        in_specs=in_specs,
        out_specs=pl.BlockSpec((1, out_c, Ho * Wo), lambda n: (n, 0, 0)),
        compiler_params=pltpu.CompilerParams(
            dimension_semantics=("parallel",),
            vmem_limit_bytes=32 * 1024 * 1024),
    )(*operands)
    return y.reshape(N, out_c, Ho, Wo)         # zero-copy -> NCHW


# ------------------------ deterministic parameters ---------------------------

def _make_conv_bn(key, cin, cout, kind):
    kw_, kg, kb, km, kv = jax.random.split(key, 5)
    if kind == "pw":
        w = jax.random.normal(kw_, (cin, cout), jnp.float32) * 0.2
        c = cout
    else:  # depthwise 3x3, weight stored as (3, 3, C)
        assert cin == cout
        w = jax.random.normal(kw_, (3, 3, cin), jnp.float32) * 0.2
        c = cin
    gamma = jax.random.uniform(kg, (c,), jnp.float32, 0.5, 1.5)
    beta = jax.random.normal(kb, (c,), jnp.float32) * 0.1
    mean = jax.random.normal(km, (c,), jnp.float32) * 0.1
    var = jax.random.uniform(kv, (c,), jnp.float32, 0.5, 1.5)
    scale = gamma / jnp.sqrt(var + BN_EPS)        # fold BN into scale / bias
    bias = beta - mean * scale
    return {"w": w, "scale": scale, "bias": bias}


# ----------------------------- plain-JAX reference ---------------------------

def _ref_forward(x_nchw, params):
    x = jnp.transpose(x_nchw, (0, 2, 3, 1))

    def pw(x, p, relu):
        y = jnp.einsum("nhwc,cd->nhwd", x, p["w"]) * p["scale"] + p["bias"]
        return jnp.maximum(y, 0.0) if relu else y

    def dw(x, p, stride, relu):
        C = x.shape[-1]
        y = jax.lax.conv_general_dilated(
            x, p["w"][:, :, None, :], (stride, stride), ((1, 1), (1, 1)),
            dimension_numbers=("NHWC", "HWIO", "NHWC"), feature_group_count=C)
        y = y * p["scale"] + p["bias"]
        return jnp.maximum(y, 0.0) if relu else y

    p1 = pw(x, params["p1_pw1"], True)
    p1 = dw(p1, params["p1_dw"], 2, False)
    p1 = pw(p1, params["p1_pw2"], True)
    p2 = dw(x, params["p2_dw"], 2, False)
    p2 = pw(p2, params["p2_pw"], True)
    y = jnp.concatenate([p1, p2], axis=-1)
    y = dw(y, params["dp_dw"], 1, True)
    y = pw(y, params["dp_pw"], True)
    return jnp.transpose(y, (0, 3, 1, 2))


# ----------------------------------- main ------------------------------------

if __name__ == "__main__":
    in_c, mid_c, out_c = 16, 32, 32
    N, H, W = 2, 16, 16

    key = jax.random.PRNGKey(0)
    k_in, k0, k1, k2, k3, k4, k5, k6 = jax.random.split(key, 8)
    x = jax.random.normal(k_in, (N, in_c, H, W), jnp.float32)     # NCHW input

    params = {
        "p1_pw1": _make_conv_bn(k0, in_c, mid_c // 2, "pw"),
        "p1_dw":  _make_conv_bn(k1, mid_c // 2, mid_c // 2, "dw"),
        "p1_pw2": _make_conv_bn(k2, mid_c // 2, out_c // 2, "pw"),
        "p2_dw":  _make_conv_bn(k3, in_c, in_c, "dw"),
        "p2_pw":  _make_conv_bn(k4, in_c, out_c // 2, "pw"),
        "dp_dw":  _make_conv_bn(k5, out_c, out_c, "dw"),
        "dp_pw":  _make_conv_bn(k6, out_c, out_c, "pw"),
    }

    kp = prepare_esblock_params(params, H, W)          # fold BN / build selectors once
    out = jax.block_until_ready(es_block_s2(x, kp))
    assert out.shape == (N, out_c, H // 2, W // 2), out.shape

    ref = jax.block_until_ready(_ref_forward(x, params))
    # bf16 MXU inputs (f32 accumulation) vs an all-f32 reference -> loosened tolerance.
    assert jnp.allclose(out, ref, atol=5e-2, rtol=5e-2), (
        float(jnp.max(jnp.abs(out - ref))))

    print("KERNEL_OK")
</pallas_src>

<mosaic_0001>
module attributes {stable_mosaic.version = 11 : i64} {
  func.func @_esblock_kernel(%arg0: i32, %arg1: memref<1x16x256xf32, #tpu.memory_space<vmem>>, %arg2: memref<576x256xbf16, #tpu.memory_space<vmem>>, %arg3: memref<576x64xbf16, #tpu.memory_space<vmem>>, %arg4: memref<16x16xbf16, #tpu.memory_space<vmem>>, %arg5: memref<1x16xf32, #tpu.memory_space<vmem>>, %arg6: memref<9x1x32xf32, #tpu.memory_space<vmem>>, %arg7: memref<1x32xf32, #tpu.memory_space<vmem>>, %arg8: memref<32x32xbf16, #tpu.memory_space<vmem>>, %arg9: memref<1x32xf32, #tpu.memory_space<vmem>>, %arg10: memref<9x1x32xf32, #tpu.memory_space<vmem>>, %arg11: memref<1x32xf32, #tpu.memory_space<vmem>>, %arg12: memref<32x32xbf16, #tpu.memory_space<vmem>>, %arg13: memref<1x32xf32, #tpu.memory_space<vmem>>, %arg14: memref<1x32x64xf32, #tpu.memory_space<vmem>>) attributes {dimension_semantics = [#tpu.dimension_semantics<parallel>], iteration_bounds = array<i64: 2>, scalar_prefetch = 0 : i64, scratch_operands = 0 : i64, tpu.core_type = #tpu.core_type<tc>, window_params = [{transform_indices = @transform_0, window_bounds = array<i64: 1, 16, 256>}, {pipeline_mode = #tpu.pipeline_mode<synchronous>, transform_indices = @transform_1, window_bounds = array<i64: 576, 256>}, {pipeline_mode = #tpu.pipeline_mode<synchronous>, transform_indices = @transform_2, window_bounds = array<i64: 576, 64>}, {pipeline_mode = #tpu.pipeline_mode<synchronous>, transform_indices = @transform_3, window_bounds = array<i64: 16, 16>}, {pipeline_mode = #tpu.pipeline_mode<synchronous>, transform_indices = @transform_4, window_bounds = array<i64: 1, 16>}, {pipeline_mode = #tpu.pipeline_mode<synchronous>, transform_indices = @transform_5, window_bounds = array<i64: 9, 1, 32>}, {pipeline_mode = #tpu.pipeline_mode<synchronous>, transform_indices = @transform_6, window_bounds = array<i64: 1, 32>}, {pipeline_mode = #tpu.pipeline_mode<synchronous>, transform_indices = @transform_7, window_bounds = array<i64: 32, 32>}, {pipeline_mode = #tpu.pipeline_mode<synchronous>, transform_indices = @transform_8, window_bounds = array<i64: 1, 32>}, {pipeline_mode = #tpu.pipeline_mode<synchronous>, transform_indices = @transform_9, window_bounds = array<i64: 9, 1, 32>}, {pipeline_mode = #tpu.pipeline_mode<synchronous>, transform_indices = @transform_10, window_bounds = array<i64: 1, 32>}, {pipeline_mode = #tpu.pipeline_mode<synchronous>, transform_indices = @transform_11, window_bounds = array<i64: 32, 32>}, {pipeline_mode = #tpu.pipeline_mode<synchronous>, transform_indices = @transform_12, window_bounds = array<i64: 1, 32>}, {transform_indices = @transform_13, window_bounds = array<i64: 1, 32, 64>}]} {
    %c0 = arith.constant 0 : index
    %c0_0 = arith.constant 0 : index
    %c0_1 = arith.constant 0 : index
    %0 = vector.load %arg1[%c0, %c0_0, %c0_1] : memref<1x16x256xf32, #tpu.memory_space<vmem>>, vector<1x16x256xf32>
    %1 = vector.shape_cast %0 : vector<1x16x256xf32> to vector<16x256xf32>
    %2 = tpu.transpose %1, [1, 0] : vector<16x256xf32> -> vector<256x16xf32>
    %3 = arith.truncf %2 : vector<256x16xf32> to vector<256x16xbf16>
    %c0_2 = arith.constant 0 : index
    %c0_3 = arith.constant 0 : index
    %4 = vector.load %arg4[%c0_2, %c0_3] : memref<16x16xbf16, #tpu.memory_space<vmem>>, vector<16x16xbf16>
    %cst = arith.constant dense<0.000000e+00> : vector<256x16xf32>
    %5 = tpu.matmul %3, %4, %cst {dimension_numbers = #tpu.dot_dimension_numbers<[1], [0], [0], [1], [0, 0, 1, 1], [], []>} : vector<256x16xbf16>, vector<16x16xbf16>, vector<256x16xf32> -> vector<256x16xf32>
    %c0_4 = arith.constant 0 : index
    %c0_5 = arith.constant 0 : index
    %6 = vector.load %arg5[%c0_4, %c0_5] : memref<1x16xf32, #tpu.memory_space<vmem>>, vector<1x16xf32>
    %7 = vector.broadcast %6 : vector<1x16xf32> to vector<256x16xf32>
    %8 = arith.addf %5, %7 : vector<256x16xf32>
    %cst_6 = arith.constant 0.000000e+00 : f32
    %9 = vector.broadcast %cst_6 : f32 to vector<256x16xf32>
    %10 = arith.maximumf %8, %9 : vector<256x16xf32>
    %11 = arith.truncf %10 : vector<256x16xf32> to vector<256x16xbf16>
    %12 = tpu.concatenate %11, %3 in 1 : vector<256x16xbf16>, vector<256x16xbf16> -> vector<256x32xbf16>
    %c0_7 = arith.constant 0 : index
    %c0_8 = arith.constant 0 : index
    %13 = vector.load %arg2[%c0_7, %c0_8] : memref<576x256xbf16, #tpu.memory_space<vmem>>, vector<576x256xbf16>
    %cst_9 = arith.constant dense<0.000000e+00> : vector<576x32xf32>
    %14 = tpu.matmul %13, %12, %cst_9 {dimension_numbers = #tpu.dot_dimension_numbers<[1], [0], [0], [1], [0, 0, 1, 1], [], []>} : vector<576x256xbf16>, vector<256x32xbf16>, vector<576x32xf32> -> vector<576x32xf32>
    %15 = vector.extract_strided_slice %14 {offsets = [0, 0], sizes = [64, 32], strides = [1, 1]} : vector<576x32xf32> to vector<64x32xf32>
    %c0_10 = arith.constant 0 : index
    %c0_11 = arith.constant 0 : index
    %c0_12 = arith.constant 0 : index
    %16 = vector.load %arg6[%c0_10, %c0_11, %c0_12] : memref<9x1x32xf32, #tpu.memory_space<vmem>>, vector<1x1x32xf32>
    %17 = vector.shape_cast %16 : vector<1x1x32xf32> to vector<1x32xf32>
    %18 = vector.broadcast %17 : vector<1x32xf32> to vector<64x32xf32>
    %19 = arith.mulf %15, %18 : vector<64x32xf32>
    %20 = vector.extract_strided_slice %14 {offsets = [64, 0], sizes = [64, 32], strides = [1, 1]} : vector<576x32xf32> to vector<64x32xf32>
    %c1 = arith.constant 1 : index
    %c0_13 = arith.constant 0 : index
    %c0_14 = arith.constant 0 : index
    %21 = vector.load %arg6[%c1, %c0_13, %c0_14] : memref<9x1x32xf32, #tpu.memory_space<vmem>>, vector<1x1x32xf32>
    %22 = vector.shape_cast %21 : vector<1x1x32xf32> to vector<1x32xf32>
    %23 = vector.broadcast %22 : vector<1x32xf32> to vector<64x32xf32>
    %24 = arith.mulf %20, %23 : vector<64x32xf32>
    %25 = arith.addf %19, %24 : vector<64x32xf32>
    %26 = vector.extract_strided_slice %14 {offsets = [128, 0], sizes = [64, 32], strides = [1, 1]} : vector<576x32xf32> to vector<64x32xf32>
    %c2 = arith.constant 2 : index
    %c0_15 = arith.constant 0 : index
    %c0_16 = arith.constant 0 : index
    %27 = vector.load %arg6[%c2, %c0_15, %c0_16] : memref<9x1x32xf32, #tpu.memory_space<vmem>>, vector<1x1x32xf32>
    %28 = vector.shape_cast %27 : vector<1x1x32xf32> to vector<1x32xf32>
    %29 = vector.broadcast %28 : vector<1x32xf32> to vector<64x32xf32>
    %30 = arith.mulf %26, %29 : vector<64x32xf32>
    %31 = arith.addf %25, %30 : vector<64x32xf32>
    %32 = vector.extract_strided_slice %14 {offsets = [192, 0], sizes = [64, 32], strides = [1, 1]} : vector<576x32xf32> to vector<64x32xf32>
    %c3 = arith.constant 3 : index
    %c0_17 = arith.constant 0 : index
    %c0_18 = arith.constant 0 : index
    %33 = vector.load %arg6[%c3, %c0_17, %c0_18] : memref<9x1x32xf32, #tpu.memory_space<vmem>>, vector<1x1x32xf32>
    %34 = vector.shape_cast %33 : vector<1x1x32xf32> to vector<1x32xf32>
    %35 = vector.broadcast %34 : vector<1x32xf32> to vector<64x32xf32>
    %36 = arith.mulf %32, %35 : vector<64x32xf32>
    %37 = arith.addf %31, %36 : vector<64x32xf32>
    %38 = vector.extract_strided_slice %14 {offsets = [256, 0], sizes = [64, 32], strides = [1, 1]} : vector<576x32xf32> to vector<64x32xf32>
    %c4 = arith.constant 4 : index
    %c0_19 = arith.constant 0 : index
    %c0_20 = arith.constant 0 : index
    %39 = vector.load %arg6[%c4, %c0_19, %c0_20] : memref<9x1x32xf32, #tpu.memory_space<vmem>>, vector<1x1x32xf32>
    %40 = vector.shape_cast %39 : vector<1x1x32xf32> to vector<1x32xf32>
    %41 = vector.broadcast %40 : vector<1x32xf32> to vector<64x32xf32>
    %42 = arith.mulf %38, %41 : vector<64x32xf32>
    %43 = arith.addf %37, %42 : vector<64x32xf32>
    %44 = vector.extract_strided_slice %14 {offsets = [320, 0], sizes = [64, 32], strides = [1, 1]} : vector<576x32xf32> to vector<64x32xf32>
    %c5 = arith.constant 5 : index
    %c0_21 = arith.constant 0 : index
    %c0_22 = arith.constant 0 : index
    %45 = vector.load %arg6[%c5, %c0_21, %c0_22] : memref<9x1x32xf32, #tpu.memory_space<vmem>>, vector<1x1x32xf32>
    %46 = vector.shape_cast %45 : vector<1x1x32xf32> to vector<1x32xf32>
    %47 = vector.broadcast %46 : vector<1x32xf32> to vector<64x32xf32>
    %48 = arith.mulf %44, %47 : vector<64x32xf32>
    %49 = arith.addf %43, %48 : vector<64x32xf32>
    %50 = vector.extract_strided_slice %14 {offsets = [384, 0], sizes = [64, 32], strides = [1, 1]} : vector<576x32xf32> to vector<64x32xf32>
    %c6 = arith.constant 6 : index
    %c0_23 = arith.constant 0 : index
    %c0_24 = arith.constant 0 : index
    %51 = vector.load %arg6[%c6, %c0_23, %c0_24] : memref<9x1x32xf32, #tpu.memory_space<vmem>>, vector<1x1x32xf32>
    %52 = vector.shape_cast %51 : vector<1x1x32xf32> to vector<1x32xf32>
    %53 = vector.broadcast %52 : vector<1x32xf32> to vector<64x32xf32>
    %54 = arith.mulf %50, %53 : vector<64x32xf32>
    %55 = arith.addf %49, %54 : vector<64x32xf32>
    %56 = vector.extract_strided_slice %14 {offsets = [448, 0], sizes = [64, 32], strides = [1, 1]} : vector<576x32xf32> to vector<64x32xf32>
    %c7 = arith.constant 7 : index
    %c0_25 = arith.constant 0 : index
    %c0_26 = arith.constant 0 : index
    %57 = vector.load %arg6[%c7, %c0_25, %c0_26] : memref<9x1x32xf32, #tpu.memory_space<vmem>>, vector<1x1x32xf32>
    %58 = vector.shape_cast %57 : vector<1x1x32xf32> to vector<1x32xf32>
    %59 = vector.broadcast %58 : vector<1x32xf32> to vector<64x32xf32>
    %60 = arith.mulf %56, %59 : vector<64x32xf32>
    %61 = arith.addf %55, %60 : vector<64x32xf32>
    %62 = vector.extract_strided_slice %14 {offsets = [512, 0], sizes = [64, 32], strides = [1, 1]} : vector<576x32xf32> to vector<64x32xf32>
    %c8 = arith.constant 8 : index
    %c0_27 = arith.constant 0 : index
    %c0_28 = arith.constant 0 : index
    %63 = vector.load %arg6[%c8, %c0_27, %c0_28] : memref<9x1x32xf32, #tpu.memory_space<vmem>>, vector<1x1x32xf32>
    %64 = vector.shape_cast %63 : vector<1x1x32xf32> to vector<1x32xf32>
    %65 = vector.broadcast %64 : vector<1x32xf32> to vector<64x32xf32>
    %66 = arith.mulf %62, %65 : vector<64x32xf32>
    %67 = arith.addf %61, %66 : vector<64x32xf32>
    %c0_29 = arith.constant 0 : index
    %c0_30 = arith.constant 0 : index
    %68 = vector.load %arg7[%c0_29, %c0_30] : memref<1x32xf32, #tpu.memory_space<vmem>>, vector<1x32xf32>
    %69 = vector.broadcast %68 : vector<1x32xf32> to vector<64x32xf32>
    %70 = arith.addf %67, %69 : vector<64x32xf32>
    %71 = arith.truncf %70 : vector<64x32xf32> to vector<64x32xbf16>
    %c0_31 = arith.constant 0 : index
    %c0_32 = arith.constant 0 : index
    %72 = vector.load %arg8[%c0_31, %c0_32] : memref<32x32xbf16, #tpu.memory_space<vmem>>, vector<32x32xbf16>
    %cst_33 = arith.constant dense<0.000000e+00> : vector<64x32xf32>
    %73 = tpu.matmul %71, %72, %cst_33 {dimension_numbers = #tpu.dot_dimension_numbers<[1], [0], [0], [1], [0, 0, 1, 1], [], []>} : vector<64x32xbf16>, vector<32x32xbf16>, vector<64x32xf32> -> vector<64x32xf32>
    %c0_34 = arith.constant 0 : index
    %c0_35 = arith.constant 0 : index
    %74 = vector.load %arg9[%c0_34, %c0_35] : memref<1x32xf32, #tpu.memory_space<vmem>>, vector<1x32xf32>
    %75 = vector.broadcast %74 : vector<1x32xf32> to vector<64x32xf32>
    %76 = arith.addf %73, %75 : vector<64x32xf32>
    %cst_36 = arith.constant 0.000000e+00 : f32
    %77 = vector.broadcast %cst_36 : f32 to vector<64x32xf32>
    %78 = arith.maximumf %76, %77 : vector<64x32xf32>
    %79 = arith.truncf %78 : vector<64x32xf32> to vector<64x32xbf16>
    %c0_37 = arith.constant 0 : index
    %c0_38 = arith.constant 0 : index
    %80 = vector.load %arg3[%c0_37, %c0_38] : memref<576x64xbf16, #tpu.memory_space<vmem>>, vector<576x64xbf16>
    %cst_39 = arith.constant dense<0.000000e+00> : vector<576x32xf32>
    %81 = tpu.matmul %80, %79, %cst_39 {dimension_numbers = #tpu.dot_dimension_numbers<[1], [0], [0], [1], [0, 0, 1, 1], [], []>} : vector<576x64xbf16>, vector<64x32xbf16>, vector<576x32xf32> -> vector<576x32xf32>
    %82 = vector.extract_strided_slice %81 {offsets = [0, 0], sizes = [64, 32], strides = [1, 1]} : vector<576x32xf32> to vector<64x32xf32>
    %c0_40 = arith.constant 0 : index
    %c0_41 = arith.constant 0 : index
    %c0_42 = arith.constant 0 : index
    %83 = vector.load %arg10[%c0_40, %c0_41, %c0_42] : memref<9x1x32xf32, #tpu.memory_space<vmem>>, vector<1x1x32xf32>
    %84 = vector.shape_cast %83 : vector<1x1x32xf32> to vector<1x32xf32>
    %85 = vector.broadcast %84 : vector<1x32xf32> to vector<64x32xf32>
    %86 = arith.mulf %82, %85 : vector<64x32xf32>
    %87 = vector.extract_strided_slice %81 {offsets = [64, 0], sizes = [64, 32], strides = [1, 1]} : vector<576x32xf32> to vector<64x32xf32>
    %c1_43 = arith.constant 1 : index
    %c0_44 = arith.constant 0 : index
    %c0_45 = arith.constant 0 : index
    %88 = vector.load %arg10[%c1_43, %c0_44, %c0_45] : memref<9x1x32xf32, #tpu.memory_space<vmem>>, vector<1x1x32xf32>
    %89 = vector.shape_cast %88 : vector<1x1x32xf32> to vector<1x32xf32>
    %90 = vector.broadcast %89 : vector<1x32xf32> to vector<64x32xf32>
    %91 = arith.mulf %87, %90 : vector<64x32xf32>
    %92 = arith.addf %86, %91 : vector<64x32xf32>
    %93 = vector.extract_strided_slice %81 {offsets = [128, 0], sizes = [64, 32], strides = [1, 1]} : vector<576x32xf32> to vector<64x32xf32>
    %c2_46 = arith.constant 2 : index
    %c0_47 = arith.constant 0 : index
    %c0_48 = arith.constant 0 : index
    %94 = vector.load %arg10[%c2_46, %c0_47, %c0_48] : memref<9x1x32xf32, #tpu.memory_space<vmem>>, vector<1x1x32xf32>
    %95 = vector.shape_cast %94 : vector<1x1x32xf32> to vector<1x32xf32>
    %96 = vector.broadcast %95 : vector<1x32xf32> to vector<64x32xf32>
    %97 = arith.mulf %93, %96 : vector<64x32xf32>
    %98 = arith.addf %92, %97 : vector<64x32xf32>
    %99 = vector.extract_strided_slice %81 {offsets = [192, 0], sizes = [64, 32], strides = [1, 1]} : vector<576x32xf32> to vector<64x32xf32>
    %c3_49 = arith.constant 3 : index
    %c0_50 = arith.constant 0 : index
    %c0_51 = arith.constant 0 : index
    %100 = vector.load %arg10[%c3_49, %c0_50, %c0_51] : memref<9x1x32xf32, #tpu.memory_space<vmem>>, vector<1x1x32xf32>
    %101 = vector.shape_cast %100 : vector<1x1x32xf32> to vector<1x32xf32>
    %102 = vector.broadcast %101 : vector<1x32xf32> to vector<64x32xf32>
    %103 = arith.mulf %99, %102 : vector<64x32xf32>
    %104 = arith.addf %98, %103 : vector<64x32xf32>
    %105 = vector.extract_strided_slice %81 {offsets = [256, 0], sizes = [64, 32], strides = [1, 1]} : vector<576x32xf32> to vector<64x32xf32>
    %c4_52 = arith.constant 4 : index
    %c0_53 = arith.constant 0 : index
    %c0_54 = arith.constant 0 : index
    %106 = vector.load %arg10[%c4_52, %c0_53, %c0_54] : memref<9x1x32xf32, #tpu.memory_space<vmem>>, vector<1x1x32xf32>
    %107 = vector.shape_cast %106 : vector<1x1x32xf32> to vector<1x32xf32>
    %108 = vector.broadcast %107 : vector<1x32xf32> to vector<64x32xf32>
    %109 = arith.mulf %105, %108 : vector<64x32xf32>
    %110 = arith.addf %104, %109 : vector<64x32xf32>
    %111 = vector.extract_strided_slice %81 {offsets = [320, 0], sizes = [64, 32], strides = [1, 1]} : vector<576x32xf32> to vector<64x32xf32>
    %c5_55 = arith.constant 5 : index
    %c0_56 = arith.constant 0 : index
    %c0_57 = arith.constant 0 : index
    %112 = vector.load %arg10[%c5_55, %c0_56, %c0_57] : memref<9x1x32xf32, #tpu.memory_space<vmem>>, vector<1x1x32xf32>
    %113 = vector.shape_cast %112 : vector<1x1x32xf32> to vector<1x32xf32>
    %114 = vector.broadcast %113 : vector<1x32xf32> to vector<64x32xf32>
    %115 = arith.mulf %111, %114 : vector<64x32xf32>
    %116 = arith.addf %110, %115 : vector<64x32xf32>
    %117 = vector.extract_strided_slice %81 {offsets = [384, 0], sizes = [64, 32], strides = [1, 1]} : vector<576x32xf32> to vector<64x32xf32>
    %c6_58 = arith.constant 6 : index
    %c0_59 = arith.constant 0 : index
    %c0_60 = arith.constant 0 : index
    %118 = vector.load %arg10[%c6_58, %c0_59, %c0_60] : memref<9x1x32xf32, #tpu.memory_space<vmem>>, vector<1x1x32xf32>
    %119 = vector.shape_cast %118 : vector<1x1x32xf32> to vector<1x32xf32>
    %120 = vector.broadcast %119 : vector<1x32xf32> to vector<64x32xf32>
    %121 = arith.mulf %117, %120 : vector<64x32xf32>
    %122 = arith.addf %116, %121 : vector<64x32xf32>
    %123 = vector.extract_strided_slice %81 {offsets = [448, 0], sizes = [64, 32], strides = [1, 1]} : vector<576x32xf32> to vector<64x32xf32>
    %c7_61 = arith.constant 7 : index
    %c0_62 = arith.constant 0 : index
    %c0_63 = arith.constant 0 : index
    %124 = vector.load %arg10[%c7_61, %c0_62, %c0_63] : memref<9x1x32xf32, #tpu.memory_space<vmem>>, vector<1x1x32xf32>
    %125 = vector.shape_cast %124 : vector<1x1x32xf32> to vector<1x32xf32>
    %126 = vector.broadcast %125 : vector<1x32xf32> to vector<64x32xf32>
    %127 = arith.mulf %123, %126 : vector<64x32xf32>
    %128 = arith.addf %122, %127 : vector<64x32xf32>
    %129 = vector.extract_strided_slice %81 {offsets = [512, 0], sizes = [64, 32], strides = [1, 1]} : vector<576x32xf32> to vector<64x32xf32>
    %c8_64 = arith.constant 8 : index
    %c0_65 = arith.constant 0 : index
    %c0_66 = arith.constant 0 : index
    %130 = vector.load %arg10[%c8_64, %c0_65, %c0_66] : memref<9x1x32xf32, #tpu.memory_space<vmem>>, vector<1x1x32xf32>
    %131 = vector.shape_cast %130 : vector<1x1x32xf32> to vector<1x32xf32>
    %132 = vector.broadcast %131 : vector<1x32xf32> to vector<64x32xf32>
    %133 = arith.mulf %129, %132 : vector<64x32xf32>
    %134 = arith.addf %128, %133 : vector<64x32xf32>
    %c0_67 = arith.constant 0 : index
    %c0_68 = arith.constant 0 : index
    %135 = vector.load %arg11[%c0_67, %c0_68] : memref<1x32xf32, #tpu.memory_space<vmem>>, vector<1x32xf32>
    %136 = vector.broadcast %135 : vector<1x32xf32> to vector<64x32xf32>
    %137 = arith.addf %134, %136 : vector<64x32xf32>
    %cst_69 = arith.constant 0.000000e+00 : f32
    %138 = vector.broadcast %cst_69 : f32 to vector<64x32xf32>
    %139 = arith.maximumf %137, %138 : vector<64x32xf32>
    %140 = arith.truncf %139 : vector<64x32xf32> to vector<64x32xbf16>
    %c0_70 = arith.constant 0 : index
    %c0_71 = arith.constant 0 : index
    %141 = vector.load %arg12[%c0_70, %c0_71] : memref<32x32xbf16, #tpu.memory_space<vmem>>, vector<32x32xbf16>
    %cst_72 = arith.constant dense<0.000000e+00> : vector<64x32xf32>
    %142 = tpu.matmul %140, %141, %cst_72 {dimension_numbers = #tpu.dot_dimension_numbers<[1], [0], [0], [1], [0, 0, 1, 1], [], []>} : vector<64x32xbf16>, vector<32x32xbf16>, vector<64x32xf32> -> vector<64x32xf32>
    %c0_73 = arith.constant 0 : index
    %c0_74 = arith.constant 0 : index
    %143 = vector.load %arg13[%c0_73, %c0_74] : memref<1x32xf32, #tpu.memory_space<vmem>>, vector<1x32xf32>
    %144 = vector.broadcast %143 : vector<1x32xf32> to vector<64x32xf32>
    %145 = arith.addf %142, %144 : vector<64x32xf32>
    %cst_75 = arith.constant 0.000000e+00 : f32
    %146 = vector.broadcast %cst_75 : f32 to vector<64x32xf32>
    %147 = arith.maximumf %145, %146 : vector<64x32xf32>
    %148 = tpu.transpose %147, [1, 0] : vector<64x32xf32> -> vector<32x64xf32>
    %c0_76 = arith.constant 0 : index
    %c0_77 = arith.constant 0 : index
    %c0_78 = arith.constant 0 : index
    %149 = vector.load %arg14[%c0_76, %c0_77, %c0_78] : memref<1x32x64xf32, #tpu.memory_space<vmem>>, vector<1x32x64xf32>
    %150 = vector.shape_cast %149 : vector<1x32x64xf32> to vector<32x64xf32>
    %151 = vector.shape_cast %148 : vector<32x64xf32> to vector<1x32x64xf32>
    tpu.vector_store %arg14[%c0_76, %c0_77, %c0_78], %151 {strides = array<i32>} : memref<1x32x64xf32, #tpu.memory_space<vmem>>, vector<1x32x64xf32>,
    return
  }
  func.func @transform_0(%arg0: i32) -> (i32, i32, i32) {
    %c0_i32 = arith.constant 0 : i32
    %c0_i32_0 = arith.constant 0 : i32
    %c0_i32_1 = arith.constant 0 : i32
    return %arg0, %c0_i32, %c0_i32_0 : i32, i32, i32
  }
  func.func @transform_1(%arg0: i32) -> (i32, i32) {
    %c0_i32 = arith.constant 0 : i32
    %c0_i32_0 = arith.constant 0 : i32
    %c0_i32_1 = arith.constant 0 : i32
    return %c0_i32, %c0_i32_0 : i32, i32
  }
  func.func @transform_2(%arg0: i32) -> (i32, i32) {
    %c0_i32 = arith.constant 0 : i32
    %c0_i32_0 = arith.constant 0 : i32
    %c0_i32_1 = arith.constant 0 : i32
    return %c0_i32, %c0_i32_0 : i32, i32
  }
  func.func @transform_3(%arg0: i32) -> (i32, i32) {
    %c0_i32 = arith.constant 0 : i32
    %c0_i32_0 = arith.constant 0 : i32
    %c0_i32_1 = arith.constant 0 : i32
    return %c0_i32, %c0_i32_0 : i32, i32
  }
  func.func @transform_4(%arg0: i32) -> (i32, i32) {
    %c0_i32 = arith.constant 0 : i32
    %c0_i32_0 = arith.constant 0 : i32
    %c0_i32_1 = arith.constant 0 : i32
    return %c0_i32, %c0_i32_0 : i32, i32
  }
  func.func @transform_5(%arg0: i32) -> (i32, i32, i32) {
    %c0_i32 = arith.constant 0 : i32
    %c0_i32_0 = arith.constant 0 : i32
    %c0_i32_1 = arith.constant 0 : i32
    %c0_i32_2 = arith.constant 0 : i32
    return %c0_i32, %c0_i32_0, %c0_i32_1 : i32, i32, i32
  }
  func.func @transform_6(%arg0: i32) -> (i32, i32) {
    %c0_i32 = arith.constant 0 : i32
    %c0_i32_0 = arith.constant 0 : i32
    %c0_i32_1 = arith.constant 0 : i32
    return %c0_i32, %c0_i32_0 : i32, i32
  }
  func.func @transform_7(%arg0: i32) -> (i32, i32) {
    %c0_i32 = arith.constant 0 : i32
    %c0_i32_0 = arith.constant 0 : i32
    %c0_i32_1 = arith.constant 0 : i32
    return %c0_i32, %c0_i32_0 : i32, i32
  }
  func.func @transform_8(%arg0: i32) -> (i32, i32) {
    %c0_i32 = arith.constant 0 : i32
    %c0_i32_0 = arith.constant 0 : i32
    %c0_i32_1 = arith.constant 0 : i32
    return %c0_i32, %c0_i32_0 : i32, i32
  }
  func.func @transform_9(%arg0: i32) -> (i32, i32, i32) {
    %c0_i32 = arith.constant 0 : i32
    %c0_i32_0 = arith.constant 0 : i32
    %c0_i32_1 = arith.constant 0 : i32
    %c0_i32_2 = arith.constant 0 : i32
    return %c0_i32, %c0_i32_0, %c0_i32_1 : i32, i32, i32
  }
  func.func @transform_10(%arg0: i32) -> (i32, i32) {
    %c0_i32 = arith.constant 0 : i32
    %c0_i32_0 = arith.constant 0 : i32
    %c0_i32_1 = arith.constant 0 : i32
    return %c0_i32, %c0_i32_0 : i32, i32
  }
  func.func @transform_11(%arg0: i32) -> (i32, i32) {
    %c0_i32 = arith.constant 0 : i32
    %c0_i32_0 = arith.constant 0 : i32
    %c0_i32_1 = arith.constant 0 : i32
    return %c0_i32, %c0_i32_0 : i32, i32
  }
  func.func @transform_12(%arg0: i32) -> (i32, i32) {
    %c0_i32 = arith.constant 0 : i32
    %c0_i32_0 = arith.constant 0 : i32
    %c0_i32_1 = arith.constant 0 : i32
    return %c0_i32, %c0_i32_0 : i32, i32
  }
  func.func @transform_13(%arg0: i32) -> (i32, i32, i32) {
    %c0_i32 = arith.constant 0 : i32
    %c0_i32_0 = arith.constant 0 : i32
    %c0_i32_1 = arith.constant 0 : i32
    return %arg0, %c0_i32, %c0_i32_0 : i32, i32, i32
  }
}

</mosaic_0001>

<llo_original>
// kernel: es_block_s2.1
$region0: #{es_block_s2.1}
  #allocation0 [shape = 'u32[]', space=smem, size = 0x4, offset = 0x4, fixed_abs, tag = 'smem constant byte address 0x4 - core index']
  #allocation1 [shape = 'u32[144,128]{1,0:T(1,128)}', space=vmem, size = 0x12000, scoped, tag = 'internal scratch']
  %s0 = inlined_call_operand.vmem [shape: f32[2,16,256], index: 0, kind: input, shape index: {}]
  %s1 = inlined_call_operand.vmem [shape: bf16[576,256], index: 1, kind: input, shape index: {}]
  %s2 = inlined_call_operand.vmem [shape: bf16[576,64], index: 2, kind: input, shape index: {}]
  %s3 = inlined_call_operand.vmem [shape: bf16[16,16], index: 3, kind: input, shape index: {}]
  %s4 = inlined_call_operand.vmem [shape: f32[1,16], index: 4, kind: input, shape index: {}]
  %s5 = inlined_call_operand.vmem [shape: f32[9,1,32], index: 5, kind: input, shape index: {}]
  %s6 = inlined_call_operand.vmem [shape: f32[1,32], index: 6, kind: input, shape index: {}]
  %s7 = inlined_call_operand.vmem [shape: bf16[32,32], index: 7, kind: input, shape index: {}]
  %s8 = inlined_call_operand.vmem [shape: f32[1,32], index: 8, kind: input, shape index: {}]
  %s9 = inlined_call_operand.vmem [shape: f32[9,1,32], index: 9, kind: input, shape index: {}]
  %s10 = inlined_call_operand.vmem [shape: f32[1,32], index: 10, kind: input, shape index: {}]
  %s11 = inlined_call_operand.vmem [shape: bf16[32,32], index: 11, kind: input, shape index: {}]
  %s12 = inlined_call_operand.vmem [shape: f32[1,32], index: 12, kind: input, shape index: {}]
  %s13 = inlined_call_operand.vmem [shape: f32[2,32,64], index: 13, kind: output, shape index: {}]
  %s14 = sld [smem:[#allocation0]]
  $region85: #{es_block_s2.1} parent=0
    _
  %s16 = ssub.s32 1, %s14
  %s17 = scalar_select 0, %s16, %s14
  loop: start=0, step=1, limit=4
  $region2: #{es_block_s2.1} parent=0 // loop_pre_header
    _
  $region3: #{es_block_s2.1} parent=0 // loop_header
    %s19 = sphi 0, %s23
    %p20 = scmp.ge.s32.totalorder %s19, 4
    %s29 = sphi 0, %s31
    %s32 = sphi 0, %s29
    %s33 = sphi 0, %s32
    %s49 = sphi 0, %s33
    %s53 = sphi 0, %s53
    %s55 = sphi 0, %s53
    %s56 = sphi 0, %s55
    %s70 = sphi 0, %s56
    %s74 = sphi 0, %s74
    %s76 = sphi 0, %s74
    %s77 = sphi 0, %s76
    %s91 = sphi 0, %s77
    %s95 = sphi 0, %s95
    %s97 = sphi 0, %s95
    %s98 = sphi 0, %s97
    %s112 = sphi 0, %s98
    %s116 = sphi 0, %s116
    %s118 = sphi 0, %s116
    %s119 = sphi 0, %s118
    %s133 = sphi 0, %s119
    %s137 = sphi 0, %s137
    %s139 = sphi 0, %s137
    %s140 = sphi 0, %s139
    %s154 = sphi 0, %s140
    %s158 = sphi 0, %s158
    %s160 = sphi 0, %s158
    %s161 = sphi 0, %s160
    %s175 = sphi 0, %s161
    %s179 = sphi 0, %s179
    %s181 = sphi 0, %s179
    %s182 = sphi 0, %s181
    %s196 = sphi 0, %s182
    %s200 = sphi 0, %s200
    %s202 = sphi 0, %s200
    %s203 = sphi 0, %s202
    %s217 = sphi 0, %s203
    %s221 = sphi 0, %s221
    %s223 = sphi 0, %s221
    %s224 = sphi 0, %s223
    %s238 = sphi 0, %s224
    %s242 = sphi 0, %s242
    %s244 = sphi 0, %s242
    %s245 = sphi 0, %s244
    %s259 = sphi 0, %s245
    %s263 = sphi 0, %s263
    %s265 = sphi 0, %s263
    %s266 = sphi 0, %s265
    %s280 = sphi 0, %s266
    %s284 = sphi 0, %s284
    %s286 = sphi 0, %s284
    %s287 = sphi 0, %s286
    %s301 = sphi 0, %s287
    %s307 = sphi 0, %s309
    %s310 = sphi 0, %s307
    %s311 = sphi 0, %s310
    %s327 = sphi 0, %s311
  $region4: #{es_block_s2.1} parent=0 // loop_header_branch
    %22 = sbr.rel (%p20) target = $region8
  $region5: #{es_block_s2.1} parent=0 // loop_body
    %s24 = ssub.s32 %s19, 1
    %s25 = ssub.s32 %s19, 2
    %s26 = sadd.s32 %s19, 1
    %s27 = ssub.s32 %s19, %s26
    %p28 = scmp.eq.s32.totalorder %s27, 0
    %s30 = sadd.s32 %s29, 1
    %s31 = scalar_select %p28, %s29, %s30
    %p34 = pneg %p28
    %p35 = scmp.eq.s32.totalorder %s19, 1
    %p36 = por %p34, %p35
    %p37 = scmp.ne.s32.totalorder %s29, %s32
    %p38 = scmp.eq.s32.totalorder %s19, 0
    %p39 = por %p37, %p38
    %p40 = scmp.ne.s32.totalorder %s29, %s32
    %p41 = scmp.eq.s32.totalorder %s24, 1
    %p42 = por %p40, %p41
    %p43 = scmp.ne.s32.totalorder %s32, %s33
    %p44 = scmp.eq.s32.totalorder %s24, 0
    %p45 = por %p43, %p44
    %p46 = scmp.ne.s32.totalorder %s32, %s33
    %p47 = scmp.eq.s32.totalorder %s25, 1
    %p48 = por %p46, %p47
    %p50 = scmp.ne.s32.totalorder %s33, %s49
    %p51 = scmp.eq.s32.totalorder %s25, 0
    %p52 = por %p50, %p51
    %s54 = sadd.s32 %s53, 1
    %p57 = scmp.eq.s32.totalorder %s19, 1
    %p58 = scmp.ne.s32.totalorder %s53, %s55
    %p59 = scmp.eq.s32.totalorder %s19, 0
    %p60 = por %p58, %p59
    %p61 = scmp.ne.s32.totalorder %s53, %s55
    %p62 = scmp.eq.s32.totalorder %s24, 1
    %p63 = por %p61, %p62
    %p64 = scmp.ne.s32.totalorder %s55, %s56
    %p65 = scmp.eq.s32.totalorder %s24, 0
    %p66 = por %p64, %p65
    %p67 = scmp.ne.s32.totalorder %s55, %s56
    %p68 = scmp.eq.s32.totalorder %s25, 1
    %p69 = por %p67, %p68
    %p71 = scmp.ne.s32.totalorder %s56, %s70
    %p72 = scmp.eq.s32.totalorder %s25, 0
    %p73 = por %p71, %p72
    %s75 = sadd.s32 %s74, 1
    %p78 = scmp.eq.s32.totalorder %s19, 1
    %p79 = scmp.ne.s32.totalorder %s74, %s76
    %p80 = scmp.eq.s32.totalorder %s19, 0
    %p81 = por %p79, %p80
    %p82 = scmp.ne.s32.totalorder %s74, %s76
    %p83 = scmp.eq.s32.totalorder %s24, 1
    %p84 = por %p82, %p83
    %p85 = scmp.ne.s32.totalorder %s76, %s77
    %p86 = scmp.eq.s32.totalorder %s24, 0
    %p87 = por %p85, %p86
    %p88 = scmp.ne.s32.totalorder %s76, %s77
    %p89 = scmp.eq.s32.totalorder %s25, 1
    %p90 = por %p88, %p89
    %p92 = scmp.ne.s32.totalorder %s77, %s91
    %p93 = scmp.eq.s32.totalorder %s25, 0
    %p94 = por %p92, %p93
    %s96 = sadd.s32 %s95, 1
    %p99 = scmp.eq.s32.totalorder %s19, 1
    %p100 = scmp.ne.s32.totalorder %s95, %s97
    %p101 = scmp.eq.s32.totalorder %s19, 0
    %p102 = por %p100, %p101
    %p103 = scmp.ne.s32.totalorder %s95, %s97
    %p104 = scmp.eq.s32.totalorder %s24, 1
    %p105 = por %p103, %p104
    %p106 = scmp.ne.s32.totalorder %s97, %s98
    %p107 = scmp.eq.s32.totalorder %s24, 0
    %p108 = por %p106, %p107
    %p109 = scmp.ne.s32.totalorder %s97, %s98
    %p110 = scmp.eq.s32.totalorder %s25, 1
    %p111 = por %p109, %p110
    %p113 = scmp.ne.s32.totalorder %s98, %s112
    %p114 = scmp.eq.s32.totalorder %s25, 0
    %p115 = por %p113, %p114
    %s117 = sadd.s32 %s116, 1
    %p120 = scmp.eq.s32.totalorder %s19, 1
    %p121 = scmp.ne.s32.totalorder %s116, %s118
    %p122 = scmp.eq.s32.totalorder %s19, 0
    %p123 = por %p121, %p122
    %p124 = scmp.ne.s32.totalorder %s116, %s118
    %p125 = scmp.eq.s32.totalorder %s24, 1
    %p126 = por %p124, %p125
    %p127 = scmp.ne.s32.totalorder %s118, %s119
    %p128 = scmp.eq.s32.totalorder %s24, 0
    %p129 = por %p127, %p128
    %p130 = scmp.ne.s32.totalorder %s118, %s119
    %p131 = scmp.eq.s32.totalorder %s25, 1
    %p132 = por %p130, %p131
    %p134 = scmp.ne.s32.totalorder %s119, %s133
    %p135 = scmp.eq.s32.totalorder %s25, 0
    %p136 = por %p134, %p135
    %s138 = sadd.s32 %s137, 1
    %p141 = scmp.eq.s32.totalorder %s19, 1
    %p142 = scmp.ne.s32.totalorder %s137, %s139
    %p143 = scmp.eq.s32.totalorder %s19, 0
    %p144 = por %p142, %p143
    %p145 = scmp.ne.s32.totalorder %s137, %s139
    %p146 = scmp.eq.s32.totalorder %s24, 1
    %p147 = por %p145, %p146
    %p148 = scmp.ne.s32.totalorder %s139, %s140
    %p149 = scmp.eq.s32.totalorder %s24, 0
    %p150 = por %p148, %p149
    %p151 = scmp.ne.s32.totalorder %s139, %s140
    %p152 = scmp.eq.s32.totalorder %s25, 1
    %p153 = por %p151, %p152
    %p155 = scmp.ne.s32.totalorder %s140, %s154
    %p156 = scmp.eq.s32.totalorder %s25, 0
    %p157 = por %p155, %p156
    %s159 = sadd.s32 %s158, 1
    %p162 = scmp.eq.s32.totalorder %s19, 1
    %p163 = scmp.ne.s32.totalorder %s158, %s160
    %p164 = scmp.eq.s32.totalorder %s19, 0
    %p165 = por %p163, %p164
    %p166 = scmp.ne.s32.totalorder %s158, %s160
    %p167 = scmp.eq.s32.totalorder %s24, 1
    %p168 = por %p166, %p167
    %p169 = scmp.ne.s32.totalorder %s160, %s161
    %p170 = scmp.eq.s32.totalorder %s24, 0
    %p171 = por %p169, %p170
    %p172 = scmp.ne.s32.totalorder %s160, %s161
    %p173 = scmp.eq.s32.totalorder %s25, 1
    %p174 = por %p172, %p173
    %p176 = scmp.ne.s32.totalorder %s161, %s175
    %p177 = scmp.eq.s32.totalorder %s25, 0
    %p178 = por %p176, %p177
    %s180 = sadd.s32 %s179, 1
    %p183 = scmp.eq.s32.totalorder %s19, 1
    %p184 = scmp.ne.s32.totalorder %s179, %s181
    %p185 = scmp.eq.s32.totalorder %s19, 0
    %p186 = por %p184, %p185
    %p187 = scmp.ne.s32.totalorder %s179, %s181
    %p188 = scmp.eq.s32.totalorder %s24, 1
    %p189 = por %p187, %p188
    %p190 = scmp.ne.s32.totalorder %s181, %s182
    %p191 = scmp.eq.s32.totalorder %s24, 0
    %p192 = por %p190, %p191
    %p193 = scmp.ne.s32.totalorder %s181, %s182
    %p194 = scmp.eq.s32.totalorder %s25, 1
    %p195 = por %p193, %p194
    %p197 = scmp.ne.s32.totalorder %s182, %s196
    %p198 = scmp.eq.s32.totalorder %s25, 0
    %p199 = por %p197, %p198
    %s201 = sadd.s32 %s200, 1
    %p204 = scmp.eq.s32.totalorder %s19, 1
    %p205 = scmp.ne.s32.totalorder %s200, %s202
    %p206 = scmp.eq.s32.totalorder %s19, 0
    %p207 = por %p205, %p206
    %p208 = scmp.ne.s32.totalorder %s200, %s202
    %p209 = scmp.eq.s32.totalorder %s24, 1
    %p210 = por %p208, %p209
    %p211 = scmp.ne.s32.totalorder %s202, %s203
    %p212 = scmp.eq.s32.totalorder %s24, 0
    %p213 = por %p211, %p212
    %p214 = scmp.ne.s32.totalorder %s202, %s203
    %p215 = scmp.eq.s32.totalorder %s25, 1
    %p216 = por %p214, %p215
    %p218 = scmp.ne.s32.totalorder %s203, %s217
    %p219 = scmp.eq.s32.totalorder %s25, 0
    %p220 = por %p218, %p219
    %s222 = sadd.s32 %s221, 1
    %p225 = scmp.eq.s32.totalorder %s19, 1
    %p226 = scmp.ne.s32.totalorder %s221, %s223
    %p227 = scmp.eq.s32.totalorder %s19, 0
    %p228 = por %p226, %p227
    %p229 = scmp.ne.s32.totalorder %s221, %s223
    %p230 = scmp.eq.s32.totalorder %s24, 1
    %p231 = por %p229, %p230
    %p232 = scmp.ne.s32.totalorder %s223, %s224
    %p233 = scmp.eq.s32.totalorder %s24, 0
    %p234 = por %p232, %p233
    %p235 = scmp.ne.s32.totalorder %s223, %s224
    %p236 = scmp.eq.s32.totalorder %s25, 1
    %p237 = por %p235, %p236
    %p239 = scmp.ne.s32.totalorder %s224, %s238
    %p240 = scmp.eq.s32.totalorder %s25, 0
    %p241 = por %p239, %p240
    %s243 = sadd.s32 %s242, 1
    %p246 = scmp.eq.s32.totalorder %s19, 1
    %p247 = scmp.ne.s32.totalorder %s242, %s244
    %p248 = scmp.eq.s32.totalorder %s19, 0
    %p249 = por %p247, %p248
    %p250 = scmp.ne.s32.totalorder %s242, %s244
    %p251 = scmp.eq.s32.totalorder %s24, 1
    %p252 = por %p250, %p251
    %p253 = scmp.ne.s32.totalorder %s244, %s245
    %p254 = scmp.eq.s32.totalorder %s24, 0
    %p255 = por %p253, %p254
    %p256 = scmp.ne.s32.totalorder %s244, %s245
    %p257 = scmp.eq.s32.totalorder %s25, 1
    %p258 = por %p256, %p257
    %p260 = scmp.ne.s32.totalorder %s245, %s259
    %p261 = scmp.eq.s32.totalorder %s25, 0
    %p262 = por %p260, %p261
    %s264 = sadd.s32 %s263, 1
    %p267 = scmp.eq.s32.totalorder %s19, 1
    %p268 = scmp.ne.s32.totalorder %s263, %s265
    %p269 = scmp.eq.s32.totalorder %s19, 0
    %p270 = por %p268, %p269
    %p271 = scmp.ne.s32.totalorder %s263, %s265
    %p272 = scmp.eq.s32.totalorder %s24, 1
    %p273 = por %p271, %p272
    %p274 = scmp.ne.s32.totalorder %s265, %s266
    %p275 = scmp.eq.s32.totalorder %s24, 0
    %p276 = por %p274, %p275
    %p277 = scmp.ne.s32.totalorder %s265, %s266
    %p278 = scmp.eq.s32.totalorder %s25, 1
    %p279 = por %p277, %p278
    %p281 = scmp.ne.s32.totalorder %s266, %s280
    %p282 = scmp.eq.s32.totalorder %s25, 0
    %p283 = por %p281, %p282
    %s285 = sadd.s32 %s284, 1
    %p288 = scmp.eq.s32.totalorder %s19, 1
    %p289 = scmp.ne.s32.totalorder %s284, %s286
    %p290 = scmp.eq.s32.totalorder %s19, 0
    %p291 = por %p289, %p290
    %p292 = scmp.ne.s32.totalorder %s284, %s286
    %p293 = scmp.eq.s32.totalorder %s24, 1
    %p294 = por %p292, %p293
    %p295 = scmp.ne.s32.totalorder %s286, %s287
    %p296 = scmp.eq.s32.totalorder %s24, 0
    %p297 = por %p295, %p296
    %p298 = scmp.ne.s32.totalorder %s286, %s287
    %p299 = scmp.eq.s32.totalorder %s25, 1
    %p300 = por %p298, %p299
    %p302 = scmp.ne.s32.totalorder %s287, %s301
    %p303 = scmp.eq.s32.totalorder %s25, 0
    %p304 = por %p302, %p303
    %s305 = ssub.s32 %s19, %s26
    %p306 = scmp.eq.s32.totalorder %s305, 0
    %s308 = sadd.s32 %s307, 1
    %s309 = scalar_select %p306, %s307, %s308
    %p312 = pneg %p306
    %p313 = scmp.eq.s32.totalorder %s19, 1
    %p314 = por %p312, %p313
    %p315 = scmp.ne.s32.totalorder %s307, %s310
    %p316 = scmp.eq.s32.totalorder %s19, 0
    %p317 = por %p315, %p316
    %p318 = scmp.ne.s32.totalorder %s307, %s310
    %p319 = scmp.eq.s32.totalorder %s24, 1
    %p320 = por %p318, %p319
    %p321 = scmp.ne.s32.totalorder %s310, %s311
    %p322 = scmp.eq.s32.totalorder %s24, 0
    %p323 = por %p321, %p322
    %p324 = scmp.ne.s32.totalorder %s310, %s311
    %p325 = scmp.eq.s32.totalorder %s25, 1
    %p326 = por %p324, %p325
    %p328 = scmp.ne.s32.totalorder %s311, %s327
    %p329 = scmp.eq.s32.totalorder %s25, 0
    %p330 = por %p328, %p329
    %p331 = scmp.le.s32.totalorder 1, %s19
    %p332 = scmp.lt.s32.totalorder %s19, 3
    %p333 = pnand %p331, %p332
    %p334 = pneg %p333
    // Predicated region
    $region9: #{es_block_s2.1} parent=5 // pred_check
      _
    $region10: #{es_block_s2.1} parent=5 // pred_check_branch
      %336 = sbr.rel (%p333) target = $region12
    $region11: #{es_block_s2.1} parent=5 // pred_region
      %s337 = ssub.s32 %s19, 1
      // Predicated region
      $region13: #{es_block_s2.1} parent=11 // pred_check
        %p338 = pneg %p66
      $region14: #{es_block_s2.1} parent=11 // pred_check_branch
        %340 = sbr.rel (%p338) target = $region16
      $region15: #{es_block_s2.1} parent=11 // pred_region
        _
      $region16: #{es_block_s2.1} parent=11 // pred_fallthru
        _
      // Predicated region
      $region17: #{es_block_s2.1} parent=11 // pred_check
        %p341 = pneg %p87
      $region18: #{es_block_s2.1} parent=11 // pred_check_branch
        %343 = sbr.rel (%p341) target = $region20
      $region19: #{es_block_s2.1} parent=11 // pred_region
        _
      $region20: #{es_block_s2.1} parent=11 // pred_fallthru
        _
      // Predicated region
      $region21: #{es_block_s2.1} parent=11 // pred_check
        %p344 = pneg %p108
      $region22: #{es_block_s2.1} parent=11 // pred_check_branch
        %346 = sbr.rel (%p344) target = $region24
      $region23: #{es_block_s2.1} parent=11 // pred_region
        _
      $region24: #{es_block_s2.1} parent=11 // pred_fallthru
        _
      // Predicated region
      $region25: #{es_block_s2.1} parent=11 // pred_check
        %p347 = pneg %p129
      $region26: #{es_block_s2.1} parent=11 // pred_check_branch
        %349 = sbr.rel (%p347) target = $region28
      $region27: #{es_block_s2.1} parent=11 // pred_region
        _
      $region28: #{es_block_s2.1} parent=11 // pred_fallthru
        _
      // Predicated region
      $region29: #{es_block_s2.1} parent=11 // pred_check
        %p350 = pneg %p150
      $region30: #{es_block_s2.1} parent=11 // pred_check_branch
        %352 = sbr.rel (%p350) target = $region32
      $region31: #{es_block_s2.1} parent=11 // pred_region
        _
      $region32: #{es_block_s2.1} parent=11 // pred_fallthru
        _
      // Predicated region
      $region33: #{es_block_s2.1} parent=11 // pred_check
        %p353 = pneg %p171
      $region34: #{es_block_s2.1} parent=11 // pred_check_branch
        %355 = sbr.rel (%p353) target = $region36
      $region35: #{es_block_s2.1} parent=11 // pred_region
        _
      $region36: #{es_block_s2.1} parent=11 // pred_fallthru
        _
      // Predicated region
      $region37: #{es_block_s2.1} parent=11 // pred_check
        %p356 = pneg %p192
      $region38: #{es_block_s2.1} parent=11 // pred_check_branch
        %358 = sbr.rel (%p356) target = $region40
      $region39: #{es_block_s2.1} parent=11 // pred_region
        _
      $region40: #{es_block_s2.1} parent=11 // pred_fallthru
        _
      // Predicated region
      $region41: #{es_block_s2.1} parent=11 // pred_check
        %p359 = pneg %p213
      $region42: #{es_block_s2.1} parent=11 // pred_check_branch
        %361 = sbr.rel (%p359) target = $region44
      $region43: #{es_block_s2.1} parent=11 // pred_region
        _
      $region44: #{es_block_s2.1} parent=11 // pred_fallthru
        _
      // Predicated region
      $region45: #{es_block_s2.1} parent=11 // pred_check
        %p362 = pneg %p234
      $region46: #{es_block_s2.1} parent=11 // pred_check_branch
        %364 = sbr.rel (%p362) target = $region48
      $region47: #{es_block_s2.1} parent=11 // pred_region
        _
      $region48: #{es_block_s2.1} parent=11 // pred_fallthru
        _
      // Predicated region
      $region49: #{es_block_s2.1} parent=11 // pred_check
        %p365 = pneg %p255
      $region50: #{es_block_s2.1} parent=11 // pred_check_branch
        %367 = sbr.rel (%p365) target = $region52
      $region51: #{es_block_s2.1} parent=11 // pred_region
        _
      $region52: #{es_block_s2.1} parent=11 // pred_fallthru
        _
      // Predicated region
      $region53: #{es_block_s2.1} parent=11 // pred_check
        %p368 = pneg %p276
      $region54: #{es_block_s2.1} parent=11 // pred_check_branch
        %370 = sbr.rel (%p368) target = $region56
      $region55: #{es_block_s2.1} parent=11 // pred_region
        _
      $region56: #{es_block_s2.1} parent=11 // pred_fallthru
        _
      // Predicated region
      $region57: #{es_block_s2.1} parent=11 // pred_check
        %p371 = pneg %p297
      $region58: #{es_block_s2.1} parent=11 // pred_check_branch
        %373 = sbr.rel (%p371) target = $region60
      $region59: #{es_block_s2.1} parent=11 // pred_region
        _
      $region60: #{es_block_s2.1} parent=11 // pred_fallthru
        _
    $region12: #{es_block_s2.1} parent=5 // pred_fallthru
      _
    %p374 = scmp.lt.s32.totalorder %s19, 2
    // Predicated region
    $region61: #{es_block_s2.1} parent=5 // pred_check
      %p375 = pneg %p374
    $region62: #{es_block_s2.1} parent=5 // pred_check_branch
      %377 = sbr.rel (%p375) target = $region64
    $region63: #{es_block_s2.1} parent=5 // pred_region
      // Predicated region
      $region65: #{es_block_s2.1} parent=63 // pred_check
        %p378 = pneg %p39
      $region66: #{es_block_s2.1} parent=63 // pred_check_branch
        %380 = sbr.rel (%p378) target = $region68
      $region67: #{es_block_s2.1} parent=63 // pred_region
        %p381 = scmp.lt.s32.totalorder %s19, 1
        %s382 = scalar_select %p381, %s19, 1
        %s383 = smul.addr %s382, 4
        %s384 = smul.addr %s383, 8
        %s385 = scalar_lea.vmem %s0, %s384
      $region68: #{es_block_s2.1} parent=63 // pred_fallthru
        _
    $region64: #{es_block_s2.1} parent=5 // pred_fallthru
      _
    %p386 = scmp.le.s32.totalorder 1, %s19
    %p387 = scmp.lt.s32.totalorder %s19, 3
    %p388 = pnand %p386, %p387
    %p389 = pneg %p388
    // Predicated region
    $region69: #{es_block_s2.1} parent=5 // pred_check
      _
    $region70: #{es_block_s2.1} parent=5 // pred_check_branch
      %391 = sbr.rel (%p388) target = $region72
    $region71: #{es_block_s2.1} parent=5 // pred_region
      %s392 = ssub.s32 %s19, 1
      %p393 = scmp.lt.s32.totalorder %s24, 1
      %s394 = scalar_select %p393, %s24, 1
      %s395 = smul.addr %s394, 4
      %s396 = smul.addr %s395, 8
      %s397 = scalar_lea.vmem %s0, %s396
      %p398 = pneg %p45
      %p399 = pneg %p42
      %p400 = pneg %p66
      %p401 = pneg %p63
      %p402 = pneg %p87
      %p403 = pneg %p84
      %p404 = pneg %p108
      %p405 = pneg %p105
      %p406 = pneg %p129
      %p407 = pneg %p126
      %p408 = pneg %p150
      %p409 = pneg %p147
      %p410 = pneg %p171
      %p411 = pneg %p168
      %p412 = pneg %p192
      %p413 = pneg %p189
      %p414 = pneg %p213
      %p415 = pneg %p210
      %p416 = pneg %p234
      %p417 = pneg %p231
      %p418 = pneg %p255
      %p419 = pneg %p252
      %p420 = pneg %p276
      %p421 = pneg %p273
      %p422 = pneg %p297
      %p423 = pneg %p294
      %p424 = pneg %p323
      %p425 = pneg %p320
      %p426 = scmp.lt.s32.totalorder %s24, 1
      %s427 = scalar_select %p426, %s24, 1
      %s428 = smul.addr %s427, 4
      %s429 = smul.addr %s428, 8
      %s430 = scalar_lea.vmem %s13, %s429
      %p431 = scmp.lt.s32.totalorder %s24, 1
      %s432 = scalar_select %p431, %s24, 1
      %s433 = smul.addr %s432, 4
      %s434 = smul.addr %s433, 8
      %s435 = scalar_lea.vmem %s0, %s434
      %p436 = scmp.lt.s32.totalorder %s24, 1
      %s437 = scalar_select %p436, %s24, 1
      %s438 = smul.addr %s437, 4
      %s439 = smul.addr %s438, 8
      %s440 = scalar_lea.vmem %s13, %s439
      %v442 = vld [vmem:[%s435] sm:$0xff]
      %v443 = vld [vmem:[%s435 + $0x8] sm:$0xff]
      %v444 = vld [vmem:[%s435 + $0x10] sm:$0xff]
      %v445 = vld [vmem:[%s435 + $0x18] sm:$0xff]
      %446 = vxpose.xlu0.b32.start [1/16] %v442, 128
      %447 = vxpose.xlu0.b32.cont [2/16] %v444, 128
      %448 = vxpose.xlu0.b32.cont [3/16] 0.0, 128
      %449 = vxpose.xlu0.b32.cont [4/16] 0.0, 128
      %450 = vxpose.xlu0.b32.cont [5/16] 0.0, 128
      %451 = vxpose.xlu0.b32.cont [6/16] 0.0, 128
      %452 = vxpose.xlu0.b32.cont [7/16] 0.0, 128
      %453 = vxpose.xlu0.b32.cont [8/16] 0.0, 128
      %454 = vxpose.xlu0.b32.cont [9/16] 0.0, 128
      %455 = vxpose.xlu0.b32.cont [10/16] 0.0, 128
      %456 = vxpose.xlu0.b32.cont [11/16] 0.0, 128
      %457 = vxpose.xlu0.b32.cont [12/16] 0.0, 128
      %458 = vxpose.xlu0.b32.cont [13/16] 0.0, 128
      %459 = vxpose.xlu0.b32.cont [14/16] 0.0, 128
      %460 = vxpose.xlu0.b32.cont [15/16] 0.0, 128
      %461 = vxpose.xlu0.b32.end [16/16] 0.0, 128
      %v462 = vpop.trf.xlu0
      %v463 = vpop.trf.xlu0
      %v464 = vpop.trf.xlu0
      %v465 = vpop.trf.xlu0
      %v466 = vpop.trf.xlu0
      %v467 = vpop.trf.xlu0
      %v468 = vpop.trf.xlu0
      %v469 = vpop.trf.xlu0
      %v470 = vpop.trf.xlu0
      %v471 = vpop.trf.xlu0
      %v472 = vpop.trf.xlu0
      %v473 = vpop.trf.xlu0
      %v474 = vpop.trf.xlu0
      %v475 = vpop.trf.xlu0
      %v476 = vpop.trf.xlu0
      %v477 = vpop.trf.xlu0
      %478 = vxpose.xlu0.b32.start [1/16] %v443, 128
      %479 = vxpose.xlu0.b32.cont [2/16] %v445, 128
      %480 = vxpose.xlu0.b32.cont [3/16] 0.0, 128
      %481 = vxpose.xlu0.b32.cont [4/16] 0.0, 128
      %482 = vxpose.xlu0.b32.cont [5/16] 0.0, 128
      %483 = vxpose.xlu0.b32.cont [6/16] 0.0, 128
      %484 = vxpose.xlu0.b32.cont [7/16] 0.0, 128
      %485 = vxpose.xlu0.b32.cont [8/16] 0.0, 128
      %486 = vxpose.xlu0.b32.cont [9/16] 0.0, 128
      %487 = vxpose.xlu0.b32.cont [10/16] 0.0, 128
      %488 = vxpose.xlu0.b32.cont [11/16] 0.0, 128
      %489 = vxpose.xlu0.b32.cont [12/16] 0.0, 128
      %490 = vxpose.xlu0.b32.cont [13/16] 0.0, 128
      %491 = vxpose.xlu0.b32.cont [14/16] 0.0, 128
      %492 = vxpose.xlu0.b32.cont [15/16] 0.0, 128
      %493 = vxpose.xlu0.b32.end [16/16] 0.0, 128
      %v494 = vpop.trf.xlu0
      %v495 = vpop.trf.xlu0
      %v496 = vpop.trf.xlu0
      %v497 = vpop.trf.xlu0
      %v498 = vpop.trf.xlu0
      %v499 = vpop.trf.xlu0
      %v500 = vpop.trf.xlu0
      %v501 = vpop.trf.xlu0
      %v502 = vpop.trf.xlu0
      %v503 = vpop.trf.xlu0
      %v504 = vpop.trf.xlu0
      %v505 = vpop.trf.xlu0
      %v506 = vpop.trf.xlu0
      %v507 = vpop.trf.xlu0
      %v508 = vpop.trf.xlu0
      %v509 = vpop.trf.xlu0
      %v510 = vpack.c.bf16 %v463, %v462
      %v511 = vpack.c.bf16 %v465, %v464
      %v512 = vpack.c.bf16 %v467, %v466
      %v513 = vpack.c.bf16 %v469, %v468
      %v514 = vpack.c.bf16 %v471, %v470
      %v515 = vpack.c.bf16 %v473, %v472
      %v516 = vpack.c.bf16 %v475, %v474
      %v517 = vpack.c.bf16 %v477, %v476
      %v518 = vpack.c.bf16 %v495, %v494
      %v519 = vpack.c.bf16 %v497, %v496
      %v520 = vpack.c.bf16 %v499, %v498
      %v521 = vpack.c.bf16 %v501, %v500
      %v522 = vpack.c.bf16 %v503, %v502
      %v523 = vpack.c.bf16 %v505, %v504
      %v524 = vpack.c.bf16 %v507, %v506
      %v525 = vpack.c.bf16 %v509, %v508
      %v526 = vld [vmem:[%s3] sm:$0xf]
      %v527 = vld [vmem:[%s3 + $0x4] sm:$0xf]
      %v528 = vld [vmem:[%s4] sm:$0x1]
      %v530 = vlaneseq
      %v531 = vshrl.u32 %v530, 7
      %v532 = vsub.s32 0, %v531
      %v533 = vrot.slane %v528, %v532
      %v537 = vunpack.c.l.b16 %v526
      %v538 = vunpack.c.l.b16 %v527
      %v539 = vpack.c.b16 %v538, %v537
      %vm541 = vcmask 130048
      %v543 = vsel %vm541, %v510, 0
      %v546 = vsel %vm541, %v511, 0
      %v549 = vsel %vm541, %v512, 0
      %v552 = vsel %vm541, %v513, 0
      %v555 = vsel %vm541, %v514, 0
      %v558 = vsel %vm541, %v515, 0
      %v561 = vsel %vm541, %v516, 0
      %v564 = vsel %vm541, %v517, 0
      %v567 = vsel %vm541, %v518, 0
      %v570 = vsel %vm541, %v519, 0
      %v573 = vsel %vm541, %v520, 0
      %v576 = vsel %vm541, %v521, 0
      %v579 = vsel %vm541, %v522, 0
      %v582 = vsel %vm541, %v523, 0
      %v585 = vsel %vm541, %v524, 0
      %v588 = vsel %vm541, %v525, 0
      %590 = vmatprep.subr.bf16.mxu0 0
      %591 = vmatpush1.bf16.msra.mxu0 %v539
      %592 = vmatprep.subr.bf16.mxu0 0
      %593 = vmatpush1.bf16.msra.mxu0 0
      %594 = vmatprep.subr.bf16.mxu0 0
      %595 = vmatpush1.bf16.msra.mxu0 0
      %596 = vmatprep.subr.bf16.mxu0 0
      %597 = vmatpush1.bf16.msra.mxu0 0
      %598 = vmatprep.subr.bf16.mxu0 0
      %599 = vmatpush1.bf16.msra.mxu0 0
      %600 = vmatprep.subr.bf16.mxu0 0
      %601 = vmatpush1.bf16.msra.mxu0 0
      %602 = vmatprep.subr.bf16.mxu0 0
      %603 = vmatpush1.bf16.msra.mxu0 0
      %604 = vmatprep.subr.bf16.mxu0 0
      %605 = vmatpush1.bf16.msra.mxu0 0
      %606 = vmatprep.subr.bf16.mxu0 0
      %607 = vmatpush1.bf16.msra.mxu0 0
      %608 = vmatprep.subr.bf16.mxu0 0
      %609 = vmatpush1.bf16.msra.mxu0 0
      %610 = vmatprep.subr.bf16.mxu0 0
      %611 = vmatpush1.bf16.msra.mxu0 0
      %612 = vmatprep.subr.bf16.mxu0 0
      %613 = vmatpush1.bf16.msra.mxu0 0
      %614 = vmatprep.subr.bf16.mxu0 0
      %615 = vmatpush1.bf16.msra.mxu0 0
      %616 = vmatprep.subr.bf16.mxu0 0
      %617 = vmatpush1.bf16.msra.mxu0 0
      %618 = vmatprep.subr.bf16.mxu0 0
      %619 = vmatpush1.bf16.msra.mxu0 0
      %620 = vmatprep.subr.bf16.mxu0 0
      %621 = vmatpush1.bf16.msra.mxu0 0
      %622 = vmatprep.mubr.bf16.mxu0 0
      %623 = vmatmul.mubr.bf16.gmra.mrb[0].mxu0 %v543
      %v624 = vpop.f32.mrb[0].mxu0
      %v625 = vadd.f32 %v533, %v624
      %v626 = vpop.f32.mrb[0].mxu0
      %v627 = vpop.f32.mrb[0].mxu0
      %v628 = vadd.f32 %v533, %v627
      %v629 = vpop.f32.mrb[0].mxu0
      %630 = vmatprep.mubr.bf16.mxu0 0
      %631 = vmatmul.mubr.bf16.gmra.mrb[0].mxu0 %v546
      %v632 = vpop.f32.mrb[0].mxu0
      %v633 = vadd.f32 %v533, %v632
      %v634 = vpop.f32.mrb[0].mxu0
      %v635 = vpop.f32.mrb[0].mxu0
      %v636 = vadd.f32 %v533, %v635
      %v637 = vpop.f32.mrb[0].mxu0
      %638 = vmatprep.mubr.bf16.mxu0 0
      %639 = vmatmul.mubr.bf16.gmra.mrb[0].mxu0 %v549
      %v640 = vpop.f32.mrb[0].mxu0
      %v641 = vadd.f32 %v533, %v640
      %v642 = vpop.f32.mrb[0].mxu0
      %v643 = vpop.f32.mrb[0].mxu0
      %v644 = vadd.f32 %v533, %v643
      %v645 = vpop.f32.mrb[0].mxu0
      %646 = vmatprep.mubr.bf16.mxu0 0
      %647 = vmatmul.mubr.bf16.gmra.mrb[0].mxu0 %v552
      %v648 = vpop.f32.mrb[0].mxu0
      %v649 = vadd.f32 %v533, %v648
      %v650 = vpop.f32.mrb[0].mxu0
      %v651 = vpop.f32.mrb[0].mxu0
      %v652 = vadd.f32 %v533, %v651
      %v653 = vpop.f32.mrb[0].mxu0
      %654 = vmatprep.mubr.bf16.mxu0 0
      %655 = vmatmul.mubr.bf16.gmra.mrb[0].mxu0 %v555
      %v656 = vpop.f32.mrb[0].mxu0
      %v657 = vadd.f32 %v533, %v656
      %v658 = vpop.f32.mrb[0].mxu0
      %v659 = vpop.f32.mrb[0].mxu0
      %v660 = vadd.f32 %v533, %v659
      %v661 = vpop.f32.mrb[0].mxu0
      %662 = vmatprep.mubr.bf16.mxu0 0
      %663 = vmatmul.mubr.bf16.gmra.mrb[0].mxu0 %v558
      %v664 = vpop.f32.mrb[0].mxu0
      %v665 = vadd.f32 %v533, %v664
      %v666 = vpop.f32.mrb[0].mxu0
      %v667 = vpop.f32.mrb[0].mxu0
      %v668 = vadd.f32 %v533, %v667
      %v669 = vpop.f32.mrb[0].mxu0
      %670 = vmatprep.mubr.bf16.mxu0 0
      %671 = vmatmul.mubr.bf16.gmra.mrb[0].mxu0 %v561
      %v672 = vpop.f32.mrb[0].mxu0
      %v673 = vadd.f32 %v533, %v672
      %v674 = vpop.f32.mrb[0].mxu0
      %v675 = vpop.f32.mrb[0].mxu0
      %v676 = vadd.f32 %v533, %v675
      %v677 = vpop.f32.mrb[0].mxu0
      %678 = vmatprep.mubr.bf16.mxu0 0
      %679 = vmatmul.mubr.bf16.gmra.mrb[0].mxu0 %v564
      %v680 = vpop.f32.mrb[0].mxu0
      %v681 = vadd.f32 %v533, %v680
      %v682 = vpop.f32.mrb[0].mxu0
      %v683 = vpop.f32.mrb[0].mxu0
      %v684 = vadd.f32 %v533, %v683
      %v685 = vpop.f32.mrb[0].mxu0
      %686 = vmatprep.mubr.bf16.mxu0 0
      %687 = vmatmul.mubr.bf16.gmra.mrb[0].mxu0 %v567
      %v688 = vpop.f32.mrb[0].mxu0
      %v689 = vadd.f32 %v533, %v688
      %v690 = vpop.f32.mrb[0].mxu0
      %v691 = vpop.f32.mrb[0].mxu0
      %v692 = vadd.f32 %v533, %v691
      %v693 = vpop.f32.mrb[0].mxu0
      %694 = vmatprep.mubr.bf16.mxu0 0
      %695 = vmatmul.mubr.bf16.gmra.mrb[0].mxu0 %v570
      %v696 = vpop.f32.mrb[0].mxu0
      %v697 = vadd.f32 %v533, %v696
      %v698 = vpop.f32.mrb[0].mxu0
      %v699 = vpop.f32.mrb[0].mxu0
      %v700 = vadd.f32 %v533, %v699
      %v701 = vpop.f32.mrb[0].mxu0
      %702 = vmatprep.mubr.bf16.mxu0 0
      %703 = vmatmul.mubr.bf16.gmra.mrb[0].mxu0 %v573
      %v704 = vpop.f32.mrb[0].mxu0
      %v705 = vadd.f32 %v533, %v704
      %v706 = vpop.f32.mrb[0].mxu0
      %v707 = vpop.f32.mrb[0].mxu0
      %v708 = vadd.f32 %v533, %v707
      %v709 = vpop.f32.mrb[0].mxu0
      %710 = vmatprep.mubr.bf16.mxu0 0
      %711 = vmatmul.mubr.bf16.gmra.mrb[0].mxu0 %v576
      %v712 = vpop.f32.mrb[0].mxu0
      %v713 = vadd.f32 %v533, %v712
      %v714 = vpop.f32.mrb[0].mxu0
      %v715 = vpop.f32.mrb[0].mxu0
      %v716 = vadd.f32 %v533, %v715
      %v717 = vpop.f32.mrb[0].mxu0
      %718 = vmatprep.mubr.bf16.mxu0 0
      %719 = vmatmul.mubr.bf16.gmra.mrb[0].mxu0 %v579
      %v720 = vpop.f32.mrb[0].mxu0
      %v721 = vadd.f32 %v533, %v720
      %v722 = vpop.f32.mrb[0].mxu0
      %v723 = vpop.f32.mrb[0].mxu0
      %v724 = vadd.f32 %v533, %v723
      %v725 = vpop.f32.mrb[0].mxu0
      %726 = vmatprep.mubr.bf16.mxu0 0
      %727 = vmatmul.mubr.bf16.gmra.mrb[0].mxu0 %v582
      %v728 = vpop.f32.mrb[0].mxu0
      %v729 = vadd.f32 %v533, %v728
      %v730 = vpop.f32.mrb[0].mxu0
      %v731 = vpop.f32.mrb[0].mxu0
      %v732 = vadd.f32 %v533, %v731
      %v733 = vpop.f32.mrb[0].mxu0
      %734 = vmatprep.mubr.bf16.mxu0 0
      %735 = vmatmul.mubr.bf16.gmra.mrb[0].mxu0 %v585
      %v736 = vpop.f32.mrb[0].mxu0
      %v737 = vadd.f32 %v533, %v736
      %v738 = vpop.f32.mrb[0].mxu0
      %v739 = vpop.f32.mrb[0].mxu0
      %v740 = vadd.f32 %v533, %v739
      %v741 = vpop.f32.mrb[0].mxu0
      %742 = vmatprep.mubr.bf16.mxu0 0
      %743 = vmatmul.mubr.bf16.gmra.mrb[0].mxu0 %v588
      %v744 = vpop.f32.mrb[0].mxu0
      %v745 = vadd.f32 %v533, %v744
      %v746 = vpop.f32.mrb[0].mxu0
      %v747 = vpop.f32.mrb[0].mxu0
      %v748 = vadd.f32 %v533, %v747
      %v749 = vpop.f32.mrb[0].mxu0
      %750 = vdwg.mxu0
      %v751 = vmax.f32 %v625, 0.0
      %v752 = vmax.f32 %v628, 0.0
      %v753 = vmax.f32 %v633, 0.0
      %v754 = vmax.f32 %v636, 0.0
      %v755 = vmax.f32 %v641, 0.0
      %v756 = vmax.f32 %v644, 0.0
      %v757 = vmax.f32 %v649, 0.0
      %v758 = vmax.f32 %v652, 0.0
      %v759 = vmax.f32 %v657, 0.0
      %v760 = vmax.f32 %v660, 0.0
      %v761 = vmax.f32 %v665, 0.0
      %v762 = vmax.f32 %v668, 0.0
      %v763 = vmax.f32 %v673, 0.0
      %v764 = vmax.f32 %v676, 0.0
      %v765 = vmax.f32 %v681, 0.0
      %v766 = vmax.f32 %v684, 0.0
      %v767 = vmax.f32 %v689, 0.0
      %v768 = vmax.f32 %v692, 0.0
      %v769 = vmax.f32 %v697, 0.0
      %v770 = vmax.f32 %v700, 0.0
      %v771 = vmax.f32 %v705, 0.0
      %v772 = vmax.f32 %v708, 0.0
      %v773 = vmax.f32 %v713, 0.0
      %v774 = vmax.f32 %v716, 0.0
      %v775 = vmax.f32 %v721, 0.0
      %v776 = vmax.f32 %v724, 0.0
      %v777 = vmax.f32 %v729, 0.0
      %v778 = vmax.f32 %v732, 0.0
      %v779 = vmax.f32 %v737, 0.0
      %v780 = vmax.f32 %v740, 0.0
      %v781 = vmax.f32 %v745, 0.0
      %v782 = vmax.f32 %v748, 0.0
      %v783 = vpack.c.bf16 %v752, %v751
      %v784 = vpack.c.bf16 %v754, %v753
      %v785 = vpack.c.bf16 %v756, %v755
      %v786 = vpack.c.bf16 %v758, %v757
      %v787 = vpack.c.bf16 %v760, %v759
      %v788 = vpack.c.bf16 %v762, %v761
      %v789 = vpack.c.bf16 %v764, %v763
      %v790 = vpack.c.bf16 %v766, %v765
      %v791 = vpack.c.bf16 %v768, %v767
      %v792 = vpack.c.bf16 %v770, %v769
      %v793 = vpack.c.bf16 %v772, %v771
      %v794 = vpack.c.bf16 %v774, %v773
      %v795 = vpack.c.bf16 %v776, %v775
      %v796 = vpack.c.bf16 %v778, %v777
      %v797 = vpack.c.bf16 %v780, %v779
      %v798 = vpack.c.bf16 %v782, %v781
      %815 = vrot.lane.b32.xlu0 %v510, 16
      %v816 = vpop.permute.xlu0 %815
      %817 = vrot.lane.b32.xlu0 %v511, 16
      %v818 = vpop.permute.xlu0 %817
      %819 = vrot.lane.b32.xlu0 %v512, 16
      %v820 = vpop.permute.xlu0 %819
      %821 = vrot.lane.b32.xlu0 %v513, 16
      %v822 = vpop.permute.xlu0 %821
      %823 = vrot.lane.b32.xlu0 %v514, 16
      %v824 = vpop.permute.xlu0 %823
      %825 = vrot.lane.b32.xlu0 %v515, 16
      %v826 = vpop.permute.xlu0 %825
      %827 = vrot.lane.b32.xlu0 %v516, 16
      %v828 = vpop.permute.xlu0 %827
      %829 = vrot.lane.b32.xlu0 %v517, 16
      %v830 = vpop.permute.xlu0 %829
      %831 = vrot.lane.b32.xlu0 %v518, 16
      %v832 = vpop.permute.xlu0 %831
      %833 = vrot.lane.b32.xlu0 %v519, 16
      %v834 = vpop.permute.xlu0 %833
      %835 = vrot.lane.b32.xlu0 %v520, 16
      %v836 = vpop.permute.xlu0 %835
      %837 = vrot.lane.b32.xlu0 %v521, 16
      %v838 = vpop.permute.xlu0 %837
      %839 = vrot.lane.b32.xlu0 %v522, 16
      %v840 = vpop.permute.xlu0 %839
      %841 = vrot.lane.b32.xlu0 %v523, 16
      %v842 = vpop.permute.xlu0 %841
      %843 = vrot.lane.b32.xlu0 %v524, 16
      %v844 = vpop.permute.xlu0 %843
      %845 = vrot.lane.b32.xlu0 %v525, 16
      %v846 = vpop.permute.xlu0 %845
      %v849 = vsel %vm541, %v783, %v816
      %v853 = vsel %vm541, %v784, %v818
      %v857 = vsel %vm541, %v785, %v820
      %v861 = vsel %vm541, %v786, %v822
      %v865 = vsel %vm541, %v787, %v824
      %v869 = vsel %vm541, %v788, %v826
      %v873 = vsel %vm541, %v789, %v828
      %v877 = vsel %vm541, %v790, %v830
      %v881 = vsel %vm541, %v791, %v832
      %v885 = vsel %vm541, %v792, %v834
      %v889 = vsel %vm541, %v793, %v836
      %v893 = vsel %vm541, %v794, %v838
      %v897 = vsel %vm541, %v795, %v840
      %v901 = vsel %vm541, %v796, %v842
      %v905 = vsel %vm541, %v797, %v844
      %v909 = vsel %vm541, %v798, %v846
      %v911 = vld [vmem:[%s1] sm:$0xff]
      %v912 = vld [vmem:[%s1 + $0x8] sm:$0xff]
      %v913 = vld [vmem:[%s1 + $0x10] sm:$0xff]
      %v914 = vld [vmem:[%s1 + $0x18] sm:$0xff]
      %v915 = vld [vmem:[%s1 + $0x20] sm:$0xff]
      %v916 = vld [vmem:[%s1 + $0x28] sm:$0xff]
      %v917 = vld [vmem:[%s1 + $0x30] sm:$0xff]
      %v918 = vld [vmem:[%s1 + $0x38] sm:$0xff]
      %v919 = vld [vmem:[%s1 + $0x40] sm:$0xff]
      %v920 = vld [vmem:[%s1 + $0x48] sm:$0xff]
      %v921 = vld [vmem:[%s1 + $0x50] sm:$0xff]
      %v922 = vld [vmem:[%s1 + $0x58] sm:$0xff]
      %v923 = vld [vmem:[%s1 + $0x60] sm:$0xff]
      %v924 = vld [vmem:[%s1 + $0x68] sm:$0xff]
      %v925 = vld [vmem:[%s1 + $0x70] sm:$0xff]
      %v926 = vld [vmem:[%s1 + $0x78] sm:$0xff]
      %v927 = vld [vmem:[%s1 + $0x80] sm:$0xff]
      %v928 = vld [vmem:[%s1 + $0x88] sm:$0xff]
      %v929 = vld [vmem:[%s1 + $0x90] sm:$0xff]
      %v930 = vld [vmem:[%s1 + $0x98] sm:$0xff]
      %v931 = vld [vmem:[%s1 + $0xa0] sm:$0xff]
      %v932 = vld [vmem:[%s1 + $0xa8] sm:$0xff]
      %v933 = vld [vmem:[%s1 + $0xb0] sm:$0xff]
      %v934 = vld [vmem:[%s1 + $0xb8] sm:$0xff]
      %v935 = vld [vmem:[%s1 + $0xc0] sm:$0xff]
      %v936 = vld [vmem:[%s1 + $0xc8] sm:$0xff]
      %v937 = vld [vmem:[%s1 + $0xd0] sm:$0xff]
      %v938 = vld [vmem:[%s1 + $0xd8] sm:$0xff]
      %v939 = vld [vmem:[%s1 + $0xe0] sm:$0xff]
      %v940 = vld [vmem:[%s1 + $0xe8] sm:$0xff]
      %v941 = vld [vmem:[%s1 + $0xf0] sm:$0xff]
      %v942 = vld [vmem:[%s1 + $0xf8] sm:$0xff]
      %v943 = vld [vmem:[%s1 + $0x100] sm:$0xff]
      %v944 = vld [vmem:[%s1 + $0x108] sm:$0xff]
      %v945 = vld [vmem:[%s1 + $0x110] sm:$0xff]
      %v946 = vld [vmem:[%s1 + $0x118] sm:$0xff]
      %v947 = vld [vmem:[%s1 + $0x120] sm:$0xff]
      %v948 = vld [vmem:[%s1 + $0x128] sm:$0xff]
      %v949 = vld [vmem:[%s1 + $0x130] sm:$0xff]
      %v950 = vld [vmem:[%s1 + $0x138] sm:$0xff]
      %v951 = vld [vmem:[%s1 + $0x140] sm:$0xff]
      %v952 = vld [vmem:[%s1 + $0x148] sm:$0xff]
      %v953 = vld [vmem:[%s1 + $0x150] sm:$0xff]
      %v954 = vld [vmem:[%s1 + $0x158] sm:$0xff]
      %v955 = vld [vmem:[%s1 + $0x160] sm:$0xff]
      %v956 = vld [vmem:[%s1 + $0x168] sm:$0xff]
      %v957 = vld [vmem:[%s1 + $0x170] sm:$0xff]
      %v958 = vld [vmem:[%s1 + $0x178] sm:$0xff]
      %v959 = vld [vmem:[%s1 + $0x180] sm:$0xff]
      %v960 = vld [vmem:[%s1 + $0x188] sm:$0xff]
      %v961 = vld [vmem:[%s1 + $0x190] sm:$0xff]
      %v962 = vld [vmem:[%s1 + $0x198] sm:$0xff]
      %v963 = vld [vmem:[%s1 + $0x1a0] sm:$0xff]
      %v964 = vld [vmem:[%s1 + $0x1a8] sm:$0xff]
      %v965 = vld [vmem:[%s1 + $0x1b0] sm:$0xff]
      %v966 = vld [vmem:[%s1 + $0x1b8] sm:$0xff]
      %v967 = vld [vmem:[%s1 + $0x1c0] sm:$0xff]
      %v968 = vld [vmem:[%s1 + $0x1c8] sm:$0xff]
      %v969 = vld [vmem:[%s1 + $0x1d0] sm:$0xff]
      %v970 = vld [vmem:[%s1 + $0x1d8] sm:$0xff]
      %v971 = vld [vmem:[%s1 + $0x1e0] sm:$0xff]
      %v972 = vld [vmem:[%s1 + $0x1e8] sm:$0xff]
      %v973 = vld [vmem:[%s1 + $0x1f0] sm:$0xff]
      %v974 = vld [vmem:[%s1 + $0x1f8] sm:$0xff]
      %v975 = vld [vmem:[%s1 + $0x200] sm:$0xff]
      %v976 = vld [vmem:[%s1 + $0x208] sm:$0xff]
      %v977 = vld [vmem:[%s1 + $0x210] sm:$0xff]
      %v978 = vld [vmem:[%s1 + $0x218] sm:$0xff]
      %v979 = vld [vmem:[%s1 + $0x220] sm:$0xff]
      %v980 = vld [vmem:[%s1 + $0x228] sm:$0xff]
      %v981 = vld [vmem:[%s1 + $0x230] sm:$0xff]
      %v982 = vld [vmem:[%s1 + $0x238] sm:$0xff]
      %v1055 = vunpack.c.l.b16 %v911
      %v1056 = vunpack.c.h.b16 %v911
      %v1057 = vunpack.c.l.b16 %v912
      %v1058 = vunpack.c.h.b16 %v912
      %v1059 = vunpack.c.l.b16 %v913
      %v1060 = vunpack.c.h.b16 %v913
      %v1061 = vunpack.c.l.b16 %v914
      %v1062 = vunpack.c.h.b16 %v914
      %v1063 = vunpack.c.l.b16 %v915
      %v1064 = vunpack.c.h.b16 %v915
      %v1065 = vunpack.c.l.b16 %v916
      %v1066 = vunpack.c.h.b16 %v916
      %v1067 = vunpack.c.l.b16 %v917
      %v1068 = vunpack.c.h.b16 %v917
      %v1069 = vunpack.c.l.b16 %v918
      %v1070 = vunpack.c.h.b16 %v918
      %v1071 = vunpack.c.l.b16 %v919
      %v1072 = vunpack.c.h.b16 %v919
      %v1073 = vunpack.c.l.b16 %v920
      %v1074 = vunpack.c.h.b16 %v920
      %v1075 = vunpack.c.l.b16 %v921
      %v1076 = vunpack.c.h.b16 %v921
      %v1077 = vunpack.c.l.b16 %v922
      %v1078 = vunpack.c.h.b16 %v922
      %v1079 = vunpack.c.l.b16 %v923
      %v1080 = vunpack.c.h.b16 %v923
      %v1081 = vunpack.c.l.b16 %v924
      %v1082 = vunpack.c.h.b16 %v924
      %v1083 = vunpack.c.l.b16 %v925
      %v1084 = vunpack.c.h.b16 %v925
      %v1085 = vunpack.c.l.b16 %v926
      %v1086 = vunpack.c.h.b16 %v926
      %v1087 = vunpack.c.l.b16 %v927
      %v1088 = vunpack.c.h.b16 %v927
      %v1089 = vunpack.c.l.b16 %v928
      %v1090 = vunpack.c.h.b16 %v928
      %v1091 = vunpack.c.l.b16 %v929
      %v1092 = vunpack.c.h.b16 %v929
      %v1093 = vunpack.c.l.b16 %v930
      %v1094 = vunpack.c.h.b16 %v930
      %v1095 = vunpack.c.l.b16 %v931
      %v1096 = vunpack.c.h.b16 %v931
      %v1097 = vunpack.c.l.b16 %v932
      %v1098 = vunpack.c.h.b16 %v932
      %v1099 = vunpack.c.l.b16 %v933
      %v1100 = vunpack.c.h.b16 %v933
      %v1101 = vunpack.c.l.b16 %v934
      %v1102 = vunpack.c.h.b16 %v934
      %v1103 = vunpack.c.l.b16 %v935
      %v1104 = vunpack.c.h.b16 %v935
      %v1105 = vunpack.c.l.b16 %v936
      %v1106 = vunpack.c.h.b16 %v936
      %v1107 = vunpack.c.l.b16 %v937
      %v1108 = vunpack.c.h.b16 %v937
      %v1109 = vunpack.c.l.b16 %v938
      %v1110 = vunpack.c.h.b16 %v938
      %v1111 = vunpack.c.l.b16 %v939
      %v1112 = vunpack.c.h.b16 %v939
      %v1113 = vunpack.c.l.b16 %v940
      %v1114 = vunpack.c.h.b16 %v940
      %v1115 = vunpack.c.l.b16 %v941
      %v1116 = vunpack.c.h.b16 %v941
      %v1117 = vunpack.c.l.b16 %v942
      %v1118 = vunpack.c.h.b16 %v942
      %v1119 = vunpack.c.l.b16 %v943
      %v1120 = vunpack.c.h.b16 %v943
      %v1121 = vunpack.c.l.b16 %v944
      %v1122 = vunpack.c.h.b16 %v944
      %v1123 = vunpack.c.l.b16 %v945
      %v1124 = vunpack.c.h.b16 %v945
      %v1125 = vunpack.c.l.b16 %v946
      %v1126 = vunpack.c.h.b16 %v946
      %v1127 = vunpack.c.l.b16 %v947
      %v1128 = vunpack.c.h.b16 %v947
      %v1129 = vunpack.c.l.b16 %v948
      %v1130 = vunpack.c.h.b16 %v948
      %v1131 = vunpack.c.l.b16 %v949
      %v1132 = vunpack.c.h.b16 %v949
      %v1133 = vunpack.c.l.b16 %v950
      %v1134 = vunpack.c.h.b16 %v950
      %v1135 = vunpack.c.l.b16 %v951
      %v1136 = vunpack.c.h.b16 %v951
      %v1137 = vunpack.c.l.b16 %v952
      %v1138 = vunpack.c.h.b16 %v952
      %v1139 = vunpack.c.l.b16 %v953
      %v1140 = vunpack.c.h.b16 %v953
      %v1141 = vunpack.c.l.b16 %v954
      %v1142 = vunpack.c.h.b16 %v954
      %v1143 = vunpack.c.l.b16 %v955
      %v1144 = vunpack.c.h.b16 %v955
      %v1145 = vunpack.c.l.b16 %v956
      %v1146 = vunpack.c.h.b16 %v956
      %v1147 = vunpack.c.l.b16 %v957
      %v1148 = vunpack.c.h.b16 %v957
      %v1149 = vunpack.c.l.b16 %v958
      %v1150 = vunpack.c.h.b16 %v958
      %v1151 = vunpack.c.l.b16 %v959
      %v1152 = vunpack.c.h.b16 %v959
      %v1153 = vunpack.c.l.b16 %v960
      %v1154 = vunpack.c.h.b16 %v960
      %v1155 = vunpack.c.l.b16 %v961
      %v1156 = vunpack.c.h.b16 %v961
      %v1157 = vunpack.c.l.b16 %v962
      %v1158 = vunpack.c.h.b16 %v962
      %v1159 = vunpack.c.l.b16 %v963
      %v1160 = vunpack.c.h.b16 %v963
      %v1161 = vunpack.c.l.b16 %v964
      %v1162 = vunpack.c.h.b16 %v964
      %v1163 = vunpack.c.l.b16 %v965
      %v1164 = vunpack.c.h.b16 %v965
      %v1165 = vunpack.c.l.b16 %v966
      %v1166 = vunpack.c.h.b16 %v966
      %v1167 = vunpack.c.l.b16 %v967
      %v1168 = vunpack.c.h.b16 %v967
      %v1169 = vunpack.c.l.b16 %v968
      %v1170 = vunpack.c.h.b16 %v968
      %v1171 = vunpack.c.l.b16 %v969
      %v1172 = vunpack.c.h.b16 %v969
      %v1173 = vunpack.c.l.b16 %v970
      %v1174 = vunpack.c.h.b16 %v970
      %v1175 = vunpack.c.l.b16 %v971
      %v1176 = vunpack.c.h.b16 %v971
      %v1177 = vunpack.c.l.b16 %v972
      %v1178 = vunpack.c.h.b16 %v972
      %v1179 = vunpack.c.l.b16 %v973
      %v1180 = vunpack.c.h.b16 %v973
      %v1181 = vunpack.c.l.b16 %v974
      %v1182 = vunpack.c.h.b16 %v974
      %v1183 = vunpack.c.l.b16 %v975
      %v1184 = vunpack.c.h.b16 %v975
      %v1185 = vunpack.c.l.b16 %v976
      %v1186 = vunpack.c.h.b16 %v976
      %v1187 = vunpack.c.l.b16 %v977
      %v1188 = vunpack.c.h.b16 %v977
      %v1189 = vunpack.c.l.b16 %v978
      %v1190 = vunpack.c.h.b16 %v978
      %v1191 = vunpack.c.l.b16 %v979
      %v1192 = vunpack.c.h.b16 %v979
      %v1193 = vunpack.c.l.b16 %v980
      %v1194 = vunpack.c.h.b16 %v980
      %v1195 = vunpack.c.l.b16 %v981
      %v1196 = vunpack.c.h.b16 %v981
      %v1197 = vunpack.c.l.b16 %v982
      %v1198 = vunpack.c.h.b16 %v982
      %v1199 = vpack.c.b16 %v1057, %v1055
      %v1200 = vpack.c.b16 %v1058, %v1056
      %v1201 = vpack.c.b16 %v1061, %v1059
      %v1202 = vpack.c.b16 %v1062, %v1060
      %v1203 = vpack.c.b16 %v1065, %v1063
      %v1204 = vpack.c.b16 %v1066, %v1064
      %v1205 = vpack.c.b16 %v1069, %v1067
      %v1206 = vpack.c.b16 %v1070, %v1068
      %v1207 = vpack.c.b16 %v1073, %v1071
      %v1208 = vpack.c.b16 %v1074, %v1072
      %v1209 = vpack.c.b16 %v1077, %v1075
      %v1210 = vpack.c.b16 %v1078, %v1076
      %v1211 = vpack.c.b16 %v1081, %v1079
      %v1212 = vpack.c.b16 %v1082, %v1080
      %v1213 = vpack.c.b16 %v1085, %v1083
      %v1214 = vpack.c.b16 %v1086, %v1084
      %v1215 = vpack.c.b16 %v1089, %v1087
      %v1216 = vpack.c.b16 %v1090, %v1088
      %v1217 = vpack.c.b16 %v1093, %v1091
      %v1218 = vpack.c.b16 %v1094, %v1092
      %v1219 = vpack.c.b16 %v1097, %v1095
      %v1220 = vpack.c.b16 %v1098, %v1096
      %v1221 = vpack.c.b16 %v1101, %v1099
      %v1222 = vpack.c.b16 %v1102, %v1100
      %v1223 = vpack.c.b16 %v1105, %v1103
      %v1224 = vpack.c.b16 %v1106, %v1104
      %v1225 = vpack.c.b16 %v1109, %v1107
      %v1226 = vpack.c.b16 %v1110, %v1108
      %v1227 = vpack.c.b16 %v1113, %v1111
      %v1228 = vpack.c.b16 %v1114, %v1112
      %v1229 = vpack.c.b16 %v1117, %v1115
      %v1230 = vpack.c.b16 %v1118, %v1116
      %v1231 = vpack.c.b16 %v1121, %v1119
      %v1232 = vpack.c.b16 %v1122, %v1120
      %v1233 = vpack.c.b16 %v1125, %v1123
      %v1234 = vpack.c.b16 %v1126, %v1124
      %v1235 = vpack.c.b16 %v1129, %v1127
      %v1236 = vpack.c.b16 %v1130, %v1128
      %v1237 = vpack.c.b16 %v1133, %v1131
      %v1238 = vpack.c.b16 %v1134, %v1132
      %v1239 = vpack.c.b16 %v1137, %v1135
      %v1240 = vpack.c.b16 %v1138, %v1136
      %v1241 = vpack.c.b16 %v1141, %v1139
      %v1242 = vpack.c.b16 %v1142, %v1140
      %v1243 = vpack.c.b16 %v1145, %v1143
      %v1244 = vpack.c.b16 %v1146, %v1144
      %v1245 = vpack.c.b16 %v1149, %v1147
      %v1246 = vpack.c.b16 %v1150, %v1148
      %v1247 = vpack.c.b16 %v1153, %v1151
      %v1248 = vpack.c.b16 %v1154, %v1152
      %v1249 = vpack.c.b16 %v1157, %v1155
      %v1250 = vpack.c.b16 %v1158, %v1156
      %v1251 = vpack.c.b16 %v1161, %v1159
      %v1252 = vpack.c.b16 %v1162, %v1160
      %v1253 = vpack.c.b16 %v1165, %v1163
      %v1254 = vpack.c.b16 %v1166, %v1164
      %v1255 = vpack.c.b16 %v1169, %v1167
      %v1256 = vpack.c.b16 %v1170, %v1168
      %v1257 = vpack.c.b16 %v1173, %v1171
      %v1258 = vpack.c.b16 %v1174, %v1172
      %v1259 = vpack.c.b16 %v1177, %v1175
      %v1260 = vpack.c.b16 %v1178, %v1176
      %v1261 = vpack.c.b16 %v1181, %v1179
      %v1262 = vpack.c.b16 %v1182, %v1180
      %v1263 = vpack.c.b16 %v1185, %v1183
      %v1264 = vpack.c.b16 %v1186, %v1184
      %v1265 = vpack.c.b16 %v1189, %v1187
      %v1266 = vpack.c.b16 %v1190, %v1188
      %v1267 = vpack.c.b16 %v1193, %v1191
      %v1268 = vpack.c.b16 %v1194, %v1192
      %v1269 = vpack.c.b16 %v1197, %v1195
      %v1270 = vpack.c.b16 %v1198, %v1196
      %1343 = vmatprep.subr.bf16.mxu0 0
      %1344 = vmatpush1.bf16.msra.mxu0 %v849
      %1345 = vmatprep.subr.bf16.mxu0 0
      %1346 = vmatpush1.bf16.msra.mxu0 %v853
      %1347 = vmatprep.subr.bf16.mxu0 0
      %1348 = vmatpush1.bf16.msra.mxu0 %v857
      %1349 = vmatprep.subr.bf16.mxu0 0
      %1350 = vmatpush1.bf16.msra.mxu0 %v861
      %1351 = vmatprep.subr.bf16.mxu0 0
      %1352 = vmatpush1.bf16.msra.mxu0 %v865
      %1353 = vmatprep.subr.bf16.mxu0 0
      %1354 = vmatpush1.bf16.msra.mxu0 %v869
      %1355 = vmatprep.subr.bf16.mxu0 0
      %1356 = vmatpush1.bf16.msra.mxu0 %v873
      %1357 = vmatprep.subr.bf16.mxu0 0
      %1358 = vmatpush1.bf16.msra.mxu0 %v877
      %1359 = vmatprep.subr.bf16.mxu0 0
      %1360 = vmatpush1.bf16.msra.mxu0 %v881
      %1361 = vmatprep.subr.bf16.mxu0 0
      %1362 = vmatpush1.bf16.msra.mxu0 %v885
      %1363 = vmatprep.subr.bf16.mxu0 0
      %1364 = vmatpush1.bf16.msra.mxu0 %v889
      %1365 = vmatprep.subr.bf16.mxu0 0
      %1366 = vmatpush1.bf16.msra.mxu0 %v893
      %1367 = vmatprep.subr.bf16.mxu0 0
      %1368 = vmatpush1.bf16.msra.mxu0 %v897
      %1369 = vmatprep.subr.bf16.mxu0 0
      %1370 = vmatpush1.bf16.msra.mxu0 %v901
      %1371 = vmatprep.subr.bf16.mxu0 0
      %1372 = vmatpush1.bf16.msra.mxu0 %v905
      %1373 = vmatprep.subr.bf16.mxu0 0
      %1374 = vmatpush1.bf16.msra.mxu0 %v909
      %1375 = vmatprep.mubr.bf16.mxu0 %v1200
      %1376 = vmatmul.mubr.bf16.gmra.mrb[0].mxu0 %v1199
      %v1377 = vpop.f32.mrb[0].mxu0
      %v1378 = vadd.f32 0.0, %v1377
      %v1379 = vpop.f32.mrb[0].mxu0
      %v1380 = vpop.f32.mrb[0].mxu0
      %v1381 = vadd.f32 0.0, %v1380
      %v1382 = vpop.f32.mrb[0].mxu0
      %1383 = vmatprep.mubr.bf16.mxu0 %v1202
      %1384 = vmatmul.mubr.bf16.gmra.mrb[0].mxu0 %v1201
      %v1385 = vpop.f32.mrb[0].mxu0
      %v1386 = vadd.f32 0.0, %v1385
      %v1387 = vpop.f32.mrb[0].mxu0
      %v1388 = vpop.f32.mrb[0].mxu0
      %v1389 = vadd.f32 0.0, %v1388
      %v1390 = vpop.f32.mrb[0].mxu0
      %1391 = vmatprep.mubr.bf16.mxu0 %v1204
      %1392 = vmatmul.mubr.bf16.gmra.mrb[0].mxu0 %v1203
      %v1393 = vpop.f32.mrb[0].mxu0
      %v1394 = vadd.f32 0.0, %v1393
      %v1395 = vpop.f32.mrb[0].mxu0
      %v1396 = vpop.f32.mrb[0].mxu0
      %v1397 = vadd.f32 0.0, %v1396
      %v1398 = vpop.f32.mrb[0].mxu0
      %1399 = vmatprep.mubr.bf16.mxu0 %v1206
      %1400 = vmatmul.mubr.bf16.gmra.mrb[0].mxu0 %v1205
      %v1401 = vpop.f32.mrb[0].mxu0
      %v1402 = vadd.f32 0.0, %v1401
      %v1403 = vpop.f32.mrb[0].mxu0
      %v1404 = vpop.f32.mrb[0].mxu0
      %v1405 = vadd.f32 0.0, %v1404
      %v1406 = vpop.f32.mrb[0].mxu0
      %1407 = vmatprep.mubr.bf16.mxu0 %v1208
      %1408 = vmatmul.mubr.bf16.gmra.mrb[0].mxu0 %v1207
      %v1409 = vpop.f32.mrb[0].mxu0
      %v1410 = vadd.f32 0.0, %v1409
      %v1411 = vpop.f32.mrb[0].mxu0
      %v1412 = vpop.f32.mrb[0].mxu0
      %v1413 = vadd.f32 0.0, %v1412
      %v1414 = vpop.f32.mrb[0].mxu0
      %1415 = vmatprep.mubr.bf16.mxu0 %v1210
      %1416 = vmatmul.mubr.bf16.gmra.mrb[0].mxu0 %v1209
      %v1417 = vpop.f32.mrb[0].mxu0
      %v1418 = vadd.f32 0.0, %v1417
      %v1419 = vpop.f32.mrb[0].mxu0
      %v1420 = vpop.f32.mrb[0].mxu0
      %v1421 = vadd.f32 0.0, %v1420
      %v1422 = vpop.f32.mrb[0].mxu0
      %1423 = vmatprep.mubr.bf16.mxu0 %v1212
      %1424 = vmatmul.mubr.bf16.gmra.mrb[0].mxu0 %v1211
      %v1425 = vpop.f32.mrb[0].mxu0
      %v1426 = vadd.f32 0.0, %v1425
      %v1427 = vpop.f32.mrb[0].mxu0
      %v1428 = vpop.f32.mrb[0].mxu0
      %v1429 = vadd.f32 0.0, %v1428
      %v1430 = vpop.f32.mrb[0].mxu0
      %1431 = vmatprep.mubr.bf16.mxu0 %v1214
      %1432 = vmatmul.mubr.bf16.gmra.mrb[0].mxu0 %v1213
      %v1433 = vpop.f32.mrb[0].mxu0
      %v1434 = vadd.f32 0.0, %v1433
      %v1435 = vpop.f32.mrb[0].mxu0
      %v1436 = vpop.f32.mrb[0].mxu0
      %v1437 = vadd.f32 0.0, %v1436
      %v1438 = vpop.f32.mrb[0].mxu0
      %1439 = vmatprep.mubr.bf16.mxu0 %v1216
      %1440 = vmatmul.mubr.bf16.gmra.mrb[0].mxu0 %v1215
      %v1441 = vpop.f32.mrb[0].mxu0
      %v1442 = vadd.f32 0.0, %v1441
      %v1443 = vpop.f32.mrb[0].mxu0
      %v1444 = vpop.f32.mrb[0].mxu0
      %v1445 = vadd.f32 0.0, %v1444
      %v1446 = vpop.f32.mrb[0].mxu0
      %1447 = vmatprep.mubr.bf16.mxu0 %v1218
      %1448 = vmatmul.mubr.bf16.gmra.mrb[0].mxu0 %v1217
      %v1449 = vpop.f32.mrb[0].mxu0
      %v1450 = vadd.f32 0.0, %v1449
      %v1451 = vpop.f32.mrb[0].mxu0
      %v1452 = vpop.f32.mrb[0].mxu0
      %v1453 = vadd.f32 0.0, %v1452
      %v1454 = vpop.f32.mrb[0].mxu0
      %1455 = vmatprep.mubr.bf16.mxu0 %v1220
      %1456 = vmatmul.mubr.bf16.gmra.mrb[0].mxu0 %v1219
      %v1457 = vpop.f32.mrb[0].mxu0
      %v1458 = vadd.f32 0.0, %v1457
      %v1459 = vpop.f32.mrb[0].mxu0
      %v1460 = vpop.f32.mrb[0].mxu0
      %v1461 = vadd.f32 0.0, %v1460
      %v1462 = vpop.f32.mrb[0].mxu0
      %1463 = vmatprep.mubr.bf16.mxu0 %v1222
      %1464 = vmatmul.mubr.bf16.gmra.mrb[0].mxu0 %v1221
      %v1465 = vpop.f32.mrb[0].mxu0
      %v1466 = vadd.f32 0.0, %v1465
      %v1467 = vpop.f32.mrb[0].mxu0
      %v1468 = vpop.f32.mrb[0].mxu0
      %v1469 = vadd.f32 0.0, %v1468
      %v1470 = vpop.f32.mrb[0].mxu0
      %1471 = vmatprep.mubr.bf16.mxu0 %v1224
      %1472 = vmatmul.mubr.bf16.gmra.mrb[0].mxu0 %v1223
      %v1473 = vpop.f32.mrb[0].mxu0
      %v1474 = vadd.f32 0.0, %v1473
      %v1475 = vpop.f32.mrb[0].mxu0
      %v1476 = vpop.f32.mrb[0].mxu0
      %v1477 = vadd.f32 0.0, %v1476
      %v1478 = vpop.f32.mrb[0].mxu0
      %1479 = vmatprep.mubr.bf16.mxu0 %v1226
      %1480 = vmatmul.mubr.bf16.gmra.mrb[0].mxu0 %v1225
      %v1481 = vpop.f32.mrb[0].mxu0
      %v1482 = vadd.f32 0.0, %v1481
      %v1483 = vpop.f32.mrb[0].mxu0
      %v1484 = vpop.f32.mrb[0].mxu0
      %v1485 = vadd.f32 0.0, %v1484
      %v1486 = vpop.f32.mrb[0].mxu0
      %1487 = vmatprep.mubr.bf16.mxu0 %v1228
      %1488 = vmatmul.mubr.bf16.gmra.mrb[0].mxu0 %v1227
      %v1489 = vpop.f32.mrb[0].mxu0
      %v1490 = vadd.f32 0.0, %v1489
      %v1491 = vpop.f32.mrb[0].mxu0
      %v1492 = vpop.f32.mrb[0].mxu0
      %v1493 = vadd.f32 0.0, %v1492
      %v1494 = vpop.f32.mrb[0].mxu0
      %1495 = vmatprep.mubr.bf16.mxu0 %v1230
      %1496 = vmatmul.mubr.bf16.gmra.mrb[0].mxu0 %v1229
      %v1497 = vpop.f32.mrb[0].mxu0
      %v1498 = vadd.f32 0.0, %v1497
      %v1499 = vpop.f32.mrb[0].mxu0
      %v1500 = vpop.f32.mrb[0].mxu0
      %v1501 = vadd.f32 0.0, %v1500
      %v1502 = vpop.f32.mrb[0].mxu0
      %1503 = vmatprep.mubr.bf16.mxu0 %v1232
      %1504 = vmatmul.mubr.bf16.gmra.mrb[0].mxu0 %v1231
      %v1505 = vpop.f32.mrb[0].mxu0
      %v1506 = vadd.f32 0.0, %v1505
      %v1507 = vpop.f32.mrb[0].mxu0
      %v1508 = vpop.f32.mrb[0].mxu0
      %v1509 = vadd.f32 0.0, %v1508
      %v1510 = vpop.f32.mrb[0].mxu0
      %1511 = vmatprep.mubr.bf16.mxu0 %v1234
      %1512 = vmatmul.mubr.bf16.gmra.mrb[0].mxu0 %v1233
      %v1513 = vpop.f32.mrb[0].mxu0
      %v1514 = vadd.f32 0.0, %v1513
      %v1515 = vpop.f32.mrb[0].mxu0
      %v1516 = vpop.f32.mrb[0].mxu0
      %v1517 = vadd.f32 0.0, %v1516
      %v1518 = vpop.f32.mrb[0].mxu0
      %1519 = vmatprep.mubr.bf16.mxu0 %v1236
      %1520 = vmatmul.mubr.bf16.gmra.mrb[0].mxu0 %v1235
      %v1521 = vpop.f32.mrb[0].mxu0
      %v1522 = vadd.f32 0.0, %v1521
      %v1523 = vpop.f32.mrb[0].mxu0
      %v1524 = vpop.f32.mrb[0].mxu0
      %v1525 = vadd.f32 0.0, %v1524
      %v1526 = vpop.f32.mrb[0].mxu0
      %1527 = vmatprep.mubr.bf16.mxu0 %v1238
      %1528 = vmatmul.mubr.bf16.gmra.mrb[0].mxu0 %v1237
      %v1529 = vpop.f32.mrb[0].mxu0
      %v1530 = vadd.f32 0.0, %v1529
      %v1531 = vpop.f32.mrb[0].mxu0
      %v1532 = vpop.f32.mrb[0].mxu0
      %v1533 = vadd.f32 0.0, %v1532
      %v1534 = vpop.f32.mrb[0].mxu0
      %1535 = vmatprep.mubr.bf16.mxu0 %v1240
      %1536 = vmatmul.mubr.bf16.gmra.mrb[0].mxu0 %v1239
      %v1537 = vpop.f32.mrb[0].mxu0
      %v1538 = vadd.f32 0.0, %v1537
      %v1539 = vpop.f32.mrb[0].mxu0
      %v1540 = vpop.f32.mrb[0].mxu0
      %v1541 = vadd.f32 0.0, %v1540
      %v1542 = vpop.f32.mrb[0].mxu0
      %1543 = vmatprep.mubr.bf16.mxu0 %v1242
      %1544 = vmatmul.mubr.bf16.gmra.mrb[0].mxu0 %v1241
      %v1545 = vpop.f32.mrb[0].mxu0
      %v1546 = vadd.f32 0.0, %v1545
      %v1547 = vpop.f32.mrb[0].mxu0
      %v1548 = vpop.f32.mrb[0].mxu0
      %v1549 = vadd.f32 0.0, %v1548
      %v1550 = vpop.f32.mrb[0].mxu0
      %1551 = vmatprep.mubr.bf16.mxu0 %v1244
      %1552 = vmatmul.mubr.bf16.gmra.mrb[0].mxu0 %v1243
      %v1553 = vpop.f32.mrb[0].mxu0
      %v1554 = vadd.f32 0.0, %v1553
      %v1555 = vpop.f32.mrb[0].mxu0
      %v1556 = vpop.f32.mrb[0].mxu0
      %v1557 = vadd.f32 0.0, %v1556
      %v1558 = vpop.f32.mrb[0].mxu0
      %1559 = vmatprep.mubr.bf16.mxu0 %v1246
      %1560 = vmatmul.mubr.bf16.gmra.mrb[0].mxu0 %v1245
      %v1561 = vpop.f32.mrb[0].mxu0
      %v1562 = vadd.f32 0.0, %v1561
      %v1563 = vpop.f32.mrb[0].mxu0
      %v1564 = vpop.f32.mrb[0].mxu0
      %v1565 = vadd.f32 0.0, %v1564
      %v1566 = vpop.f32.mrb[0].mxu0
      %1567 = vmatprep.mubr.bf16.mxu0 %v1248
      %1568 = vmatmul.mubr.bf16.gmra.mrb[0].mxu0 %v1247
      %v1569 = vpop.f32.mrb[0].mxu0
      %v1570 = vadd.f32 0.0, %v1569
      %v1571 = vpop.f32.mrb[0].mxu0
      %v1572 = vpop.f32.mrb[0].mxu0
      %v1573 = vadd.f32 0.0, %v1572
      %v1574 = vpop.f32.mrb[0].mxu0
      %1575 = vmatprep.mubr.bf16.mxu0 %v1250
      %1576 = vmatmul.mubr.bf16.gmra.mrb[0].mxu0 %v1249
      %v1577 = vpop.f32.mrb[0].mxu0
      %v1578 = vadd.f32 0.0, %v1577
      %v1579 = vpop.f32.mrb[0].mxu0
      %v1580 = vpop.f32.mrb[0].mxu0
      %v1581 = vadd.f32 0.0, %v1580
      %v1582 = vpop.f32.mrb[0].mxu0
      %1583 = vmatprep.mubr.bf16.mxu0 %v1252
      %1584 = vmatmul.mubr.bf16.gmra.mrb[0].mxu0 %v1251
      %v1585 = vpop.f32.mrb[0].mxu0
      %v1586 = vadd.f32 0.0, %v1585
      %v1587 = vpop.f32.mrb[0].mxu0
      %v1588 = vpop.f32.mrb[0].mxu0
      %v1589 = vadd.f32 0.0, %v1588
      %v1590 = vpop.f32.mrb[0].mxu0
      %1591 = vmatprep.mubr.bf16.mxu0 %v1254
      %1592 = vmatmul.mubr.bf16.gmra.mrb[0].mxu0 %v1253
      %v1593 = vpop.f32.mrb[0].mxu0
      %v1594 = vadd.f32 0.0, %v1593
      %v1595 = vpop.f32.mrb[0].mxu0
      %v1596 = vpop.f32.mrb[0].mxu0
      %v1597 = vadd.f32 0.0, %v1596
      %v1598 = vpop.f32.mrb[0].mxu0
      %1599 = vmatprep.mubr.bf16.mxu0 %v1256
      %1600 = vmatmul.mubr.bf16.gmra.mrb[0].mxu0 %v1255
      %v1601 = vpop.f32.mrb[0].mxu0
      %v1602 = vadd.f32 0.0, %v1601
      %v1603 = vpop.f32.mrb[0].mxu0
      %v1604 = vpop.f32.mrb[0].mxu0
      %v1605 = vadd.f32 0.0, %v1604
      %v1606 = vpop.f32.mrb[0].mxu0
      %1607 = vmatprep.mubr.bf16.mxu0 %v1258
      %1608 = vmatmul.mubr.bf16.gmra.mrb[0].mxu0 %v1257
      %v1609 = vpop.f32.mrb[0].mxu0
      %v1610 = vadd.f32 0.0, %v1609
      %v1611 = vpop.f32.mrb[0].mxu0
      %v1612 = vpop.f32.mrb[0].mxu0
      %v1613 = vadd.f32 0.0, %v1612
      %v1614 = vpop.f32.mrb[0].mxu0
      %1615 = vmatprep.mubr.bf16.mxu0 %v1260
      %1616 = vmatmul.mubr.bf16.gmra.mrb[0].mxu0 %v1259
      %v1617 = vpop.f32.mrb[0].mxu0
      %v1618 = vadd.f32 0.0, %v1617
      %v1619 = vpop.f32.mrb[0].mxu0
      %v1620 = vpop.f32.mrb[0].mxu0
      %v1621 = vadd.f32 0.0, %v1620
      %v1622 = vpop.f32.mrb[0].mxu0
      %1623 = vmatprep.mubr.bf16.mxu0 %v1262
      %1624 = vmatmul.mubr.bf16.gmra.mrb[0].mxu0 %v1261
      %v1625 = vpop.f32.mrb[0].mxu0
      %v1626 = vadd.f32 0.0, %v1625
      %v1627 = vpop.f32.mrb[0].mxu0
      %v1628 = vpop.f32.mrb[0].mxu0
      %v1629 = vadd.f32 0.0, %v1628
      %v1630 = vpop.f32.mrb[0].mxu0
      %1631 = vmatprep.mubr.bf16.mxu0 %v1264
      %1632 = vmatmul.mubr.bf16.gmra.mrb[0].mxu0 %v1263
      %v1633 = vpop.f32.mrb[0].mxu0
      %v1634 = vadd.f32 0.0, %v1633
      %v1635 = vpop.f32.mrb[0].mxu0
      %v1636 = vpop.f32.mrb[0].mxu0
      %v1637 = vadd.f32 0.0, %v1636
      %v1638 = vpop.f32.mrb[0].mxu0
      %1639 = vmatprep.mubr.bf16.mxu0 %v1266
      %1640 = vmatmul.mubr.bf16.gmra.mrb[0].mxu0 %v1265
      %v1641 = vpop.f32.mrb[0].mxu0
      %v1642 = vadd.f32 0.0, %v1641
      %v1643 = vpop.f32.mrb[0].mxu0
      %v1644 = vpop.f32.mrb[0].mxu0
      %v1645 = vadd.f32 0.0, %v1644
      %v1646 = vpop.f32.mrb[0].mxu0
      %1647 = vmatprep.mubr.bf16.mxu0 %v1268
      %1648 = vmatmul.mubr.bf16.gmra.mrb[0].mxu0 %v1267
      %v1649 = vpop.f32.mrb[0].mxu0
      %v1650 = vadd.f32 0.0, %v1649
      %v1651 = vpop.f32.mrb[0].mxu0
      %v1652 = vpop.f32.mrb[0].mxu0
      %v1653 = vadd.f32 0.0, %v1652
      %v1654 = vpop.f32.mrb[0].mxu0
      %1655 = vmatprep.mubr.bf16.mxu0 %v1270
      %1656 = vmatmul.mubr.bf16.gmra.mrb[0].mxu0 %v1269
      %v1657 = vpop.f32.mrb[0].mxu0
      %v1658 = vadd.f32 0.0, %v1657
      %v1659 = vpop.f32.mrb[0].mxu0
      %v1660 = vpop.f32.mrb[0].mxu0
      %v1661 = vadd.f32 0.0, %v1660
      %v1662 = vpop.f32.mrb[0].mxu0
      %1663 = vdwg.mxu0
      %v1664 = vld [vmem:[%s5] sm:$0x1]
      %v1666 = vlaneseq
      %v1667 = vshrl.u32 %v1666, 7
      %v1668 = vsub.s32 0, %v1667
      %v1669 = vrot.slane %v1664, %v1668
      %v1671 = vmul.f32 %v1378, %v1669
      %v1672 = vmul.f32 %v1381, %v1669
      %v1673 = vmul.f32 %v1386, %v1669
      %v1674 = vmul.f32 %v1389, %v1669
      %v1675 = vmul.f32 %v1394, %v1669
      %v1676 = vmul.f32 %v1397, %v1669
      %v1677 = vmul.f32 %v1402, %v1669
      %v1678 = vmul.f32 %v1405, %v1669
      %s1679 = scalar_lea.vmem %s5, 1
      %v1680 = vld [vmem:[%s1679] sm:$0x1]
      %v1682 = vlaneseq
      %v1683 = vshrl.u32 %v1682, 7
      %v1684 = vsub.s32 0, %v1683
      %v1685 = vrot.slane %v1680, %v1684
      %v1687 = vmul.f32 %v1410, %v1685
      %v1688 = vmul.f32 %v1413, %v1685
      %v1689 = vmul.f32 %v1418, %v1685
      %v1690 = vmul.f32 %v1421, %v1685
      %v1691 = vmul.f32 %v1426, %v1685
      %v1692 = vmul.f32 %v1429, %v1685
      %v1693 = vmul.f32 %v1434, %v1685
      %v1694 = vmul.f32 %v1437, %v1685
      %v1695 = vadd.f32 %v1671, %v1687
      %v1696 = vadd.f32 %v1672, %v1688
      %v1697 = vadd.f32 %v1673, %v1689
      %v1698 = vadd.f32 %v1674, %v1690
      %v1699 = vadd.f32 %v1675, %v1691
      %v1700 = vadd.f32 %v1676, %v1692
      %v1701 = vadd.f32 %v1677, %v1693
      %v1702 = vadd.f32 %v1678, %v1694
      %s1703 = scalar_lea.vmem %s5, 2
      %v1704 = vld [vmem:[%s1703] sm:$0x1]
      %v1706 = vlaneseq
      %v1707 = vshrl.u32 %v1706, 7
      %v1708 = vsub.s32 0, %v1707
      %v1709 = vrot.slane %v1704, %v1708
      %v1711 = vmul.f32 %v1442, %v1709
      %v1712 = vmul.f32 %v1445, %v1709
      %v1713 = vmul.f32 %v1450, %v1709
      %v1714 = vmul.f32 %v1453, %v1709
      %v1715 = vmul.f32 %v1458, %v1709
      %v1716 = vmul.f32 %v1461, %v1709
      %v1717 = vmul.f32 %v1466, %v1709
      %v1718 = vmul.f32 %v1469, %v1709
      %v1719 = vadd.f32 %v1695, %v1711
      %v1720 = vadd.f32 %v1696, %v1712
      %v1721 = vadd.f32 %v1697, %v1713
      %v1722 = vadd.f32 %v1698, %v1714
      %v1723 = vadd.f32 %v1699, %v1715
      %v1724 = vadd.f32 %v1700, %v1716
      %v1725 = vadd.f32 %v1701, %v1717
      %v1726 = vadd.f32 %v1702, %v1718
      %s1727 = scalar_lea.vmem %s5, 3
      %v1728 = vld [vmem:[%s1727] sm:$0x1]
      %v1730 = vlaneseq
      %v1731 = vshrl.u32 %v1730, 7
      %v1732 = vsub.s32 0, %v1731
      %v1733 = vrot.slane %v1728, %v1732
      %v1735 = vmul.f32 %v1474, %v1733
      %v1736 = vmul.f32 %v1477, %v1733
      %v1737 = vmul.f32 %v1482, %v1733
      %v1738 = vmul.f32 %v1485, %v1733
      %v1739 = vmul.f32 %v1490, %v1733
      %v1740 = vmul.f32 %v1493, %v1733
      %v1741 = vmul.f32 %v1498, %v1733
      %v1742 = vmul.f32 %v1501, %v1733
      %v1743 = vadd.f32 %v1719, %v1735
      %v1744 = vadd.f32 %v1720, %v1736
      %v1745 = vadd.f32 %v1721, %v1737
      %v1746 = vadd.f32 %v1722, %v1738
      %v1747 = vadd.f32 %v1723, %v1739
      %v1748 = vadd.f32 %v1724, %v1740
      %v1749 = vadd.f32 %v1725, %v1741
      %v1750 = vadd.f32 %v1726, %v1742
      %s1751 = scalar_lea.vmem %s5, 4
      %v1752 = vld [vmem:[%s1751] sm:$0x1]
      %v1754 = vlaneseq
      %v1755 = vshrl.u32 %v1754, 7
      %v1756 = vsub.s32 0, %v1755
      %v1757 = vrot.slane %v1752, %v1756
      %v1759 = vmul.f32 %v1506, %v1757
      %v1760 = vmul.f32 %v1509, %v1757
      %v1761 = vmul.f32 %v1514, %v1757
      %v1762 = vmul.f32 %v1517, %v1757
      %v1763 = vmul.f32 %v1522, %v1757
      %v1764 = vmul.f32 %v1525, %v1757
      %v1765 = vmul.f32 %v1530, %v1757
      %v1766 = vmul.f32 %v1533, %v1757
      %v1767 = vadd.f32 %v1743, %v1759
      %v1768 = vadd.f32 %v1744, %v1760
      %v1769 = vadd.f32 %v1745, %v1761
      %v1770 = vadd.f32 %v1746, %v1762
      %v1771 = vadd.f32 %v1747, %v1763
      %v1772 = vadd.f32 %v1748, %v1764
      %v1773 = vadd.f32 %v1749, %v1765
      %v1774 = vadd.f32 %v1750, %v1766
      %s1775 = scalar_lea.vmem %s5, 5
      %v1776 = vld [vmem:[%s1775] sm:$0x1]
      %v1778 = vlaneseq
      %v1779 = vshrl.u32 %v1778, 7
      %v1780 = vsub.s32 0, %v1779
      %v1781 = vrot.slane %v1776, %v1780
      %v1783 = vmul.f32 %v1538, %v1781
      %v1784 = vmul.f32 %v1541, %v1781
      %v1785 = vmul.f32 %v1546, %v1781
      %v1786 = vmul.f32 %v1549, %v1781
      %v1787 = vmul.f32 %v1554, %v1781
      %v1788 = vmul.f32 %v1557, %v1781
      %v1789 = vmul.f32 %v1562, %v1781
      %v1790 = vmul.f32 %v1565, %v1781
      %v1791 = vadd.f32 %v1767, %v1783
      %v1792 = vadd.f32 %v1768, %v1784
      %v1793 = vadd.f32 %v1769, %v1785
      %v1794 = vadd.f32 %v1770, %v1786
      %v1795 = vadd.f32 %v1771, %v1787
      %v1796 = vadd.f32 %v1772, %v1788
      %v1797 = vadd.f32 %v1773, %v1789
      %v1798 = vadd.f32 %v1774, %v1790
      %s1799 = scalar_lea.vmem %s5, 6
      %v1800 = vld [vmem:[%s1799] sm:$0x1]
      %v1802 = vlaneseq
      %v1803 = vshrl.u32 %v1802, 7
      %v1804 = vsub.s32 0, %v1803
      %v1805 = vrot.slane %v1800, %v1804
      %v1807 = vmul.f32 %v1570, %v1805
      %v1808 = vmul.f32 %v1573, %v1805
      %v1809 = vmul.f32 %v1578, %v1805
      %v1810 = vmul.f32 %v1581, %v1805
      %v1811 = vmul.f32 %v1586, %v1805
      %v1812 = vmul.f32 %v1589, %v1805
      %v1813 = vmul.f32 %v1594, %v1805
      %v1814 = vmul.f32 %v1597, %v1805
      %v1815 = vadd.f32 %v1791, %v1807
      %v1816 = vadd.f32 %v1792, %v1808
      %v1817 = vadd.f32 %v1793, %v1809
      %v1818 = vadd.f32 %v1794, %v1810
      %v1819 = vadd.f32 %v1795, %v1811
      %v1820 = vadd.f32 %v1796, %v1812
      %v1821 = vadd.f32 %v1797, %v1813
      %v1822 = vadd.f32 %v1798, %v1814
      %s1823 = scalar_lea.vmem %s5, 7
      %v1824 = vld [vmem:[%s1823] sm:$0x1]
      %v1826 = vlaneseq
      %v1827 = vshrl.u32 %v1826, 7
      %v1828 = vsub.s32 0, %v1827
      %v1829 = vrot.slane %v1824, %v1828
      %v1831 = vmul.f32 %v1602, %v1829
      %v1832 = vmul.f32 %v1605, %v1829
      %v1833 = vmul.f32 %v1610, %v1829
      %v1834 = vmul.f32 %v1613, %v1829
      %v1835 = vmul.f32 %v1618, %v1829
      %v1836 = vmul.f32 %v1621, %v1829
      %v1837 = vmul.f32 %v1626, %v1829
      %v1838 = vmul.f32 %v1629, %v1829
      %v1839 = vadd.f32 %v1815, %v1831
      %v1840 = vadd.f32 %v1816, %v1832
      %v1841 = vadd.f32 %v1817, %v1833
      %v1842 = vadd.f32 %v1818, %v1834
      %v1843 = vadd.f32 %v1819, %v1835
      %v1844 = vadd.f32 %v1820, %v1836
      %v1845 = vadd.f32 %v1821, %v1837
      %v1846 = vadd.f32 %v1822, %v1838
      %s1847 = scalar_lea.vmem %s5, 8
      %v1848 = vld [vmem:[%s1847] sm:$0x1]
      %v1850 = vlaneseq
      %v1851 = vshrl.u32 %v1850, 7
      %v1852 = vsub.s32 0, %v1851
      %v1853 = vrot.slane %v1848, %v1852
      %v1855 = vmul.f32 %v1634, %v1853
      %v1856 = vmul.f32 %v1637, %v1853
      %v1857 = vmul.f32 %v1642, %v1853
      %v1858 = vmul.f32 %v1645, %v1853
      %v1859 = vmul.f32 %v1650, %v1853
      %v1860 = vmul.f32 %v1653, %v1853
      %v1861 = vmul.f32 %v1658, %v1853
      %v1862 = vmul.f32 %v1661, %v1853
      %v1863 = vadd.f32 %v1839, %v1855
      %v1864 = vadd.f32 %v1840, %v1856
      %v1865 = vadd.f32 %v1841, %v1857
      %v1866 = vadd.f32 %v1842, %v1858
      %v1867 = vadd.f32 %v1843, %v1859
      %v1868 = vadd.f32 %v1844, %v1860
      %v1869 = vadd.f32 %v1845, %v1861
      %v1870 = vadd.f32 %v1846, %v1862
      %v1871 = vld [vmem:[%s6] sm:$0x1]
      %v1873 = vlaneseq
      %v1874 = vshrl.u32 %v1873, 7
      %v1875 = vsub.s32 0, %v1874
      %v1876 = vrot.slane %v1871, %v1875
      %v1878 = vadd.f32 %v1863, %v1876
      %v1879 = vadd.f32 %v1864, %v1876
      %v1880 = vadd.f32 %v1865, %v1876
      %v1881 = vadd.f32 %v1866, %v1876
      %v1882 = vadd.f32 %v1867, %v1876
      %v1883 = vadd.f32 %v1868, %v1876
      %v1884 = vadd.f32 %v1869, %v1876
      %v1885 = vadd.f32 %v1870, %v1876
      %v1886 = vpack.c.bf16 %v1879, %v1878
      %v1887 = vpack.c.bf16 %v1881, %v1880
      %v1888 = vpack.c.bf16 %v1883, %v1882
      %v1889 = vpack.c.bf16 %v1885, %v1884
      %v1890 = vld [vmem:[%s7] sm:$0xf]
      %v1891 = vld [vmem:[%s7 + $0x4] sm:$0xf]
      %v1892 = vld [vmem:[%s7 + $0x8] sm:$0xf]
      %v1893 = vld [vmem:[%s7 + $0xc] sm:$0xf]
      %v1894 = vld [vmem:[%s8] sm:$0x1]
      %v1896 = vlaneseq
      %v1897 = vshrl.u32 %v1896, 7
      %v1898 = vsub.s32 0, %v1897
      %v1899 = vrot.slane %v1894, %v1898
      %v1905 = vunpack.c.l.b16 %v1890
      %v1906 = vunpack.c.l.b16 %v1891
      %v1907 = vunpack.c.l.b16 %v1892
      %v1908 = vunpack.c.l.b16 %v1893
      %v1909 = vpack.c.b16 %v1906, %v1905
      %v1910 = vpack.c.b16 %v1908, %v1907
      %vm1913 = vcmask 261120
      %v1915 = vsel %vm1913, %v1886, 0
      %v1918 = vsel %vm1913, %v1887, 0
      %v1921 = vsel %vm1913, %v1888, 0
      %v1924 = vsel %vm1913, %v1889, 0
      %1926 = vmatprep.subr.bf16.mxu0 0
      %1927 = vmatpush1.bf16.msra.mxu0 %v1909
      %1928 = vmatprep.subr.bf16.mxu0 0
      %1929 = vmatpush1.bf16.msra.mxu0 %v1910
      %1930 = vmatprep.subr.bf16.mxu0 0
      %1931 = vmatpush1.bf16.msra.mxu0 0
      %1932 = vmatprep.subr.bf16.mxu0 0
      %1933 = vmatpush1.bf16.msra.mxu0 0
      %1934 = vmatprep.subr.bf16.mxu0 0
      %1935 = vmatpush1.bf16.msra.mxu0 0
      %1936 = vmatprep.subr.bf16.mxu0 0
      %1937 = vmatpush1.bf16.msra.mxu0 0
      %1938 = vmatprep.subr.bf16.mxu0 0
      %1939 = vmatpush1.bf16.msra.mxu0 0
      %1940 = vmatprep.subr.bf16.mxu0 0
      %1941 = vmatpush1.bf16.msra.mxu0 0
      %1942 = vmatprep.subr.bf16.mxu0 0
      %1943 = vmatpush1.bf16.msra.mxu0 0
      %1944 = vmatprep.subr.bf16.mxu0 0
      %1945 = vmatpush1.bf16.msra.mxu0 0
      %1946 = vmatprep.subr.bf16.mxu0 0
      %1947 = vmatpush1.bf16.msra.mxu0 0
      %1948 = vmatprep.subr.bf16.mxu0 0
      %1949 = vmatpush1.bf16.msra.mxu0 0
      %1950 = vmatprep.subr.bf16.mxu0 0
      %1951 = vmatpush1.bf16.msra.mxu0 0
      %1952 = vmatprep.subr.bf16.mxu0 0
      %1953 = vmatpush1.bf16.msra.mxu0 0
      %1954 = vmatprep.subr.bf16.mxu0 0
      %1955 = vmatpush1.bf16.msra.mxu0 0
      %1956 = vmatprep.subr.bf16.mxu0 0
      %1957 = vmatpush1.bf16.msra.mxu0 0
      %1958 = vmatprep.mubr.bf16.mxu0 0
      %1959 = vmatmul.mubr.bf16.gmra.mrb[0].mxu0 %v1915
      %v1960 = vpop.f32.mrb[0].mxu0
      %v1961 = vadd.f32 %v1899, %v1960
      %v1962 = vpop.f32.mrb[0].mxu0
      %v1963 = vpop.f32.mrb[0].mxu0
      %v1964 = vadd.f32 %v1899, %v1963
      %v1965 = vpop.f32.mrb[0].mxu0
      %1966 = vmatprep.mubr.bf16.mxu0 0
      %1967 = vmatmul.mubr.bf16.gmra.mrb[0].mxu0 %v1918
      %v1968 = vpop.f32.mrb[0].mxu0
      %v1969 = vadd.f32 %v1899, %v1968
      %v1970 = vpop.f32.mrb[0].mxu0
      %v1971 = vpop.f32.mrb[0].mxu0
      %v1972 = vadd.f32 %v1899, %v1971
      %v1973 = vpop.f32.mrb[0].mxu0
      %1974 = vmatprep.mubr.bf16.mxu0 0
      %1975 = vmatmul.mubr.bf16.gmra.mrb[0].mxu0 %v1921
      %v1976 = vpop.f32.mrb[0].mxu0
      %v1977 = vadd.f32 %v1899, %v1976
      %v1978 = vpop.f32.mrb[0].mxu0
      %v1979 = vpop.f32.mrb[0].mxu0
      %v1980 = vadd.f32 %v1899, %v1979
      %v1981 = vpop.f32.mrb[0].mxu0
      %1982 = vmatprep.mubr.bf16.mxu0 0
      %1983 = vmatmul.mubr.bf16.gmra.mrb[0].mxu0 %v1924
      %v1984 = vpop.f32.mrb[0].mxu0
      %v1985 = vadd.f32 %v1899, %v1984
      %v1986 = vpop.f32.mrb[0].mxu0
      %v1987 = vpop.f32.mrb[0].mxu0
      %v1988 = vadd.f32 %v1899, %v1987
      %v1989 = vpop.f32.mrb[0].mxu0
      %1990 = vdwg.mxu0
      %v1991 = vmax.f32 %v1961, 0.0
      %v1992 = vmax.f32 %v1964, 0.0
      %v1993 = vmax.f32 %v1969, 0.0
      %v1994 = vmax.f32 %v1972, 0.0
      %v1995 = vmax.f32 %v1977, 0.0
      %v1996 = vmax.f32 %v1980, 0.0
      %v1997 = vmax.f32 %v1985, 0.0
      %v1998 = vmax.f32 %v1988, 0.0
      %v1999 = vpack.c.bf16 %v1992, %v1991
      %v2000 = vpack.c.bf16 %v1994, %v1993
      %v2001 = vpack.c.bf16 %v1996, %v1995
      %v2002 = vpack.c.bf16 %v1998, %v1997
      %v2003 = vld [vmem:[%s2] sm:$0xf]
      %v2004 = vld [vmem:[%s2 + $0x4] sm:$0xf]
      %v2005 = vld [vmem:[%s2 + $0x8] sm:$0xf]
      %v2006 = vld [vmem:[%s2 + $0xc] sm:$0xf]
      %v2007 = vld [vmem:[%s2 + $0x10] sm:$0xf]
      %v2008 = vld [vmem:[%s2 + $0x14] sm:$0xf]
      %v2009 = vld [vmem:[%s2 + $0x18] sm:$0xf]
      %v2010 = vld [vmem:[%s2 + $0x1c] sm:$0xf]
      %v2011 = vld [vmem:[%s2 + $0x20] sm:$0xf]
      %v2012 = vld [vmem:[%s2 + $0x24] sm:$0xf]
      %v2013 = vld [vmem:[%s2 + $0x28] sm:$0xf]
      %v2014 = vld [vmem:[%s2 + $0x2c] sm:$0xf]
      %v2015 = vld [vmem:[%s2 + $0x30] sm:$0xf]
      %v2016 = vld [vmem:[%s2 + $0x34] sm:$0xf]
      %v2017 = vld [vmem:[%s2 + $0x38] sm:$0xf]
      %v2018 = vld [vmem:[%s2 + $0x3c] sm:$0xf]
      %v2019 = vld [vmem:[%s2 + $0x40] sm:$0xf]
      %v2020 = vld [vmem:[%s2 + $0x44] sm:$0xf]
      %v2021 = vld [vmem:[%s2 + $0x48] sm:$0xf]
      %v2022 = vld [vmem:[%s2 + $0x4c] sm:$0xf]
      %v2023 = vld [vmem:[%s2 + $0x50] sm:$0xf]
      %v2024 = vld [vmem:[%s2 + $0x54] sm:$0xf]
      %v2025 = vld [vmem:[%s2 + $0x58] sm:$0xf]
      %v2026 = vld [vmem:[%s2 + $0x5c] sm:$0xf]
      %v2027 = vld [vmem:[%s2 + $0x60] sm:$0xf]
      %v2028 = vld [vmem:[%s2 + $0x64] sm:$0xf]
      %v2029 = vld [vmem:[%s2 + $0x68] sm:$0xf]
      %v2030 = vld [vmem:[%s2 + $0x6c] sm:$0xf]
      %v2031 = vld [vmem:[%s2 + $0x70] sm:$0xf]
      %v2032 = vld [vmem:[%s2 + $0x74] sm:$0xf]
      %v2033 = vld [vmem:[%s2 + $0x78] sm:$0xf]
      %v2034 = vld [vmem:[%s2 + $0x7c] sm:$0xf]
      %v2035 = vld [vmem:[%s2 + $0x80] sm:$0xf]
      %v2036 = vld [vmem:[%s2 + $0x84] sm:$0xf]
      %v2037 = vld [vmem:[%s2 + $0x88] sm:$0xf]
      %v2038 = vld [vmem:[%s2 + $0x8c] sm:$0xf]
      %v2039 = vld [vmem:[%s2 + $0x90] sm:$0xf]
      %v2040 = vld [vmem:[%s2 + $0x94] sm:$0xf]
      %v2041 = vld [vmem:[%s2 + $0x98] sm:$0xf]
      %v2042 = vld [vmem:[%s2 + $0x9c] sm:$0xf]
      %v2043 = vld [vmem:[%s2 + $0xa0] sm:$0xf]
      %v2044 = vld [vmem:[%s2 + $0xa4] sm:$0xf]
      %v2045 = vld [vmem:[%s2 + $0xa8] sm:$0xf]
      %v2046 = vld [vmem:[%s2 + $0xac] sm:$0xf]
      %v2047 = vld [vmem:[%s2 + $0xb0] sm:$0xf]
      %v2048 = vld [vmem:[%s2 + $0xb4] sm:$0xf]
      %v2049 = vld [vmem:[%s2 + $0xb8] sm:$0xf]
      %v2050 = vld [vmem:[%s2 + $0xbc] sm:$0xf]
      %v2051 = vld [vmem:[%s2 + $0xc0] sm:$0xf]
      %v2052 = vld [vmem:[%s2 + $0xc4] sm:$0xf]
      %v2053 = vld [vmem:[%s2 + $0xc8] sm:$0xf]
      %v2054 = vld [vmem:[%s2 + $0xcc] sm:$0xf]
      %v2055 = vld [vmem:[%s2 + $0xd0] sm:$0xf]
      %v2056 = vld [vmem:[%s2 + $0xd4] sm:$0xf]
      %v2057 = vld [vmem:[%s2 + $0xd8] sm:$0xf]
      %v2058 = vld [vmem:[%s2 + $0xdc] sm:$0xf]
      %v2059 = vld [vmem:[%s2 + $0xe0] sm:$0xf]
      %v2060 = vld [vmem:[%s2 + $0xe4] sm:$0xf]
      %v2061 = vld [vmem:[%s2 + $0xe8] sm:$0xf]
      %v2062 = vld [vmem:[%s2 + $0xec] sm:$0xf]
      %v2063 = vld [vmem:[%s2 + $0xf0] sm:$0xf]
      %v2064 = vld [vmem:[%s2 + $0xf4] sm:$0xf]
      %v2065 = vld [vmem:[%s2 + $0xf8] sm:$0xf]
      %v2066 = vld [vmem:[%s2 + $0xfc] sm:$0xf]
      %v2067 = vld [vmem:[%s2 + $0x100] sm:$0xf]
      %v2068 = vld [vmem:[%s2 + $0x104] sm:$0xf]
      %v2069 = vld [vmem:[%s2 + $0x108] sm:$0xf]
      %v2070 = vld [vmem:[%s2 + $0x10c] sm:$0xf]
      %v2071 = vld [vmem:[%s2 + $0x110] sm:$0xf]
      %v2072 = vld [vmem:[%s2 + $0x114] sm:$0xf]
      %v2073 = vld [vmem:[%s2 + $0x118] sm:$0xf]
      %v2074 = vld [vmem:[%s2 + $0x11c] sm:$0xf]
      %v2147 = vunpack.c.l.b16 %v2003
      %v2148 = vunpack.c.l.b16 %v2004
      %v2149 = vunpack.c.l.b16 %v2005
      %v2150 = vunpack.c.l.b16 %v2006
      %v2151 = vunpack.c.l.b16 %v2007
      %v2152 = vunpack.c.l.b16 %v2008
      %v2153 = vunpack.c.l.b16 %v2009
      %v2154 = vunpack.c.l.b16 %v2010
      %v2155 = vunpack.c.l.b16 %v2011
      %v2156 = vunpack.c.l.b16 %v2012
      %v2157 = vunpack.c.l.b16 %v2013
      %v2158 = vunpack.c.l.b16 %v2014
      %v2159 = vunpack.c.l.b16 %v2015
      %v2160 = vunpack.c.l.b16 %v2016
      %v2161 = vunpack.c.l.b16 %v2017
      %v2162 = vunpack.c.l.b16 %v2018
      %v2163 = vunpack.c.l.b16 %v2019
      %v2164 = vunpack.c.l.b16 %v2020
      %v2165 = vunpack.c.l.b16 %v2021
      %v2166 = vunpack.c.l.b16 %v2022
      %v2167 = vunpack.c.l.b16 %v2023
      %v2168 = vunpack.c.l.b16 %v2024
      %v2169 = vunpack.c.l.b16 %v2025
      %v2170 = vunpack.c.l.b16 %v2026
      %v2171 = vunpack.c.l.b16 %v2027
      %v2172 = vunpack.c.l.b16 %v2028
      %v2173 = vunpack.c.l.b16 %v2029
      %v2174 = vunpack.c.l.b16 %v2030
      %v2175 = vunpack.c.l.b16 %v2031
      %v2176 = vunpack.c.l.b16 %v2032
      %v2177 = vunpack.c.l.b16 %v2033
      %v2178 = vunpack.c.l.b16 %v2034
      %v2179 = vunpack.c.l.b16 %v2035
      %v2180 = vunpack.c.l.b16 %v2036
      %v2181 = vunpack.c.l.b16 %v2037
      %v2182 = vunpack.c.l.b16 %v2038
      %v2183 = vunpack.c.l.b16 %v2039
      %v2184 = vunpack.c.l.b16 %v2040
      %v2185 = vunpack.c.l.b16 %v2041
      %v2186 = vunpack.c.l.b16 %v2042
      %v2187 = vunpack.c.l.b16 %v2043
      %v2188 = vunpack.c.l.b16 %v2044
      %v2189 = vunpack.c.l.b16 %v2045
      %v2190 = vunpack.c.l.b16 %v2046
      %v2191 = vunpack.c.l.b16 %v2047
      %v2192 = vunpack.c.l.b16 %v2048
      %v2193 = vunpack.c.l.b16 %v2049
      %v2194 = vunpack.c.l.b16 %v2050
      %v2195 = vunpack.c.l.b16 %v2051
      %v2196 = vunpack.c.l.b16 %v2052
      %v2197 = vunpack.c.l.b16 %v2053
      %v2198 = vunpack.c.l.b16 %v2054
      %v2199 = vunpack.c.l.b16 %v2055
      %v2200 = vunpack.c.l.b16 %v2056
      %v2201 = vunpack.c.l.b16 %v2057
      %v2202 = vunpack.c.l.b16 %v2058
      %v2203 = vunpack.c.l.b16 %v2059
      %v2204 = vunpack.c.l.b16 %v2060
      %v2205 = vunpack.c.l.b16 %v2061
      %v2206 = vunpack.c.l.b16 %v2062
      %v2207 = vunpack.c.l.b16 %v2063
      %v2208 = vunpack.c.l.b16 %v2064
      %v2209 = vunpack.c.l.b16 %v2065
      %v2210 = vunpack.c.l.b16 %v2066
      %v2211 = vunpack.c.l.b16 %v2067
      %v2212 = vunpack.c.l.b16 %v2068
      %v2213 = vunpack.c.l.b16 %v2069
      %v2214 = vunpack.c.l.b16 %v2070
      %v2215 = vunpack.c.l.b16 %v2071
      %v2216 = vunpack.c.l.b16 %v2072
      %v2217 = vunpack.c.l.b16 %v2073
      %v2218 = vunpack.c.l.b16 %v2074
      %v2219 = vpack.c.b16 %v2148, %v2147
      %v2220 = vpack.c.b16 %v2150, %v2149
      %v2221 = vpack.c.b16 %v2152, %v2151
      %v2222 = vpack.c.b16 %v2154, %v2153
      %v2223 = vpack.c.b16 %v2156, %v2155
      %v2224 = vpack.c.b16 %v2158, %v2157
      %v2225 = vpack.c.b16 %v2160, %v2159
      %v2226 = vpack.c.b16 %v2162, %v2161
      %v2227 = vpack.c.b16 %v2164, %v2163
      %v2228 = vpack.c.b16 %v2166, %v2165
      %v2229 = vpack.c.b16 %v2168, %v2167
      %v2230 = vpack.c.b16 %v2170, %v2169
      %v2231 = vpack.c.b16 %v2172, %v2171
      %v2232 = vpack.c.b16 %v2174, %v2173
      %v2233 = vpack.c.b16 %v2176, %v2175
      %v2234 = vpack.c.b16 %v2178, %v2177
      %v2235 = vpack.c.b16 %v2180, %v2179
      %v2236 = vpack.c.b16 %v2182, %v2181
      %v2237 = vpack.c.b16 %v2184, %v2183
      %v2238 = vpack.c.b16 %v2186, %v2185
      %v2239 = vpack.c.b16 %v2188, %v2187
      %v2240 = vpack.c.b16 %v2190, %v2189
      %v2241 = vpack.c.b16 %v2192, %v2191
      %v2242 = vpack.c.b16 %v2194, %v2193
      %v2243 = vpack.c.b16 %v2196, %v2195
      %v2244 = vpack.c.b16 %v2198, %v2197
      %v2245 = vpack.c.b16 %v2200, %v2199
      %v2246 = vpack.c.b16 %v2202, %v2201
      %v2247 = vpack.c.b16 %v2204, %v2203
      %v2248 = vpack.c.b16 %v2206, %v2205
      %v2249 = vpack.c.b16 %v2208, %v2207
      %v2250 = vpack.c.b16 %v2210, %v2209
      %v2251 = vpack.c.b16 %v2212, %v2211
      %v2252 = vpack.c.b16 %v2214, %v2213
      %v2253 = vpack.c.b16 %v2216, %v2215
      %v2254 = vpack.c.b16 %v2218, %v2217
      %vm2255 = vcmask 523264
      %v2257 = vsel %vm2255, %v2219, 0
      %v2260 = vsel %vm2255, %v2220, 0
      %v2263 = vsel %vm2255, %v2221, 0
      %v2266 = vsel %vm2255, %v2222, 0
      %v2269 = vsel %vm2255, %v2223, 0
      %v2272 = vsel %vm2255, %v2224, 0
      %v2275 = vsel %vm2255, %v2225, 0
      %v2278 = vsel %vm2255, %v2226, 0
      %v2281 = vsel %vm2255, %v2227, 0
      %v2284 = vsel %vm2255, %v2228, 0
      %v2287 = vsel %vm2255, %v2229, 0
      %v2290 = vsel %vm2255, %v2230, 0
      %v2293 = vsel %vm2255, %v2231, 0
      %v2296 = vsel %vm2255, %v2232, 0
      %v2299 = vsel %vm2255, %v2233, 0
      %v2302 = vsel %vm2255, %v2234, 0
      %v2305 = vsel %vm2255, %v2235, 0
      %v2308 = vsel %vm2255, %v2236, 0
      %v2311 = vsel %vm2255, %v2237, 0
      %v2314 = vsel %vm2255, %v2238, 0
      %v2317 = vsel %vm2255, %v2239, 0
      %v2320 = vsel %vm2255, %v2240, 0
      %v2323 = vsel %vm2255, %v2241, 0
      %v2326 = vsel %vm2255, %v2242, 0
      %v2329 = vsel %vm2255, %v2243, 0
      %v2332 = vsel %vm2255, %v2244, 0
      %v2335 = vsel %vm2255, %v2245, 0
      %v2338 = vsel %vm2255, %v2246, 0
      %v2341 = vsel %vm2255, %v2247, 0
      %v2344 = vsel %vm2255, %v2248, 0
      %v2347 = vsel %vm2255, %v2249, 0
      %v2350 = vsel %vm2255, %v2250, 0
      %v2353 = vsel %vm2255, %v2251, 0
      %v2356 = vsel %vm2255, %v2252, 0
      %v2359 = vsel %vm2255, %v2253, 0
      %v2362 = vsel %vm2255, %v2254, 0
      %2364 = vmatprep.subr.bf16.mxu0 0
      %2365 = vmatpush1.bf16.msra.mxu0 %v1999
      %2366 = vmatprep.subr.bf16.mxu0 0
      %2367 = vmatpush1.bf16.msra.mxu0 %v2000
      %2368 = vmatprep.subr.bf16.mxu0 0
      %2369 = vmatpush1.bf16.msra.mxu0 %v2001
      %2370 = vmatprep.subr.bf16.mxu0 0
      %2371 = vmatpush1.bf16.msra.mxu0 %v2002
      %2372 = vmatprep.subr.bf16.mxu0 0
      %2373 = vmatpush1.bf16.msra.mxu0 0
      %2374 = vmatprep.subr.bf16.mxu0 0
      %2375 = vmatpush1.bf16.msra.mxu0 0
      %2376 = vmatprep.subr.bf16.mxu0 0
      %2377 = vmatpush1.bf16.msra.mxu0 0
      %2378 = vmatprep.subr.bf16.mxu0 0
      %2379 = vmatpush1.bf16.msra.mxu0 0
      %2380 = vmatprep.subr.bf16.mxu0 0
      %2381 = vmatpush1.bf16.msra.mxu0 0
      %2382 = vmatprep.subr.bf16.mxu0 0
      %2383 = vmatpush1.bf16.msra.mxu0 0
      %2384 = vmatprep.subr.bf16.mxu0 0
      %2385 = vmatpush1.bf16.msra.mxu0 0
      %2386 = vmatprep.subr.bf16.mxu0 0
      %2387 = vmatpush1.bf16.msra.mxu0 0
      %2388 = vmatprep.subr.bf16.mxu0 0
      %2389 = vmatpush1.bf16.msra.mxu0 0
      %2390 = vmatprep.subr.bf16.mxu0 0
      %2391 = vmatpush1.bf16.msra.mxu0 0
      %2392 = vmatprep.subr.bf16.mxu0 0
      %2393 = vmatpush1.bf16.msra.mxu0 0
      %2394 = vmatprep.subr.bf16.mxu0 0
      %2395 = vmatpush1.bf16.msra.mxu0 0
      %2396 = vmatprep.mubr.bf16.mxu0 0
      %2397 = vmatmul.mubr.bf16.gmra.mrb[0].mxu0 %v2257
      %v2398 = vpop.f32.mrb[0].mxu0
      %v2399 = vadd.f32 0.0, %v2398
      %v2400 = vpop.f32.mrb[0].mxu0
      %v2401 = vpop.f32.mrb[0].mxu0
      %v2402 = vadd.f32 0.0, %v2401
      %v2403 = vpop.f32.mrb[0].mxu0
      %2404 = vmatprep.mubr.bf16.mxu0 0
      %2405 = vmatmul.mubr.bf16.gmra.mrb[0].mxu0 %v2260
      %v2406 = vpop.f32.mrb[0].mxu0
      %v2407 = vadd.f32 0.0, %v2406
      %v2408 = vpop.f32.mrb[0].mxu0
      %v2409 = vpop.f32.mrb[0].mxu0
      %v2410 = vadd.f32 0.0, %v2409
      %v2411 = vpop.f32.mrb[0].mxu0
      %2412 = vmatprep.mubr.bf16.mxu0 0
      %2413 = vmatmul.mubr.bf16.gmra.mrb[0].mxu0 %v2263
      %v2414 = vpop.f32.mrb[0].mxu0
      %v2415 = vadd.f32 0.0, %v2414
      %v2416 = vpop.f32.mrb[0].mxu0
      %v2417 = vpop.f32.mrb[0].mxu0
      %v2418 = vadd.f32 0.0, %v2417
      %v2419 = vpop.f32.mrb[0].mxu0
      %2420 = vmatprep.mubr.bf16.mxu0 0
      %2421 = vmatmul.mubr.bf16.gmra.mrb[0].mxu0 %v2266
      %v2422 = vpop.f32.mrb[0].mxu0
      %v2423 = vadd.f32 0.0, %v2422
      %v2424 = vpop.f32.mrb[0].mxu0
      %v2425 = vpop.f32.mrb[0].mxu0
      %v2426 = vadd.f32 0.0, %v2425
      %v2427 = vpop.f32.mrb[0].mxu0
      %2428 = vmatprep.mubr.bf16.mxu0 0
      %2429 = vmatmul.mubr.bf16.gmra.mrb[0].mxu0 %v2269
      %v2430 = vpop.f32.mrb[0].mxu0
      %v2431 = vadd.f32 0.0, %v2430
      %v2432 = vpop.f32.mrb[0].mxu0
      %v2433 = vpop.f32.mrb[0].mxu0
      %v2434 = vadd.f32 0.0, %v2433
      %v2435 = vpop.f32.mrb[0].mxu0
      %2436 = vmatprep.mubr.bf16.mxu0 0
      %2437 = vmatmul.mubr.bf16.gmra.mrb[0].mxu0 %v2272
      %v2438 = vpop.f32.mrb[0].mxu0
      %v2439 = vadd.f32 0.0, %v2438
      %v2440 = vpop.f32.mrb[0].mxu0
      %v2441 = vpop.f32.mrb[0].mxu0
      %v2442 = vadd.f32 0.0, %v2441
      %v2443 = vpop.f32.mrb[0].mxu0
      %2444 = vmatprep.mubr.bf16.mxu0 0
      %2445 = vmatmul.mubr.bf16.gmra.mrb[0].mxu0 %v2275
      %v2446 = vpop.f32.mrb[0].mxu0
      %v2447 = vadd.f32 0.0, %v2446
      %v2448 = vpop.f32.mrb[0].mxu0
      %v2449 = vpop.f32.mrb[0].mxu0
      %v2450 = vadd.f32 0.0, %v2449
      %v2451 = vpop.f32.mrb[0].mxu0
      %2452 = vmatprep.mubr.bf16.mxu0 0
      %2453 = vmatmul.mubr.bf16.gmra.mrb[0].mxu0 %v2278
      %v2454 = vpop.f32.mrb[0].mxu0
      %v2455 = vadd.f32 0.0, %v2454
      %v2456 = vpop.f32.mrb[0].mxu0
      %v2457 = vpop.f32.mrb[0].mxu0
      %v2458 = vadd.f32 0.0, %v2457
      %v2459 = vpop.f32.mrb[0].mxu0
      %2460 = vmatprep.mubr.bf16.mxu0 0
      %2461 = vmatmul.mubr.bf16.gmra.mrb[0].mxu0 %v2281
      %v2462 = vpop.f32.mrb[0].mxu0
      %v2463 = vadd.f32 0.0, %v2462
      %v2464 = vpop.f32.mrb[0].mxu0
      %v2465 = vpop.f32.mrb[0].mxu0
      %v2466 = vadd.f32 0.0, %v2465
      %v2467 = vpop.f32.mrb[0].mxu0
      %2468 = vmatprep.mubr.bf16.mxu0 0
      %2469 = vmatmul.mubr.bf16.gmra.mrb[0].mxu0 %v2284
      %v2470 = vpop.f32.mrb[0].mxu0
      %v2471 = vadd.f32 0.0, %v2470
      %v2472 = vpop.f32.mrb[0].mxu0
      %v2473 = vpop.f32.mrb[0].mxu0
      %v2474 = vadd.f32 0.0, %v2473
      %v2475 = vpop.f32.mrb[0].mxu0
      %2476 = vmatprep.mubr.bf16.mxu0 0
      %2477 = vmatmul.mubr.bf16.gmra.mrb[0].mxu0 %v2287
      %v2478 = vpop.f32.mrb[0].mxu0
      %v2479 = vadd.f32 0.0, %v2478
      %v2480 = vpop.f32.mrb[0].mxu0
      %v2481 = vpop.f32.mrb[0].mxu0
      %v2482 = vadd.f32 0.0, %v2481
      %v2483 = vpop.f32.mrb[0].mxu0
      %2484 = vmatprep.mubr.bf16.mxu0 0
      %2485 = vmatmul.mubr.bf16.gmra.mrb[0].mxu0 %v2290
      %v2486 = vpop.f32.mrb[0].mxu0
      %v2487 = vadd.f32 0.0, %v2486
      %v2488 = vpop.f32.mrb[0].mxu0
      %v2489 = vpop.f32.mrb[0].mxu0
      %v2490 = vadd.f32 0.0, %v2489
      %v2491 = vpop.f32.mrb[0].mxu0
      %2492 = vmatprep.mubr.bf16.mxu0 0
      %2493 = vmatmul.mubr.bf16.gmra.mrb[0].mxu0 %v2293
      %v2494 = vpop.f32.mrb[0].mxu0
      %v2495 = vadd.f32 0.0, %v2494
      %v2496 = vpop.f32.mrb[0].mxu0
      %v2497 = vpop.f32.mrb[0].mxu0
      %v2498 = vadd.f32 0.0, %v2497
      %v2499 = vpop.f32.mrb[0].mxu0
      %2500 = vmatprep.mubr.bf16.mxu0 0
      %2501 = vmatmul.mubr.bf16.gmra.mrb[0].mxu0 %v2296
      %v2502 = vpop.f32.mrb[0].mxu0
      %v2503 = vadd.f32 0.0, %v2502
      %v2504 = vpop.f32.mrb[0].mxu0
      %v2505 = vpop.f32.mrb[0].mxu0
      %v2506 = vadd.f32 0.0, %v2505
      %v2507 = vpop.f32.mrb[0].mxu0
      %2508 = vmatprep.mubr.bf16.mxu0 0
      %2509 = vmatmul.mubr.bf16.gmra.mrb[0].mxu0 %v2299
      %v2510 = vpop.f32.mrb[0].mxu0
      %v2511 = vadd.f32 0.0, %v2510
      %v2512 = vpop.f32.mrb[0].mxu0
      %v2513 = vpop.f32.mrb[0].mxu0
      %v2514 = vadd.f32 0.0, %v2513
      %v2515 = vpop.f32.mrb[0].mxu0
      %2516 = vmatprep.mubr.bf16.mxu0 0
      %2517 = vmatmul.mubr.bf16.gmra.mrb[0].mxu0 %v2302
      %v2518 = vpop.f32.mrb[0].mxu0
      %v2519 = vadd.f32 0.0, %v2518
      %v2520 = vpop.f32.mrb[0].mxu0
      %v2521 = vpop.f32.mrb[0].mxu0
      %v2522 = vadd.f32 0.0, %v2521
      %v2523 = vpop.f32.mrb[0].mxu0
      %2524 = vmatprep.mubr.bf16.mxu0 0
      %2525 = vmatmul.mubr.bf16.gmra.mrb[0].mxu0 %v2305
      %v2526 = vpop.f32.mrb[0].mxu0
      %v2527 = vadd.f32 0.0, %v2526
      %v2528 = vpop.f32.mrb[0].mxu0
      %v2529 = vpop.f32.mrb[0].mxu0
      %v2530 = vadd.f32 0.0, %v2529
      %v2531 = vpop.f32.mrb[0].mxu0
      %2532 = vmatprep.mubr.bf16.mxu0 0
      %2533 = vmatmul.mubr.bf16.gmra.mrb[0].mxu0 %v2308
      %v2534 = vpop.f32.mrb[0].mxu0
      %v2535 = vadd.f32 0.0, %v2534
      %v2536 = vpop.f32.mrb[0].mxu0
      %v2537 = vpop.f32.mrb[0].mxu0
      %v2538 = vadd.f32 0.0, %v2537
      %v2539 = vpop.f32.mrb[0].mxu0
      %2540 = vmatprep.mubr.bf16.mxu0 0
      %2541 = vmatmul.mubr.bf16.gmra.mrb[0].mxu0 %v2311
      %v2542 = vpop.f32.mrb[0].mxu0
      %v2543 = vadd.f32 0.0, %v2542
      %v2544 = vpop.f32.mrb[0].mxu0
      %v2545 = vpop.f32.mrb[0].mxu0
      %v2546 = vadd.f32 0.0, %v2545
      %v2547 = vpop.f32.mrb[0].mxu0
      %2548 = vmatprep.mubr.bf16.mxu0 0
      %2549 = vmatmul.mubr.bf16.gmra.mrb[0].mxu0 %v2314
      %v2550 = vpop.f32.mrb[0].mxu0
      %v2551 = vadd.f32 0.0, %v2550
      %v2552 = vpop.f32.mrb[0].mxu0
      %v2553 = vpop.f32.mrb[0].mxu0
      %v2554 = vadd.f32 0.0, %v2553
      %v2555 = vpop.f32.mrb[0].mxu0
      %2556 = vmatprep.mubr.bf16.mxu0 0
      %2557 = vmatmul.mubr.bf16.gmra.mrb[0].mxu0 %v2317
      %v2558 = vpop.f32.mrb[0].mxu0
      %v2559 = vadd.f32 0.0, %v2558
      %v2560 = vpop.f32.mrb[0].mxu0
      %v2561 = vpop.f32.mrb[0].mxu0
      %v2562 = vadd.f32 0.0, %v2561
      %v2563 = vpop.f32.mrb[0].mxu0
      %2564 = vmatprep.mubr.bf16.mxu0 0
      %2565 = vmatmul.mubr.bf16.gmra.mrb[0].mxu0 %v2320
      %v2566 = vpop.f32.mrb[0].mxu0
      %v2567 = vadd.f32 0.0, %v2566
      %v2568 = vpop.f32.mrb[0].mxu0
      %v2569 = vpop.f32.mrb[0].mxu0
      %v2570 = vadd.f32 0.0, %v2569
      %v2571 = vpop.f32.mrb[0].mxu0
      %2572 = vmatprep.mubr.bf16.mxu0 0
      %2573 = vmatmul.mubr.bf16.gmra.mrb[0].mxu0 %v2323
      %v2574 = vpop.f32.mrb[0].mxu0
      %v2575 = vadd.f32 0.0, %v2574
      %v2576 = vpop.f32.mrb[0].mxu0
      %v2577 = vpop.f32.mrb[0].mxu0
      %v2578 = vadd.f32 0.0, %v2577
      %v2579 = vpop.f32.mrb[0].mxu0
      %2580 = vmatprep.mubr.bf16.mxu0 0
      %2581 = vmatmul.mubr.bf16.gmra.mrb[0].mxu0 %v2326
      %v2582 = vpop.f32.mrb[0].mxu0
      %v2583 = vadd.f32 0.0, %v2582
      %v2584 = vpop.f32.mrb[0].mxu0
      %v2585 = vpop.f32.mrb[0].mxu0
      %v2586 = vadd.f32 0.0, %v2585
      %v2587 = vpop.f32.mrb[0].mxu0
      %2588 = vmatprep.mubr.bf16.mxu0 0
      %2589 = vmatmul.mubr.bf16.gmra.mrb[0].mxu0 %v2329
      %v2590 = vpop.f32.mrb[0].mxu0
      %v2591 = vadd.f32 0.0, %v2590
      %v2592 = vpop.f32.mrb[0].mxu0
      %v2593 = vpop.f32.mrb[0].mxu0
      %v2594 = vadd.f32 0.0, %v2593
      %v2595 = vpop.f32.mrb[0].mxu0
      %2596 = vmatprep.mubr.bf16.mxu0 0
      %2597 = vmatmul.mubr.bf16.gmra.mrb[0].mxu0 %v2332
      %v2598 = vpop.f32.mrb[0].mxu0
      %v2599 = vadd.f32 0.0, %v2598
      %v2600 = vpop.f32.mrb[0].mxu0
      %v2601 = vpop.f32.mrb[0].mxu0
      %v2602 = vadd.f32 0.0, %v2601
      %v2603 = vpop.f32.mrb[0].mxu0
      %2604 = vmatprep.mubr.bf16.mxu0 0
      %2605 = vmatmul.mubr.bf16.gmra.mrb[0].mxu0 %v2335
      %v2606 = vpop.f32.mrb[0].mxu0
      %v2607 = vadd.f32 0.0, %v2606
      %v2608 = vpop.f32.mrb[0].mxu0
      %v2609 = vpop.f32.mrb[0].mxu0
      %v2610 = vadd.f32 0.0, %v2609
      %v2611 = vpop.f32.mrb[0].mxu0
      %2612 = vmatprep.mubr.bf16.mxu0 0
      %2613 = vmatmul.mubr.bf16.gmra.mrb[0].mxu0 %v2338
      %v2614 = vpop.f32.mrb[0].mxu0
      %v2615 = vadd.f32 0.0, %v2614
      %v2616 = vpop.f32.mrb[0].mxu0
      %v2617 = vpop.f32.mrb[0].mxu0
      %v2618 = vadd.f32 0.0, %v2617
      %v2619 = vpop.f32.mrb[0].mxu0
      %2620 = vmatprep.mubr.bf16.mxu0 0
      %2621 = vmatmul.mubr.bf16.gmra.mrb[0].mxu0 %v2341
      %v2622 = vpop.f32.mrb[0].mxu0
      %v2623 = vadd.f32 0.0, %v2622
      %v2624 = vpop.f32.mrb[0].mxu0
      %v2625 = vpop.f32.mrb[0].mxu0
      %v2626 = vadd.f32 0.0, %v2625
      %v2627 = vpop.f32.mrb[0].mxu0
      %2628 = vmatprep.mubr.bf16.mxu0 0
      %2629 = vmatmul.mubr.bf16.gmra.mrb[0].mxu0 %v2344
      %v2630 = vpop.f32.mrb[0].mxu0
      %v2631 = vadd.f32 0.0, %v2630
      %v2632 = vpop.f32.mrb[0].mxu0
      %v2633 = vpop.f32.mrb[0].mxu0
      %v2634 = vadd.f32 0.0, %v2633
      %v2635 = vpop.f32.mrb[0].mxu0
      %2636 = vmatprep.mubr.bf16.mxu0 0
      %2637 = vmatmul.mubr.bf16.gmra.mrb[0].mxu0 %v2347
      %v2638 = vpop.f32.mrb[0].mxu0
      %v2639 = vadd.f32 0.0, %v2638
      %v2640 = vpop.f32.mrb[0].mxu0
      %v2641 = vpop.f32.mrb[0].mxu0
      %v2642 = vadd.f32 0.0, %v2641
      %v2643 = vpop.f32.mrb[0].mxu0
      %2644 = vmatprep.mubr.bf16.mxu0 0
      %2645 = vmatmul.mubr.bf16.gmra.mrb[0].mxu0 %v2350
      %v2646 = vpop.f32.mrb[0].mxu0
      %v2647 = vadd.f32 0.0, %v2646
      %v2648 = vpop.f32.mrb[0].mxu0
      %v2649 = vpop.f32.mrb[0].mxu0
      %v2650 = vadd.f32 0.0, %v2649
      %v2651 = vpop.f32.mrb[0].mxu0
      %2652 = vmatprep.mubr.bf16.mxu0 0
      %2653 = vmatmul.mubr.bf16.gmra.mrb[0].mxu0 %v2353
      %v2654 = vpop.f32.mrb[0].mxu0
      %v2655 = vadd.f32 0.0, %v2654
      %v2656 = vpop.f32.mrb[0].mxu0
      %v2657 = vpop.f32.mrb[0].mxu0
      %v2658 = vadd.f32 0.0, %v2657
      %v2659 = vpop.f32.mrb[0].mxu0
      %2660 = vmatprep.mubr.bf16.mxu0 0
      %2661 = vmatmul.mubr.bf16.gmra.mrb[0].mxu0 %v2356
      %v2662 = vpop.f32.mrb[0].mxu0
      %v2663 = vadd.f32 0.0, %v2662
      %v2664 = vpop.f32.mrb[0].mxu0
      %v2665 = vpop.f32.mrb[0].mxu0
      %v2666 = vadd.f32 0.0, %v2665
      %v2667 = vpop.f32.mrb[0].mxu0
      %2668 = vmatprep.mubr.bf16.mxu0 0
      %2669 = vmatmul.mubr.bf16.gmra.mrb[0].mxu0 %v2359
      %v2670 = vpop.f32.mrb[0].mxu0
      %v2671 = vadd.f32 0.0, %v2670
      %v2672 = vpop.f32.mrb[0].mxu0
      %v2673 = vpop.f32.mrb[0].mxu0
      %v2674 = vadd.f32 0.0, %v2673
      %v2675 = vpop.f32.mrb[0].mxu0
      %2676 = vmatprep.mubr.bf16.mxu0 0
      %2677 = vmatmul.mubr.bf16.gmra.mrb[0].mxu0 %v2362
      %v2678 = vpop.f32.mrb[0].mxu0
      %v2679 = vadd.f32 0.0, %v2678
      %v2680 = vpop.f32.mrb[0].mxu0
      %v2681 = vpop.f32.mrb[0].mxu0
      %v2682 = vadd.f32 0.0, %v2681
      %v2683 = vpop.f32.mrb[0].mxu0
      %2684 = vdwg.mxu0
      %v2685 = vld [vmem:[%s9] sm:$0x1]
      %v2687 = vlaneseq
      %v2688 = vshrl.u32 %v2687, 7
      %v2689 = vsub.s32 0, %v2688
      %v2690 = vrot.slane %v2685, %v2689
      %v2692 = vmul.f32 %v2399, %v2690
      %v2693 = vmul.f32 %v2402, %v2690
      %v2694 = vmul.f32 %v2407, %v2690
      %v2695 = vmul.f32 %v2410, %v2690
      %v2696 = vmul.f32 %v2415, %v2690
      %v2697 = vmul.f32 %v2418, %v2690
      %v2698 = vmul.f32 %v2423, %v2690
      %v2699 = vmul.f32 %v2426, %v2690
      %s2700 = scalar_lea.vmem %s9, 1
      %v2701 = vld [vmem:[%s2700] sm:$0x1]
      %v2703 = vlaneseq
      %v2704 = vshrl.u32 %v2703, 7
      %v2705 = vsub.s32 0, %v2704
      %v2706 = vrot.slane %v2701, %v2705
      %v2708 = vmul.f32 %v2431, %v2706
      %v2709 = vmul.f32 %v2434, %v2706
      %v2710 = vmul.f32 %v2439, %v2706
      %v2711 = vmul.f32 %v2442, %v2706
      %v2712 = vmul.f32 %v2447, %v2706
      %v2713 = vmul.f32 %v2450, %v2706
      %v2714 = vmul.f32 %v2455, %v2706
      %v2715 = vmul.f32 %v2458, %v2706
      %v2716 = vadd.f32 %v2692, %v2708
      %v2717 = vadd.f32 %v2693, %v2709
      %v2718 = vadd.f32 %v2694, %v2710
      %v2719 = vadd.f32 %v2695, %v2711
      %v2720 = vadd.f32 %v2696, %v2712
      %v2721 = vadd.f32 %v2697, %v2713
      %v2722 = vadd.f32 %v2698, %v2714
      %v2723 = vadd.f32 %v2699, %v2715
      %s2724 = scalar_lea.vmem %s9, 2
      %v2725 = vld [vmem:[%s2724] sm:$0x1]
      %v2727 = vlaneseq
      %v2728 = vshrl.u32 %v2727, 7
      %v2729 = vsub.s32 0, %v2728
      %v2730 = vrot.slane %v2725, %v2729
      %v2732 = vmul.f32 %v2463, %v2730
      %v2733 = vmul.f32 %v2466, %v2730
      %v2734 = vmul.f32 %v2471, %v2730
      %v2735 = vmul.f32 %v2474, %v2730
      %v2736 = vmul.f32 %v2479, %v2730
      %v2737 = vmul.f32 %v2482, %v2730
      %v2738 = vmul.f32 %v2487, %v2730
      %v2739 = vmul.f32 %v2490, %v2730
      %v2740 = vadd.f32 %v2716, %v2732
      %v2741 = vadd.f32 %v2717, %v2733
      %v2742 = vadd.f32 %v2718, %v2734
      %v2743 = vadd.f32 %v2719, %v2735
      %v2744 = vadd.f32 %v2720, %v2736
      %v2745 = vadd.f32 %v2721, %v2737
      %v2746 = vadd.f32 %v2722, %v2738
      %v2747 = vadd.f32 %v2723, %v2739
      %s2748 = scalar_lea.vmem %s9, 3
      %v2749 = vld [vmem:[%s2748] sm:$0x1]
      %v2751 = vlaneseq
      %v2752 = vshrl.u32 %v2751, 7
      %v2753 = vsub.s32 0, %v2752
      %v2754 = vrot.slane %v2749, %v2753
      %v2756 = vmul.f32 %v2495, %v2754
      %v2757 = vmul.f32 %v2498, %v2754
      %v2758 = vmul.f32 %v2503, %v2754
      %v2759 = vmul.f32 %v2506, %v2754
      %v2760 = vmul.f32 %v2511, %v2754
      %v2761 = vmul.f32 %v2514, %v2754
      %v2762 = vmul.f32 %v2519, %v2754
      %v2763 = vmul.f32 %v2522, %v2754
      %v2764 = vadd.f32 %v2740, %v2756
      %v2765 = vadd.f32 %v2741, %v2757
      %v2766 = vadd.f32 %v2742, %v2758
      %v2767 = vadd.f32 %v2743, %v2759
      %v2768 = vadd.f32 %v2744, %v2760
      %v2769 = vadd.f32 %v2745, %v2761
      %v2770 = vadd.f32 %v2746, %v2762
      %v2771 = vadd.f32 %v2747, %v2763
      %s2772 = scalar_lea.vmem %s9, 4
      %v2773 = vld [vmem:[%s2772] sm:$0x1]
      %v2775 = vlaneseq
      %v2776 = vshrl.u32 %v2775, 7
      %v2777 = vsub.s32 0, %v2776
      %v2778 = vrot.slane %v2773, %v2777
      %v2780 = vmul.f32 %v2527, %v2778
      %v2781 = vmul.f32 %v2530, %v2778
      %v2782 = vmul.f32 %v2535, %v2778
      %v2783 = vmul.f32 %v2538, %v2778
      %v2784 = vmul.f32 %v2543, %v2778
      %v2785 = vmul.f32 %v2546, %v2778
      %v2786 = vmul.f32 %v2551, %v2778
      %v2787 = vmul.f32 %v2554, %v2778
      %v2788 = vadd.f32 %v2764, %v2780
      %v2789 = vadd.f32 %v2765, %v2781
      %v2790 = vadd.f32 %v2766, %v2782
      %v2791 = vadd.f32 %v2767, %v2783
      %v2792 = vadd.f32 %v2768, %v2784
      %v2793 = vadd.f32 %v2769, %v2785
      %v2794 = vadd.f32 %v2770, %v2786
      %v2795 = vadd.f32 %v2771, %v2787
      %s2796 = scalar_lea.vmem %s9, 5
      %v2797 = vld [vmem:[%s2796] sm:$0x1]
      %v2799 = vlaneseq
      %v2800 = vshrl.u32 %v2799, 7
      %v2801 = vsub.s32 0, %v2800
      %v2802 = vrot.slane %v2797, %v2801
      %v2804 = vmul.f32 %v2559, %v2802
      %v2805 = vmul.f32 %v2562, %v2802
      %v2806 = vmul.f32 %v2567, %v2802
      %v2807 = vmul.f32 %v2570, %v2802
      %v2808 = vmul.f32 %v2575, %v2802
      %v2809 = vmul.f32 %v2578, %v2802
      %v2810 = vmul.f32 %v2583, %v2802
      %v2811 = vmul.f32 %v2586, %v2802
      %v2812 = vadd.f32 %v2788, %v2804
      %v2813 = vadd.f32 %v2789, %v2805
      %v2814 = vadd.f32 %v2790, %v2806
      %v2815 = vadd.f32 %v2791, %v2807
      %v2816 = vadd.f32 %v2792, %v2808
      %v2817 = vadd.f32 %v2793, %v2809
      %v2818 = vadd.f32 %v2794, %v2810
      %v2819 = vadd.f32 %v2795, %v2811
      %s2820 = scalar_lea.vmem %s9, 6
      %v2821 = vld [vmem:[%s2820] sm:$0x1]
      %v2823 = vlaneseq
      %v2824 = vshrl.u32 %v2823, 7
      %v2825 = vsub.s32 0, %v2824
      %v2826 = vrot.slane %v2821, %v2825
      %v2828 = vmul.f32 %v2591, %v2826
      %v2829 = vmul.f32 %v2594, %v2826
      %v2830 = vmul.f32 %v2599, %v2826
      %v2831 = vmul.f32 %v2602, %v2826
      %v2832 = vmul.f32 %v2607, %v2826
      %v2833 = vmul.f32 %v2610, %v2826
      %v2834 = vmul.f32 %v2615, %v2826
      %v2835 = vmul.f32 %v2618, %v2826
      %v2836 = vadd.f32 %v2812, %v2828
      %v2837 = vadd.f32 %v2813, %v2829
      %v2838 = vadd.f32 %v2814, %v2830
      %v2839 = vadd.f32 %v2815, %v2831
      %v2840 = vadd.f32 %v2816, %v2832
      %v2841 = vadd.f32 %v2817, %v2833
      %v2842 = vadd.f32 %v2818, %v2834
      %v2843 = vadd.f32 %v2819, %v2835
      %s2844 = scalar_lea.vmem %s9, 7
      %v2845 = vld [vmem:[%s2844] sm:$0x1]
      %v2847 = vlaneseq
      %v2848 = vshrl.u32 %v2847, 7
      %v2849 = vsub.s32 0, %v2848
      %v2850 = vrot.slane %v2845, %v2849
      %v2852 = vmul.f32 %v2623, %v2850
      %v2853 = vmul.f32 %v2626, %v2850
      %v2854 = vmul.f32 %v2631, %v2850
      %v2855 = vmul.f32 %v2634, %v2850
      %v2856 = vmul.f32 %v2639, %v2850
      %v2857 = vmul.f32 %v2642, %v2850
      %v2858 = vmul.f32 %v2647, %v2850
      %v2859 = vmul.f32 %v2650, %v2850
      %v2860 = vadd.f32 %v2836, %v2852
      %v2861 = vadd.f32 %v2837, %v2853
      %v2862 = vadd.f32 %v2838, %v2854
      %v2863 = vadd.f32 %v2839, %v2855
      %v2864 = vadd.f32 %v2840, %v2856
      %v2865 = vadd.f32 %v2841, %v2857
      %v2866 = vadd.f32 %v2842, %v2858
      %v2867 = vadd.f32 %v2843, %v2859
      %s2868 = scalar_lea.vmem %s9, 8
      %v2869 = vld [vmem:[%s2868] sm:$0x1]
      %v2871 = vlaneseq
      %v2872 = vshrl.u32 %v2871, 7
      %v2873 = vsub.s32 0, %v2872
      %v2874 = vrot.slane %v2869, %v2873
      %v2876 = vmul.f32 %v2655, %v2874
      %v2877 = vmul.f32 %v2658, %v2874
      %v2878 = vmul.f32 %v2663, %v2874
      %v2879 = vmul.f32 %v2666, %v2874
      %v2880 = vmul.f32 %v2671, %v2874
      %v2881 = vmul.f32 %v2674, %v2874
      %v2882 = vmul.f32 %v2679, %v2874
      %v2883 = vmul.f32 %v2682, %v2874
      %v2884 = vadd.f32 %v2860, %v2876
      %v2885 = vadd.f32 %v2861, %v2877
      %v2886 = vadd.f32 %v2862, %v2878
      %v2887 = vadd.f32 %v2863, %v2879
      %v2888 = vadd.f32 %v2864, %v2880
      %v2889 = vadd.f32 %v2865, %v2881
      %v2890 = vadd.f32 %v2866, %v2882
      %v2891 = vadd.f32 %v2867, %v2883
      %v2892 = vld [vmem:[%s10] sm:$0x1]
      %v2894 = vlaneseq
      %v2895 = vshrl.u32 %v2894, 7
      %v2896 = vsub.s32 0, %v2895
      %v2897 = vrot.slane %v2892, %v2896
      %v2899 = vadd.f32 %v2884, %v2897
      %v2900 = vadd.f32 %v2885, %v2897
      %v2901 = vadd.f32 %v2886, %v2897
      %v2902 = vadd.f32 %v2887, %v2897
      %v2903 = vadd.f32 %v2888, %v2897
      %v2904 = vadd.f32 %v2889, %v2897
      %v2905 = vadd.f32 %v2890, %v2897
      %v2906 = vadd.f32 %v2891, %v2897
      %v2907 = vmax.f32 %v2899, 0.0
      %v2908 = vmax.f32 %v2900, 0.0
      %v2909 = vmax.f32 %v2901, 0.0
      %v2910 = vmax.f32 %v2902, 0.0
      %v2911 = vmax.f32 %v2903, 0.0
      %v2912 = vmax.f32 %v2904, 0.0
      %v2913 = vmax.f32 %v2905, 0.0
      %v2914 = vmax.f32 %v2906, 0.0
      %v2915 = vpack.c.bf16 %v2908, %v2907
      %v2916 = vpack.c.bf16 %v2910, %v2909
      %v2917 = vpack.c.bf16 %v2912, %v2911
      %v2918 = vpack.c.bf16 %v2914, %v2913
      %v2919 = vld [vmem:[%s11] sm:$0xf]
      %v2920 = vld [vmem:[%s11 + $0x4] sm:$0xf]
      %v2921 = vld [vmem:[%s11 + $0x8] sm:$0xf]
      %v2922 = vld [vmem:[%s11 + $0xc] sm:$0xf]
      %v2923 = vld [vmem:[%s12] sm:$0x1]
      %v2925 = vlaneseq
      %v2926 = vshrl.u32 %v2925, 7
      %v2927 = vsub.s32 0, %v2926
      %v2928 = vrot.slane %v2923, %v2927
      %v2934 = vunpack.c.l.b16 %v2919
      %v2935 = vunpack.c.l.b16 %v2920
      %v2936 = vunpack.c.l.b16 %v2921
      %v2937 = vunpack.c.l.b16 %v2922
      %v2938 = vpack.c.b16 %v2935, %v2934
      %v2939 = vpack.c.b16 %v2937, %v2936
      %v2943 = vsel %vm1913, %v2915, 0
      %v2946 = vsel %vm1913, %v2916, 0
      %v2949 = vsel %vm1913, %v2917, 0
      %v2952 = vsel %vm1913, %v2918, 0
      %2954 = vmatprep.subr.bf16.mxu0 0
      %2955 = vmatpush1.bf16.msra.mxu0 %v2938
      %2956 = vmatprep.subr.bf16.mxu0 0
      %2957 = vmatpush1.bf16.msra.mxu0 %v2939
      %2958 = vmatprep.subr.bf16.mxu0 0
      %2959 = vmatpush1.bf16.msra.mxu0 0
      %2960 = vmatprep.subr.bf16.mxu0 0
      %2961 = vmatpush1.bf16.msra.mxu0 0
      %2962 = vmatprep.subr.bf16.mxu0 0
      %2963 = vmatpush1.bf16.msra.mxu0 0
      %2964 = vmatprep.subr.bf16.mxu0 0
      %2965 = vmatpush1.bf16.msra.mxu0 0
      %2966 = vmatprep.subr.bf16.mxu0 0
      %2967 = vmatpush1.bf16.msra.mxu0 0
      %2968 = vmatprep.subr.bf16.mxu0 0
      %2969 = vmatpush1.bf16.msra.mxu0 0
      %2970 = vmatprep.subr.bf16.mxu0 0
      %2971 = vmatpush1.bf16.msra.mxu0 0
      %2972 = vmatprep.subr.bf16.mxu0 0
      %2973 = vmatpush1.bf16.msra.mxu0 0
      %2974 = vmatprep.subr.bf16.mxu0 0
      %2975 = vmatpush1.bf16.msra.mxu0 0
      %2976 = vmatprep.subr.bf16.mxu0 0
      %2977 = vmatpush1.bf16.msra.mxu0 0
      %2978 = vmatprep.subr.bf16.mxu0 0
      %2979 = vmatpush1.bf16.msra.mxu0 0
      %2980 = vmatprep.subr.bf16.mxu0 0
      %2981 = vmatpush1.bf16.msra.mxu0 0
      %2982 = vmatprep.subr.bf16.mxu0 0
      %2983 = vmatpush1.bf16.msra.mxu0 0
      %2984 = vmatprep.subr.bf16.mxu0 0
      %2985 = vmatpush1.bf16.msra.mxu0 0
      %2986 = vmatprep.mubr.bf16.mxu0 0
      %2987 = vmatmul.mubr.bf16.gmra.mrb[0].mxu0 %v2943
      %v2988 = vpop.f32.mrb[0].mxu0
      %v2989 = vadd.f32 %v2928, %v2988
      %v2990 = vpop.f32.mrb[0].mxu0
      %v2991 = vpop.f32.mrb[0].mxu0
      %v2992 = vadd.f32 %v2928, %v2991
      %v2993 = vpop.f32.mrb[0].mxu0
      %2994 = vmatprep.mubr.bf16.mxu0 0
      %2995 = vmatmul.mubr.bf16.gmra.mrb[0].mxu0 %v2946
      %v2996 = vpop.f32.mrb[0].mxu0
      %v2997 = vadd.f32 %v2928, %v2996
      %v2998 = vpop.f32.mrb[0].mxu0
      %v2999 = vpop.f32.mrb[0].mxu0
      %v3000 = vadd.f32 %v2928, %v2999
      %v3001 = vpop.f32.mrb[0].mxu0
      %3002 = vmatprep.mubr.bf16.mxu0 0
      %3003 = vmatmul.mubr.bf16.gmra.mrb[0].mxu0 %v2949
      %v3004 = vpop.f32.mrb[0].mxu0
      %v3005 = vadd.f32 %v2928, %v3004
      %v3006 = vpop.f32.mrb[0].mxu0
      %v3007 = vpop.f32.mrb[0].mxu0
      %v3008 = vadd.f32 %v2928, %v3007
      %v3009 = vpop.f32.mrb[0].mxu0
      %3010 = vmatprep.mubr.bf16.mxu0 0
      %3011 = vmatmul.mubr.bf16.gmra.mrb[0].mxu0 %v2952
      %v3012 = vpop.f32.mrb[0].mxu0
      %v3013 = vadd.f32 %v2928, %v3012
      %v3014 = vpop.f32.mrb[0].mxu0
      %v3015 = vpop.f32.mrb[0].mxu0
      %v3016 = vadd.f32 %v2928, %v3015
      %v3017 = vpop.f32.mrb[0].mxu0
      %3018 = vdwg.mxu0
      %v3019 = vmax.f32 %v2989, 0.0
      %v3020 = vmax.f32 %v2992, 0.0
      %v3021 = vmax.f32 %v2997, 0.0
      %v3022 = vmax.f32 %v3000, 0.0
      %v3023 = vmax.f32 %v3005, 0.0
      %v3024 = vmax.f32 %v3008, 0.0
      %v3025 = vmax.f32 %v3013, 0.0
      %v3026 = vmax.f32 %v3016, 0.0
      %3027 = vxpose.xlu0.b32.start [1/16] %v3019, 128
      %3028 = vxpose.xlu0.b32.cont [2/16] %v3020, 128
      %3029 = vxpose.xlu0.b32.cont [3/16] %v3021, 128
      %3030 = vxpose.xlu0.b32.cont [4/16] %v3022, 128
      %3031 = vxpose.xlu0.b32.cont [5/16] %v3023, 128
      %3032 = vxpose.xlu0.b32.cont [6/16] %v3024, 128
      %3033 = vxpose.xlu0.b32.cont [7/16] %v3025, 128
      %3034 = vxpose.xlu0.b32.cont [8/16] %v3026, 128
      %3035 = vxpose.xlu0.b32.cont [9/16] 0.0, 128
      %3036 = vxpose.xlu0.b32.cont [10/16] 0.0, 128
      %3037 = vxpose.xlu0.b32.cont [11/16] 0.0, 128
      %3038 = vxpose.xlu0.b32.cont [12/16] 0.0, 128
      %3039 = vxpose.xlu0.b32.cont [13/16] 0.0, 128
      %3040 = vxpose.xlu0.b32.cont [14/16] 0.0, 128
      %3041 = vxpose.xlu0.b32.cont [15/16] 0.0, 128
      %3042 = vxpose.xlu0.b32.end [16/16] 0.0, 128
      %v3043 = vpop.trf.xlu0
      %v3044 = vpop.trf.xlu0
      %v3045 = vpop.trf.xlu0
      %v3046 = vpop.trf.xlu0
      %v3047 = vpop.trf.xlu0
      %v3048 = vpop.trf.xlu0
      %v3049 = vpop.trf.xlu0
      %v3050 = vpop.trf.xlu0
      %v3051 = vpop.trf.xlu0
      %v3052 = vpop.trf.xlu0
      %v3053 = vpop.trf.xlu0
      %v3054 = vpop.trf.xlu0
      %v3055 = vpop.trf.xlu0
      %v3056 = vpop.trf.xlu0
      %v3057 = vpop.trf.xlu0
      %v3058 = vpop.trf.xlu0
      %3059 = vst.msk [vmem:[%s440] sm:$0xff] %vm2255, %v3043
      %3060 = vst.msk [vmem:[%s440 + $0x8] sm:$0xff] %vm2255, %v3044
      %3061 = vst.msk [vmem:[%s440 + $0x10] sm:$0xff] %vm2255, %v3045
      %3062 = vst.msk [vmem:[%s440 + $0x18] sm:$0xff] %vm2255, %v3046
      %p3063 = scmp.lt.s32.totalorder %s24, 1
      %s3064 = scalar_select %p3063, %s24, 1
      %s3065 = smul.addr %s3064, 4
      %s3066 = smul.addr %s3065, 8
      %s3067 = scalar_lea.vmem %s13, %s3066
      // Predicated region
      $region73: #{es_block_s2.1} parent=71 // pred_check
        %p3068 = pneg %p320
      $region74: #{es_block_s2.1} parent=71 // pred_check_branch
        %3070 = sbr.rel (%p3068) target = $region76
      $region75: #{es_block_s2.1} parent=71 // pred_region
        _
      $region76: #{es_block_s2.1} parent=71 // pred_fallthru
        _
    $region72: #{es_block_s2.1} parent=5 // pred_fallthru
      _
    %p3071 = scmp.le.s32.totalorder 2, %s19
    // Predicated region
    $region77: #{es_block_s2.1} parent=5 // pred_check
      %p3072 = pneg %p3071
    $region78: #{es_block_s2.1} parent=5 // pred_check_branch
      %3074 = sbr.rel (%p3072) target = $region80
    $region79: #{es_block_s2.1} parent=5 // pred_region
      %s3075 = ssub.s32 %s19, 2
      // Predicated region
      $region81: #{es_block_s2.1} parent=79 // pred_check
        %p3076 = pneg %p326
      $region82: #{es_block_s2.1} parent=79 // pred_check_branch
        %3078 = sbr.rel (%p3076) target = $region84
      $region83: #{es_block_s2.1} parent=79 // pred_region
        %p3079 = scmp.lt.s32.totalorder %s25, 1
        %s3080 = scalar_select %p3079, %s25, 1
        %s3081 = smul.addr %s3080, 4
        %s3082 = smul.addr %s3081, 8
        %s3083 = scalar_lea.vmem %s13, %s3082
      $region84: #{es_block_s2.1} parent=79 // pred_fallthru
        _
    $region80: #{es_block_s2.1} parent=5 // pred_fallthru
      _
  $region6: #{es_block_s2.1} parent=0 // loop_footer
    %s23 = sadd.s32 1, %s19
  $region7: #{es_block_s2.1} parent=0 // loop_footer_branch
    %18 = sbr.rel target = $region3
  $region8: #{es_block_s2.1} parent=0 // loop_exit
    _

</llo_original>
